<compile_context>
chip_gen: v7x
topology: tpu7x:2x2x1
jax: 0.10.0
libtpu: 0.0.40
codegen_flags: <defaults>
</compile_context>

<pallas_src>
import functools

import jax
import jax.numpy as jnp
from jax.experimental import pallas as pl
from jax.experimental.pallas import tpu as pltpu

D_IN = 1024
D_HID = 1024
LN_EPS = 1e-5


def _round_up(v, m):
    return (v + m - 1) // m * m


def _mil_kernel(x_ref, w1_ref, b1_ref, w2_ref, b2_ref, o_ref):
    # x_ref: (tm, 1024) bf16 instance tile.  W1/W2' bf16 resident weights
    # (constant index_map).  b1/b2' f32; LN affine already folded into W2'/b2'.

    # embedding Linear(1024 -> 1024): bf16 x bf16 -> f32 accumulate on the MXU.
    h = jnp.dot(x_ref[...], w1_ref[...], preferred_element_type=jnp.float32)
    h = h + b1_ref[...]

    # Dropout(0.2) is identity at inference time.
    # TODO(synk): training-mode dropout (stochastic masking) not implemented.

    # LayerNorm statistics in a single pass over h (no `centered` temporary):
    #   mean = E[h], var = E[h^2] - mean^2, clamped >= 0 before rsqrt.
    inv_d = jnp.float32(1.0 / D_HID)
    mean = jnp.sum(h, axis=-1, keepdims=True) * inv_d
    ex2 = jnp.sum(h * h, axis=-1, keepdims=True) * inv_d
    var = jnp.maximum(ex2 - mean * mean, 0.0)
    hn = (h - mean) * jax.lax.rsqrt(var + LN_EPS)   # affine folded into W2'/b2'

    # classifier Linear(1024 -> padded classes), lane-dense (128-wide) output.
    y = jnp.dot(hn.astype(w2_ref.dtype), w2_ref[...],
                preferred_element_type=jnp.float32)
    o_ref[...] = (y + b2_ref[...]).astype(o_ref.dtype)


def prepare_params(w1, b1, gamma, beta, w2, b2, compute_dtype=jnp.bfloat16):
    """One-time weight prep (bf16 cast, class padding, LN-affine fold).

    Call once per model; reuse the returned tensors across forward calls so the
    per-call path never re-reads / re-writes the ~4.5 MiB of weights.
    """
    num_classes = w2.shape[1]
    c_pad = _round_up(num_classes, 128)           # lane-dense output slab

    w1c = w1.astype(compute_dtype)
    b1r = b1.reshape(1, D_HID).astype(jnp.float32)

    # Fold LayerNorm affine into the classifier:
    #   (hn*gamma + beta) @ W2 + b2 == hn @ (gamma[:,None]*W2) + (beta@W2 + b2)
    w2f = gamma.astype(jnp.float32)[:, None] * w2.astype(jnp.float32)
    b2f = beta.astype(jnp.float32) @ w2.astype(jnp.float32) + b2.astype(jnp.float32)
    w2c = jnp.pad(w2f, ((0, 0), (0, c_pad - num_classes))).astype(compute_dtype)
    b2r = jnp.pad(b2f, (0, c_pad - num_classes)).reshape(1, c_pad)

    return w1c, b1r, w2c, b2r, num_classes


@functools.partial(jax.jit,
                   static_argnames=("num_classes", "block_rows", "compute_dtype"))
def stable_maxpooling_mil_forward(x, w1c, b1r, w2c, b2r, *, num_classes,
                                  block_rows=512, compute_dtype=jnp.bfloat16):
    n, d = x.shape
    assert d == D_IN
    c_pad = w2c.shape[1]

    # Balanced, 8-aligned row tiles: avoids pathological padding (e.g. n=513
    # with block_rows=512 previously padded to 1024 rows; now pads to 520).
    n8 = _round_up(max(n, 1), 8)
    base_tm = _round_up(min(block_rows, n8), 8)
    num_tiles = pl.cdiv(n8, base_tm)
    tm = _round_up(pl.cdiv(n8, num_tiles), 8)
    n_pad = tm * num_tiles

    x_p = x.astype(compute_dtype)
    if n_pad != n:
        x_p = jnp.pad(x_p, ((0, n_pad - n), (0, 0)))

    grid = (n_pad // tm,)
    # Megacore sharding only pays off with >= 2 grid steps; for a single-tile
    # bag the duplicated resident-weight DMA into both cores is pure overhead.
    dim_sem = ("parallel",) if grid[0] >= 2 else ("arbitrary",)

    out = pl.pallas_call(
        _mil_kernel,
        out_shape=jax.ShapeDtypeStruct((n_pad, c_pad), jnp.float32),
        grid=grid,
        in_specs=[
            pl.BlockSpec((tm, D_IN), lambda i: (i, 0)),        # x tile (bf16)
            pl.BlockSpec((D_IN, D_HID), lambda i: (0, 0)),     # W1 (resident)
            pl.BlockSpec((1, D_HID), lambda i: (0, 0)),        # b1
            pl.BlockSpec((D_HID, c_pad), lambda i: (0, 0)),    # W2' (folded, resident)
            pl.BlockSpec((1, c_pad), lambda i: (0, 0)),        # b2' (folded)
        ],
        out_specs=pl.BlockSpec((tm, c_pad), lambda i: (i, 0)),
        compiler_params=pltpu.CompilerParams(
            dimension_semantics=dim_sem,
            vmem_limit_bytes=48 * 1024 * 1024,   # ~12 MiB actual; < 64 MiB (v7x)
        ),
    )(x_p, w1c, b1r, w2c, b2r)

    return out[:n, :num_classes].astype(x.dtype)


def _reference_forward_f32(x, w1, b1, gamma, beta, w2, b2):
    # Straight PyTorch-style f32 math (centered variance, explicit affine).
    h = x @ w1 + b1
    mean = jnp.mean(h, axis=-1, keepdims=True)
    var = jnp.mean((h - mean) ** 2, axis=-1, keepdims=True)
    hn = (h - mean) * jax.lax.rsqrt(var + LN_EPS)
    hn = hn * gamma + beta
    return hn @ w2 + b2


def _reference_forward_bf16_folded(x, w1, b1, gamma, beta, w2, b2):
    # Precision-matched reference: bf16 MXU inputs, f32 accumulation, one-pass
    # LN statistics, LayerNorm affine folded into the classifier.
    h = jnp.dot(x.astype(jnp.bfloat16), w1.astype(jnp.bfloat16),
                preferred_element_type=jnp.float32) + b1
    mean = jnp.mean(h, axis=-1, keepdims=True)
    var = jnp.maximum(jnp.mean(h * h, axis=-1, keepdims=True) - mean * mean, 0.0)
    hn = (h - mean) * jax.lax.rsqrt(var + LN_EPS)
    w2f = (gamma[:, None] * w2).astype(jnp.bfloat16)
    b2f = beta @ w2 + b2
    return jnp.dot(hn.astype(jnp.bfloat16), w2f,
                   preferred_element_type=jnp.float32) + b2f


if __name__ == "__main__":
    num_classes = 4

    key = jax.random.PRNGKey(0)
    kx, kw1, kb1, kg, kbt, kw2, kb2, kx2, kx3 = jax.random.split(key, 9)

    # PyTorch-Linear-like init scale: U(-1/sqrt(fan_in), 1/sqrt(fan_in))
    lim1 = 1.0 / jnp.sqrt(jnp.float32(D_IN))
    w1 = jax.random.uniform(kw1, (D_IN, D_HID), jnp.float32, -lim1, lim1)
    b1 = jax.random.uniform(kb1, (D_HID,), jnp.float32, -lim1, lim1)
    # Non-trivial LayerNorm affine so the W2/b2 fold is actually exercised.
    gamma = 1.0 + 0.1 * jax.random.normal(kg, (D_HID,), jnp.float32)
    beta = 0.1 * jax.random.normal(kbt, (D_HID,), jnp.float32)
    lim2 = 1.0 / jnp.sqrt(jnp.float32(D_HID))
    w2 = jax.random.uniform(kw2, (D_HID, num_classes), jnp.float32, -lim2, lim2)
    b2 = jax.random.uniform(kb2, (num_classes,), jnp.float32, -lim2, lim2)

    # One-time weight prep (cast / pad / LN-affine fold), reused across calls.
    w1c, b1r, w2c, b2r, nc = prepare_params(w1, b1, gamma, beta, w2, b2)

    # Case 1: small bag (16 instances) -> single tile, grid=(1,).
    x = jax.random.normal(kx, (16, D_IN), jnp.float32)
    y = jax.block_until_ready(
        stable_maxpooling_mil_forward(x, w1c, b1r, w2c, b2r, num_classes=nc))
    assert y.shape == (16, num_classes)
    y_bf = _reference_forward_bf16_folded(x, w1, b1, gamma, beta, w2, b2)
    y_f32 = _reference_forward_f32(x, w1, b1, gamma, beta, w2, b2)
    assert jnp.allclose(y, y_bf, atol=5e-3, rtol=5e-3)     # matched precision
    assert jnp.allclose(y, y_f32, atol=5e-2, rtol=5e-2)    # bf16 vs f32 sanity

    # Case 2: ragged bag (100 instances), block_rows=64 -> balanced 2-step grid.
    x2 = jax.random.normal(kx2, (100, D_IN), jnp.float32)
    y2 = jax.block_until_ready(
        stable_maxpooling_mil_forward(x2, w1c, b1r, w2c, b2r,
                                      num_classes=nc, block_rows=64))
    assert y2.shape == (100, num_classes)
    y2_bf = _reference_forward_bf16_folded(x2, w1, b1, gamma, beta, w2, b2)
    assert jnp.allclose(y2, y2_bf, atol=5e-3, rtol=5e-3)

    # Case 3: n just above a tile multiple -> balanced tiles (tm=72, pad=14),
    # instead of the old near-2x padding.
    x3 = jax.random.normal(kx3, (130, D_IN), jnp.float32)
    y3 = jax.block_until_ready(
        stable_maxpooling_mil_forward(x3, w1c, b1r, w2c, b2r,
                                      num_classes=nc, block_rows=128))
    assert y3.shape == (130, num_classes)
    y3_bf = _reference_forward_bf16_folded(x3, w1, b1, gamma, beta, w2, b2)
    assert jnp.allclose(y3, y3_bf, atol=5e-3, rtol=5e-3)

    print("KERNEL_OK")
</pallas_src>

<mosaic_0001>
module attributes {stable_mosaic.version = 11 : i64} {
  func.func @_mil_kernel(%arg0: i32, %arg1: memref<16x1024xbf16, #tpu.memory_space<vmem>>, %arg2: memref<1024x1024xbf16, #tpu.memory_space<vmem>>, %arg3: memref<1x1024xf32, #tpu.memory_space<vmem>>, %arg4: memref<1024x128xbf16, #tpu.memory_space<vmem>>, %arg5: memref<1x128xf32, #tpu.memory_space<vmem>>, %arg6: memref<16x128xf32, #tpu.memory_space<vmem>>) attributes {dimension_semantics = [#tpu.dimension_semantics<arbitrary>], iteration_bounds = array<i64: 1>, scalar_prefetch = 0 : i64, scratch_operands = 0 : i64, tpu.core_type = #tpu.core_type<tc>, window_params = [{transform_indices = @transform_0, window_bounds = array<i64: 16, 1024>}, {pipeline_mode = #tpu.pipeline_mode<synchronous>, transform_indices = @transform_1, window_bounds = array<i64: 1024, 1024>}, {pipeline_mode = #tpu.pipeline_mode<synchronous>, transform_indices = @transform_2, window_bounds = array<i64: 1, 1024>}, {pipeline_mode = #tpu.pipeline_mode<synchronous>, transform_indices = @transform_3, window_bounds = array<i64: 1024, 128>}, {pipeline_mode = #tpu.pipeline_mode<synchronous>, transform_indices = @transform_4, window_bounds = array<i64: 1, 128>}, {transform_indices = @transform_5, window_bounds = array<i64: 16, 128>}]} {
    %c0 = arith.constant 0 : index
    %c0_0 = arith.constant 0 : index
    %0 = vector.load %arg1[%c0, %c0_0] : memref<16x1024xbf16, #tpu.memory_space<vmem>>, vector<16x1024xbf16>
    %c0_1 = arith.constant 0 : index
    %c0_2 = arith.constant 0 : index
    %1 = vector.load %arg2[%c0_1, %c0_2] : memref<1024x1024xbf16, #tpu.memory_space<vmem>>, vector<1024x1024xbf16>
    %cst = arith.constant dense<0.000000e+00> : vector<16x1024xf32>
    %2 = tpu.matmul %0, %1, %cst {dimension_numbers = #tpu.dot_dimension_numbers<[1], [0], [0], [1], [0, 0, 1, 1], [], []>} : vector<16x1024xbf16>, vector<1024x1024xbf16>, vector<16x1024xf32> -> vector<16x1024xf32>
    %c0_3 = arith.constant 0 : index
    %c0_4 = arith.constant 0 : index
    %3 = vector.load %arg3[%c0_3, %c0_4] : memref<1x1024xf32, #tpu.memory_space<vmem>>, vector<1x1024xf32>
    %4 = vector.broadcast %3 : vector<1x1024xf32> to vector<16x1024xf32>
    %5 = arith.addf %2, %4 : vector<16x1024xf32>
    %cst_5 = arith.constant dense<0.000000e+00> : vector<16xf32>
    %6 = vector.multi_reduction <add>, %5, %cst_5 [1] : vector<16x1024xf32> to vector<16xf32>
    %7 = vector.shape_cast %6 : vector<16xf32> to vector<16x1xf32>
    %cst_6 = arith.constant 9.765625E-4 : f32
    %8 = vector.broadcast %cst_6 : f32 to vector<16x1xf32>
    %9 = arith.mulf %7, %8 : vector<16x1xf32>
    %10 = arith.mulf %5, %5 : vector<16x1024xf32>
    %cst_7 = arith.constant dense<0.000000e+00> : vector<16xf32>
    %11 = vector.multi_reduction <add>, %10, %cst_7 [1] : vector<16x1024xf32> to vector<16xf32>
    %12 = vector.shape_cast %11 : vector<16xf32> to vector<16x1xf32>
    %cst_8 = arith.constant 9.765625E-4 : f32
    %13 = vector.broadcast %cst_8 : f32 to vector<16x1xf32>
    %14 = arith.mulf %12, %13 : vector<16x1xf32>
    %15 = arith.mulf %9, %9 : vector<16x1xf32>
    %16 = arith.subf %14, %15 : vector<16x1xf32>
    %cst_9 = arith.constant 0.000000e+00 : f32
    %17 = vector.broadcast %cst_9 : f32 to vector<16x1xf32>
    %18 = arith.maximumf %16, %17 : vector<16x1xf32>
    %19 = vector.broadcast %9 : vector<16x1xf32> to vector<16x1024xf32>
    %20 = arith.subf %5, %19 : vector<16x1024xf32>
    %cst_10 = arith.constant 9.99999974E-6 : f32
    %21 = vector.broadcast %cst_10 : f32 to vector<16x1xf32>
    %22 = arith.addf %18, %21 : vector<16x1xf32>
    %23 = math.rsqrt %22 : vector<16x1xf32>
    %24 = vector.broadcast %23 : vector<16x1xf32> to vector<16x1024xf32>
    %25 = arith.mulf %20, %24 : vector<16x1024xf32>
    %26 = arith.truncf %25 : vector<16x1024xf32> to vector<16x1024xbf16>
    %c0_11 = arith.constant 0 : index
    %c0_12 = arith.constant 0 : index
    %27 = vector.load %arg4[%c0_11, %c0_12] : memref<1024x128xbf16, #tpu.memory_space<vmem>>, vector<1024x128xbf16>
    %cst_13 = arith.constant dense<0.000000e+00> : vector<16x128xf32>
    %28 = tpu.matmul %26, %27, %cst_13 {dimension_numbers = #tpu.dot_dimension_numbers<[1], [0], [0], [1], [0, 0, 1, 1], [], []>} : vector<16x1024xbf16>, vector<1024x128xbf16>, vector<16x128xf32> -> vector<16x128xf32>
    %c0_14 = arith.constant 0 : index
    %c0_15 = arith.constant 0 : index
    %29 = vector.load %arg5[%c0_14, %c0_15] : memref<1x128xf32, #tpu.memory_space<vmem>>, vector<1x128xf32>
    %30 = vector.broadcast %29 : vector<1x128xf32> to vector<16x128xf32>
    %31 = arith.addf %28, %30 : vector<16x128xf32>
    %c0_16 = arith.constant 0 : index
    %c0_17 = arith.constant 0 : index
    %32 = vector.load %arg6[%c0_16, %c0_17] : memref<16x128xf32, #tpu.memory_space<vmem>>, vector<16x128xf32>
    tpu.vector_store %arg6[%c0_16, %c0_17], %31 {strides = array<i32>} : memref<16x128xf32, #tpu.memory_space<vmem>>, vector<16x128xf32>,
    return
  }
  func.func @transform_0(%arg0: i32) -> (i32, i32) {
    %c0_i32 = arith.constant 0 : i32
    %c0_i32_0 = arith.constant 0 : i32
    return %arg0, %c0_i32 : i32, i32
  }
  func.func @transform_1(%arg0: i32) -> (i32, i32) {
    %c0_i32 = arith.constant 0 : i32
    %c0_i32_0 = arith.constant 0 : i32
    %c0_i32_1 = arith.constant 0 : i32
    return %c0_i32, %c0_i32_0 : i32, i32
  }
  func.func @transform_2(%arg0: i32) -> (i32, i32) {
    %c0_i32 = arith.constant 0 : i32
    %c0_i32_0 = arith.constant 0 : i32
    %c0_i32_1 = arith.constant 0 : i32
    return %c0_i32, %c0_i32_0 : i32, i32
  }
  func.func @transform_3(%arg0: i32) -> (i32, i32) {
    %c0_i32 = arith.constant 0 : i32
    %c0_i32_0 = arith.constant 0 : i32
    %c0_i32_1 = arith.constant 0 : i32
    return %c0_i32, %c0_i32_0 : i32, i32
  }
  func.func @transform_4(%arg0: i32) -> (i32, i32) {
    %c0_i32 = arith.constant 0 : i32
    %c0_i32_0 = arith.constant 0 : i32
    %c0_i32_1 = arith.constant 0 : i32
    return %c0_i32, %c0_i32_0 : i32, i32
  }
  func.func @transform_5(%arg0: i32) -> (i32, i32) {
    %c0_i32 = arith.constant 0 : i32
    %c0_i32_0 = arith.constant 0 : i32
    return %arg0, %c0_i32 : i32, i32
  }
}

</mosaic_0001>

<llo_original>
// kernel: stable_maxpooling_mil_forward.1
$region0: #{stable_maxpooling_mil_forward.1}
  #allocation0 [shape = 'u32[]', space=smem, size = 0x4, offset = 0x4, fixed_abs, tag = 'smem constant byte address 0x4 - core index']
  #allocation1 [shape = 'u32[144,128]{1,0:T(1,128)}', space=vmem, size = 0x12000, scoped, tag = 'internal scratch']
  %s0 = inlined_call_operand.vmem [shape: bf16[16,1024], index: 0, kind: input, shape index: {}]
  %s1 = inlined_call_operand.hbm [shape: bf16[1024,1024], index: 1, kind: input, shape index: {}]
  %s2 = inlined_call_operand.hbm [shape: f32[1,1024], index: 2, kind: input, shape index: {}]
  %s3 = inlined_call_operand.hbm [shape: bf16[1024,128], index: 3, kind: input, shape index: {}]
  %s4 = inlined_call_operand.hbm [shape: f32[1,128], index: 4, kind: input, shape index: {}]
  %s5 = inlined_call_operand.vmem [shape: f32[16,128], index: 5, kind: output, shape index: {}]
  %s6 = sld [smem:[#allocation0]]
  $region46: #{stable_maxpooling_mil_forward.1} parent=0
    _
  %s8 = ssub.s32 1, %s6
  %s9 = scalar_select 0, %s8, %s6
  $region1: #{stable_maxpooling_mil_forward.1} parent=0
    #allocation2 [shape = 'u8[2097152]{0}', space=vmem, size = 0x200000, scoped, tag = 'input window, operand 1, single buffered']
    #allocation3 [shape = 's32[1]{0}', space=sflag, size = 0x4, scoped, tag = 'scoped memory for stable_maxpooling_mil_forward.1']
    #allocation4 [shape = 'u8[4096]{0}', space=vmem, size = 0x1000, scoped, tag = 'input window, operand 2, single buffered']
    #allocation5 [shape = 's32[1]{0}', space=sflag, size = 0x4, scoped, tag = 'scoped memory for stable_maxpooling_mil_forward.1']
    #allocation6 [shape = 'u8[262144]{0}', space=vmem, size = 0x40000, scoped, tag = 'input window, operand 3, single buffered']
    #allocation7 [shape = 'u8[512]{0}', space=vmem, size = 0x400, scoped, tag = 'input window, operand 4, single buffered']
    #allocation8 [shape = 's32[1]{0}', space=sflag, size = 0x4, scoped, tag = 'scoped memory for stable_maxpooling_mil_forward.1']
    %10 = vsyncpa [#allocation3], 0
    %11 = vsyncpa [#allocation5], 0
    %12 = vsyncpa [#allocation8], 0
    // Predicated region
    $region2: #{stable_maxpooling_mil_forward.1} parent=1 // pred_check
      _
    $region3: #{stable_maxpooling_mil_forward.1} parent=1 // pred_check_branch
      %14 = sbr.rel (0) target = $region5
    $region4: #{stable_maxpooling_mil_forward.1} parent=1 // pred_region
      _
    $region5: #{stable_maxpooling_mil_forward.1} parent=1 // pred_fallthru
      _
    // Predicated region
    $region6: #{stable_maxpooling_mil_forward.1} parent=1 // pred_check
      _
    $region7: #{stable_maxpooling_mil_forward.1} parent=1 // pred_check_branch
      %16 = sbr.rel (0) target = $region9
    $region8: #{stable_maxpooling_mil_forward.1} parent=1 // pred_region
      %s18 = ssub.s32 65536, 65536
      %19 = vsyncadd [#allocation3], %s18
      %s20 = sshll.u32 [#allocation2], 4
      %s21 = int_to_ptr.vmem [resolvable:$true] %s20
      %26 = dma.hbm_to_vmem [thread:$0]  %s1, 65536, %s21, [#allocation3], 512, 512, 32
    $region9: #{stable_maxpooling_mil_forward.1} parent=1 // pred_fallthru
      _
    // Predicated region
    $region10: #{stable_maxpooling_mil_forward.1} parent=1 // pred_check
      _
    $region11: #{stable_maxpooling_mil_forward.1} parent=1 // pred_check_branch
      %28 = sbr.rel (0) target = $region13
    $region12: #{stable_maxpooling_mil_forward.1} parent=1 // pred_region
      %s30 = ssub.s32 128, 128
      %31 = vsyncadd [#allocation5], %s30
      %s33 = sshll.u32 [#allocation4], 4
      %s34 = int_to_ptr.vmem [resolvable:$true] %s33
      %36 = dma.hbm_to_vmem [thread:$0]  %s2, 128, %s34, [#allocation5]
    $region13: #{stable_maxpooling_mil_forward.1} parent=1 // pred_fallthru
      _
    // Predicated region
    $region14: #{stable_maxpooling_mil_forward.1} parent=1 // pred_check
      _
    $region15: #{stable_maxpooling_mil_forward.1} parent=1 // pred_check_branch
      %38 = sbr.rel (0) target = $region17
    $region16: #{stable_maxpooling_mil_forward.1} parent=1 // pred_region
      %s40 = ssub.s32 8192, 8192
      %41 = vsyncadd [#allocation5], %s40
      %s42 = sshll.u32 [#allocation6], 4
      %s43 = int_to_ptr.vmem [resolvable:$true] %s42
      %48 = dma.hbm_to_vmem [thread:$0]  %s3, 8192, %s43, [#allocation5], 64, 64, 4
    $region17: #{stable_maxpooling_mil_forward.1} parent=1 // pred_fallthru
      _
    // Predicated region
    $region18: #{stable_maxpooling_mil_forward.1} parent=1 // pred_check
      _
    $region19: #{stable_maxpooling_mil_forward.1} parent=1 // pred_check_branch
      %50 = sbr.rel (0) target = $region21
    $region20: #{stable_maxpooling_mil_forward.1} parent=1 // pred_region
      %s52 = ssub.s32 16, 16
      %53 = vsyncadd [#allocation8], %s52
      %s55 = sshll.u32 [#allocation7], 4
      %s56 = int_to_ptr.vmem [resolvable:$true] %s55
      %58 = dma.hbm_to_vmem [thread:$0]  %s4, 16, %s56, [#allocation8]
    $region21: #{stable_maxpooling_mil_forward.1} parent=1 // pred_fallthru
      _
    // Predicated region
    $region22: #{stable_maxpooling_mil_forward.1} parent=1 // pred_check
      _
    $region23: #{stable_maxpooling_mil_forward.1} parent=1 // pred_check_branch
      %60 = sbr.rel (0) target = $region25
    $region24: #{stable_maxpooling_mil_forward.1} parent=1 // pred_region
      %61 = dma.done [#allocation3], 65536
    $region25: #{stable_maxpooling_mil_forward.1} parent=1 // pred_fallthru
      _
    // Predicated region
    $region26: #{stable_maxpooling_mil_forward.1} parent=1 // pred_check
      _
    $region27: #{stable_maxpooling_mil_forward.1} parent=1 // pred_check_branch
      %63 = sbr.rel (0) target = $region29
    $region28: #{stable_maxpooling_mil_forward.1} parent=1 // pred_region
      %64 = dma.done [#allocation5], 128
    $region29: #{stable_maxpooling_mil_forward.1} parent=1 // pred_fallthru
      _
    // Predicated region
    $region30: #{stable_maxpooling_mil_forward.1} parent=1 // pred_check
      _
    $region31: #{stable_maxpooling_mil_forward.1} parent=1 // pred_check_branch
      %66 = sbr.rel (0) target = $region33
    $region32: #{stable_maxpooling_mil_forward.1} parent=1 // pred_region
      %67 = dma.done [#allocation5], 8192
    $region33: #{stable_maxpooling_mil_forward.1} parent=1 // pred_fallthru
      _
    // Predicated region
    $region34: #{stable_maxpooling_mil_forward.1} parent=1 // pred_check
      _
    $region35: #{stable_maxpooling_mil_forward.1} parent=1 // pred_check_branch
      %69 = sbr.rel (0) target = $region37
    $region36: #{stable_maxpooling_mil_forward.1} parent=1 // pred_region
      %70 = dma.done [#allocation8], 16
    $region37: #{stable_maxpooling_mil_forward.1} parent=1 // pred_fallthru
      _
    %v72 = vld [vmem:[%s0] sm:$0xff]
    %v73 = vld [vmem:[%s0 + $0x8] sm:$0xff]
    %v74 = vld [vmem:[%s0 + $0x10] sm:$0xff]
    %v75 = vld [vmem:[%s0 + $0x18] sm:$0xff]
    %v76 = vld [vmem:[%s0 + $0x20] sm:$0xff]
    %v77 = vld [vmem:[%s0 + $0x28] sm:$0xff]
    %v78 = vld [vmem:[%s0 + $0x30] sm:$0xff]
    %v79 = vld [vmem:[%s0 + $0x38] sm:$0xff]
    %v80 = vld [vmem:[#allocation2] sm:$0xff]
    %v81 = vld [vmem:[#allocation2 + $0x8] sm:$0xff]
    %v82 = vld [vmem:[#allocation2 + $0x10] sm:$0xff]
    %v83 = vld [vmem:[#allocation2 + $0x18] sm:$0xff]
    %v84 = vld [vmem:[#allocation2 + $0x20] sm:$0xff]
    %v85 = vld [vmem:[#allocation2 + $0x28] sm:$0xff]
    %v86 = vld [vmem:[#allocation2 + $0x30] sm:$0xff]
    %v87 = vld [vmem:[#allocation2 + $0x38] sm:$0xff]
    %v88 = vld [vmem:[#allocation2 + $0x40] sm:$0xff]
    %v89 = vld [vmem:[#allocation2 + $0x48] sm:$0xff]
    %v90 = vld [vmem:[#allocation2 + $0x50] sm:$0xff]
    %v91 = vld [vmem:[#allocation2 + $0x58] sm:$0xff]
    %v92 = vld [vmem:[#allocation2 + $0x60] sm:$0xff]
    %v93 = vld [vmem:[#allocation2 + $0x68] sm:$0xff]
    %v94 = vld [vmem:[#allocation2 + $0x70] sm:$0xff]
    %v95 = vld [vmem:[#allocation2 + $0x78] sm:$0xff]
    %v96 = vld [vmem:[#allocation2 + $0x80] sm:$0xff]
    %v97 = vld [vmem:[#allocation2 + $0x88] sm:$0xff]
    %v98 = vld [vmem:[#allocation2 + $0x90] sm:$0xff]
    %v99 = vld [vmem:[#allocation2 + $0x98] sm:$0xff]
    %v100 = vld [vmem:[#allocation2 + $0xa0] sm:$0xff]
    %v101 = vld [vmem:[#allocation2 + $0xa8] sm:$0xff]
    %v102 = vld [vmem:[#allocation2 + $0xb0] sm:$0xff]
    %v103 = vld [vmem:[#allocation2 + $0xb8] sm:$0xff]
    %v104 = vld [vmem:[#allocation2 + $0xc0] sm:$0xff]
    %v105 = vld [vmem:[#allocation2 + $0xc8] sm:$0xff]
    %v106 = vld [vmem:[#allocation2 + $0xd0] sm:$0xff]
    %v107 = vld [vmem:[#allocation2 + $0xd8] sm:$0xff]
    %v108 = vld [vmem:[#allocation2 + $0xe0] sm:$0xff]
    %v109 = vld [vmem:[#allocation2 + $0xe8] sm:$0xff]
    %v110 = vld [vmem:[#allocation2 + $0xf0] sm:$0xff]
    %v111 = vld [vmem:[#allocation2 + $0xf8] sm:$0xff]
    %v112 = vld [vmem:[#allocation2 + $0x100] sm:$0xff]
    %v113 = vld [vmem:[#allocation2 + $0x108] sm:$0xff]
    %v114 = vld [vmem:[#allocation2 + $0x110] sm:$0xff]
    %v115 = vld [vmem:[#allocation2 + $0x118] sm:$0xff]
    %v116 = vld [vmem:[#allocation2 + $0x120] sm:$0xff]
    %v117 = vld [vmem:[#allocation2 + $0x128] sm:$0xff]
    %v118 = vld [vmem:[#allocation2 + $0x130] sm:$0xff]
    %v119 = vld [vmem:[#allocation2 + $0x138] sm:$0xff]
    %v120 = vld [vmem:[#allocation2 + $0x140] sm:$0xff]
    %v121 = vld [vmem:[#allocation2 + $0x148] sm:$0xff]
    %v122 = vld [vmem:[#allocation2 + $0x150] sm:$0xff]
    %v123 = vld [vmem:[#allocation2 + $0x158] sm:$0xff]
    %v124 = vld [vmem:[#allocation2 + $0x160] sm:$0xff]
    %v125 = vld [vmem:[#allocation2 + $0x168] sm:$0xff]
    %v126 = vld [vmem:[#allocation2 + $0x170] sm:$0xff]
    %v127 = vld [vmem:[#allocation2 + $0x178] sm:$0xff]
    %v128 = vld [vmem:[#allocation2 + $0x180] sm:$0xff]
    %v129 = vld [vmem:[#allocation2 + $0x188] sm:$0xff]
    %v130 = vld [vmem:[#allocation2 + $0x190] sm:$0xff]
    %v131 = vld [vmem:[#allocation2 + $0x198] sm:$0xff]
    %v132 = vld [vmem:[#allocation2 + $0x1a0] sm:$0xff]
    %v133 = vld [vmem:[#allocation2 + $0x1a8] sm:$0xff]
    %v134 = vld [vmem:[#allocation2 + $0x1b0] sm:$0xff]
    %v135 = vld [vmem:[#allocation2 + $0x1b8] sm:$0xff]
    %v136 = vld [vmem:[#allocation2 + $0x1c0] sm:$0xff]
    %v137 = vld [vmem:[#allocation2 + $0x1c8] sm:$0xff]
    %v138 = vld [vmem:[#allocation2 + $0x1d0] sm:$0xff]
    %v139 = vld [vmem:[#allocation2 + $0x1d8] sm:$0xff]
    %v140 = vld [vmem:[#allocation2 + $0x1e0] sm:$0xff]
    %v141 = vld [vmem:[#allocation2 + $0x1e8] sm:$0xff]
    %v142 = vld [vmem:[#allocation2 + $0x1f0] sm:$0xff]
    %v143 = vld [vmem:[#allocation2 + $0x1f8] sm:$0xff]
    %v144 = vld [vmem:[#allocation2 + $0x200] sm:$0xff]
    %v145 = vld [vmem:[#allocation2 + $0x208] sm:$0xff]
    %v146 = vld [vmem:[#allocation2 + $0x210] sm:$0xff]
    %v147 = vld [vmem:[#allocation2 + $0x218] sm:$0xff]
    %v148 = vld [vmem:[#allocation2 + $0x220] sm:$0xff]
    %v149 = vld [vmem:[#allocation2 + $0x228] sm:$0xff]
    %v150 = vld [vmem:[#allocation2 + $0x230] sm:$0xff]
    %v151 = vld [vmem:[#allocation2 + $0x238] sm:$0xff]
    %v152 = vld [vmem:[#allocation2 + $0x240] sm:$0xff]
    %v153 = vld [vmem:[#allocation2 + $0x248] sm:$0xff]
    %v154 = vld [vmem:[#allocation2 + $0x250] sm:$0xff]
    %v155 = vld [vmem:[#allocation2 + $0x258] sm:$0xff]
    %v156 = vld [vmem:[#allocation2 + $0x260] sm:$0xff]
    %v157 = vld [vmem:[#allocation2 + $0x268] sm:$0xff]
    %v158 = vld [vmem:[#allocation2 + $0x270] sm:$0xff]
    %v159 = vld [vmem:[#allocation2 + $0x278] sm:$0xff]
    %v160 = vld [vmem:[#allocation2 + $0x280] sm:$0xff]
    %v161 = vld [vmem:[#allocation2 + $0x288] sm:$0xff]
    %v162 = vld [vmem:[#allocation2 + $0x290] sm:$0xff]
    %v163 = vld [vmem:[#allocation2 + $0x298] sm:$0xff]
    %v164 = vld [vmem:[#allocation2 + $0x2a0] sm:$0xff]
    %v165 = vld [vmem:[#allocation2 + $0x2a8] sm:$0xff]
    %v166 = vld [vmem:[#allocation2 + $0x2b0] sm:$0xff]
    %v167 = vld [vmem:[#allocation2 + $0x2b8] sm:$0xff]
    %v168 = vld [vmem:[#allocation2 + $0x2c0] sm:$0xff]
    %v169 = vld [vmem:[#allocation2 + $0x2c8] sm:$0xff]
    %v170 = vld [vmem:[#allocation2 + $0x2d0] sm:$0xff]
    %v171 = vld [vmem:[#allocation2 + $0x2d8] sm:$0xff]
    %v172 = vld [vmem:[#allocation2 + $0x2e0] sm:$0xff]
    %v173 = vld [vmem:[#allocation2 + $0x2e8] sm:$0xff]
    %v174 = vld [vmem:[#allocation2 + $0x2f0] sm:$0xff]
    %v175 = vld [vmem:[#allocation2 + $0x2f8] sm:$0xff]
    %v176 = vld [vmem:[#allocation2 + $0x300] sm:$0xff]
    %v177 = vld [vmem:[#allocation2 + $0x308] sm:$0xff]
    %v178 = vld [vmem:[#allocation2 + $0x310] sm:$0xff]
    %v179 = vld [vmem:[#allocation2 + $0x318] sm:$0xff]
    %v180 = vld [vmem:[#allocation2 + $0x320] sm:$0xff]
    %v181 = vld [vmem:[#allocation2 + $0x328] sm:$0xff]
    %v182 = vld [vmem:[#allocation2 + $0x330] sm:$0xff]
    %v183 = vld [vmem:[#allocation2 + $0x338] sm:$0xff]
    %v184 = vld [vmem:[#allocation2 + $0x340] sm:$0xff]
    %v185 = vld [vmem:[#allocation2 + $0x348] sm:$0xff]
    %v186 = vld [vmem:[#allocation2 + $0x350] sm:$0xff]
    %v187 = vld [vmem:[#allocation2 + $0x358] sm:$0xff]
    %v188 = vld [vmem:[#allocation2 + $0x360] sm:$0xff]
    %v189 = vld [vmem:[#allocation2 + $0x368] sm:$0xff]
    %v190 = vld [vmem:[#allocation2 + $0x370] sm:$0xff]
    %v191 = vld [vmem:[#allocation2 + $0x378] sm:$0xff]
    %v192 = vld [vmem:[#allocation2 + $0x380] sm:$0xff]
    %v193 = vld [vmem:[#allocation2 + $0x388] sm:$0xff]
    %v194 = vld [vmem:[#allocation2 + $0x390] sm:$0xff]
    %v195 = vld [vmem:[#allocation2 + $0x398] sm:$0xff]
    %v196 = vld [vmem:[#allocation2 + $0x3a0] sm:$0xff]
    %v197 = vld [vmem:[#allocation2 + $0x3a8] sm:$0xff]
    %v198 = vld [vmem:[#allocation2 + $0x3b0] sm:$0xff]
    %v199 = vld [vmem:[#allocation2 + $0x3b8] sm:$0xff]
    %v200 = vld [vmem:[#allocation2 + $0x3c0] sm:$0xff]
    %v201 = vld [vmem:[#allocation2 + $0x3c8] sm:$0xff]
    %v202 = vld [vmem:[#allocation2 + $0x3d0] sm:$0xff]
    %v203 = vld [vmem:[#allocation2 + $0x3d8] sm:$0xff]
    %v204 = vld [vmem:[#allocation2 + $0x3e0] sm:$0xff]
    %v205 = vld [vmem:[#allocation2 + $0x3e8] sm:$0xff]
    %v206 = vld [vmem:[#allocation2 + $0x3f0] sm:$0xff]
    %v207 = vld [vmem:[#allocation2 + $0x3f8] sm:$0xff]
    %v208 = vld [vmem:[#allocation2 + $0x400] sm:$0xff]
    %v209 = vld [vmem:[#allocation2 + $0x408] sm:$0xff]
    %v210 = vld [vmem:[#allocation2 + $0x410] sm:$0xff]
    %v211 = vld [vmem:[#allocation2 + $0x418] sm:$0xff]
    %v212 = vld [vmem:[#allocation2 + $0x420] sm:$0xff]
    %v213 = vld [vmem:[#allocation2 + $0x428] sm:$0xff]
    %v214 = vld [vmem:[#allocation2 + $0x430] sm:$0xff]
    %v215 = vld [vmem:[#allocation2 + $0x438] sm:$0xff]
    %v216 = vld [vmem:[#allocation2 + $0x440] sm:$0xff]
    %v217 = vld [vmem:[#allocation2 + $0x448] sm:$0xff]
    %v218 = vld [vmem:[#allocation2 + $0x450] sm:$0xff]
    %v219 = vld [vmem:[#allocation2 + $0x458] sm:$0xff]
    %v220 = vld [vmem:[#allocation2 + $0x460] sm:$0xff]
    %v221 = vld [vmem:[#allocation2 + $0x468] sm:$0xff]
    %v222 = vld [vmem:[#allocation2 + $0x470] sm:$0xff]
    %v223 = vld [vmem:[#allocation2 + $0x478] sm:$0xff]
    %v224 = vld [vmem:[#allocation2 + $0x480] sm:$0xff]
    %v225 = vld [vmem:[#allocation2 + $0x488] sm:$0xff]
    %v226 = vld [vmem:[#allocation2 + $0x490] sm:$0xff]
    %v227 = vld [vmem:[#allocation2 + $0x498] sm:$0xff]
    %v228 = vld [vmem:[#allocation2 + $0x4a0] sm:$0xff]
    %v229 = vld [vmem:[#allocation2 + $0x4a8] sm:$0xff]
    %v230 = vld [vmem:[#allocation2 + $0x4b0] sm:$0xff]
    %v231 = vld [vmem:[#allocation2 + $0x4b8] sm:$0xff]
    %v232 = vld [vmem:[#allocation2 + $0x4c0] sm:$0xff]
    %v233 = vld [vmem:[#allocation2 + $0x4c8] sm:$0xff]
    %v234 = vld [vmem:[#allocation2 + $0x4d0] sm:$0xff]
    %v235 = vld [vmem:[#allocation2 + $0x4d8] sm:$0xff]
    %v236 = vld [vmem:[#allocation2 + $0x4e0] sm:$0xff]
    %v237 = vld [vmem:[#allocation2 + $0x4e8] sm:$0xff]
    %v238 = vld [vmem:[#allocation2 + $0x4f0] sm:$0xff]
    %v239 = vld [vmem:[#allocation2 + $0x4f8] sm:$0xff]
    %v240 = vld [vmem:[#allocation2 + $0x500] sm:$0xff]
    %v241 = vld [vmem:[#allocation2 + $0x508] sm:$0xff]
    %v242 = vld [vmem:[#allocation2 + $0x510] sm:$0xff]
    %v243 = vld [vmem:[#allocation2 + $0x518] sm:$0xff]
    %v244 = vld [vmem:[#allocation2 + $0x520] sm:$0xff]
    %v245 = vld [vmem:[#allocation2 + $0x528] sm:$0xff]
    %v246 = vld [vmem:[#allocation2 + $0x530] sm:$0xff]
    %v247 = vld [vmem:[#allocation2 + $0x538] sm:$0xff]
    %v248 = vld [vmem:[#allocation2 + $0x540] sm:$0xff]
    %v249 = vld [vmem:[#allocation2 + $0x548] sm:$0xff]
    %v250 = vld [vmem:[#allocation2 + $0x550] sm:$0xff]
    %v251 = vld [vmem:[#allocation2 + $0x558] sm:$0xff]
    %v252 = vld [vmem:[#allocation2 + $0x560] sm:$0xff]
    %v253 = vld [vmem:[#allocation2 + $0x568] sm:$0xff]
    %v254 = vld [vmem:[#allocation2 + $0x570] sm:$0xff]
    %v255 = vld [vmem:[#allocation2 + $0x578] sm:$0xff]
    %v256 = vld [vmem:[#allocation2 + $0x580] sm:$0xff]
    %v257 = vld [vmem:[#allocation2 + $0x588] sm:$0xff]
    %v258 = vld [vmem:[#allocation2 + $0x590] sm:$0xff]
    %v259 = vld [vmem:[#allocation2 + $0x598] sm:$0xff]
    %v260 = vld [vmem:[#allocation2 + $0x5a0] sm:$0xff]
    %v261 = vld [vmem:[#allocation2 + $0x5a8] sm:$0xff]
    %v262 = vld [vmem:[#allocation2 + $0x5b0] sm:$0xff]
    %v263 = vld [vmem:[#allocation2 + $0x5b8] sm:$0xff]
    %v264 = vld [vmem:[#allocation2 + $0x5c0] sm:$0xff]
    %v265 = vld [vmem:[#allocation2 + $0x5c8] sm:$0xff]
    %v266 = vld [vmem:[#allocation2 + $0x5d0] sm:$0xff]
    %v267 = vld [vmem:[#allocation2 + $0x5d8] sm:$0xff]
    %v268 = vld [vmem:[#allocation2 + $0x5e0] sm:$0xff]
    %v269 = vld [vmem:[#allocation2 + $0x5e8] sm:$0xff]
    %v270 = vld [vmem:[#allocation2 + $0x5f0] sm:$0xff]
    %v271 = vld [vmem:[#allocation2 + $0x5f8] sm:$0xff]
    %v272 = vld [vmem:[#allocation2 + $0x600] sm:$0xff]
    %v273 = vld [vmem:[#allocation2 + $0x608] sm:$0xff]
    %v274 = vld [vmem:[#allocation2 + $0x610] sm:$0xff]
    %v275 = vld [vmem:[#allocation2 + $0x618] sm:$0xff]
    %v276 = vld [vmem:[#allocation2 + $0x620] sm:$0xff]
    %v277 = vld [vmem:[#allocation2 + $0x628] sm:$0xff]
    %v278 = vld [vmem:[#allocation2 + $0x630] sm:$0xff]
    %v279 = vld [vmem:[#allocation2 + $0x638] sm:$0xff]
    %v280 = vld [vmem:[#allocation2 + $0x640] sm:$0xff]
    %v281 = vld [vmem:[#allocation2 + $0x648] sm:$0xff]
    %v282 = vld [vmem:[#allocation2 + $0x650] sm:$0xff]
    %v283 = vld [vmem:[#allocation2 + $0x658] sm:$0xff]
    %v284 = vld [vmem:[#allocation2 + $0x660] sm:$0xff]
    %v285 = vld [vmem:[#allocation2 + $0x668] sm:$0xff]
    %v286 = vld [vmem:[#allocation2 + $0x670] sm:$0xff]
    %v287 = vld [vmem:[#allocation2 + $0x678] sm:$0xff]
    %v288 = vld [vmem:[#allocation2 + $0x680] sm:$0xff]
    %v289 = vld [vmem:[#allocation2 + $0x688] sm:$0xff]
    %v290 = vld [vmem:[#allocation2 + $0x690] sm:$0xff]
    %v291 = vld [vmem:[#allocation2 + $0x698] sm:$0xff]
    %v292 = vld [vmem:[#allocation2 + $0x6a0] sm:$0xff]
    %v293 = vld [vmem:[#allocation2 + $0x6a8] sm:$0xff]
    %v294 = vld [vmem:[#allocation2 + $0x6b0] sm:$0xff]
    %v295 = vld [vmem:[#allocation2 + $0x6b8] sm:$0xff]
    %v296 = vld [vmem:[#allocation2 + $0x6c0] sm:$0xff]
    %v297 = vld [vmem:[#allocation2 + $0x6c8] sm:$0xff]
    %v298 = vld [vmem:[#allocation2 + $0x6d0] sm:$0xff]
    %v299 = vld [vmem:[#allocation2 + $0x6d8] sm:$0xff]
    %v300 = vld [vmem:[#allocation2 + $0x6e0] sm:$0xff]
    %v301 = vld [vmem:[#allocation2 + $0x6e8] sm:$0xff]
    %v302 = vld [vmem:[#allocation2 + $0x6f0] sm:$0xff]
    %v303 = vld [vmem:[#allocation2 + $0x6f8] sm:$0xff]
    %v304 = vld [vmem:[#allocation2 + $0x700] sm:$0xff]
    %v305 = vld [vmem:[#allocation2 + $0x708] sm:$0xff]
    %v306 = vld [vmem:[#allocation2 + $0x710] sm:$0xff]
    %v307 = vld [vmem:[#allocation2 + $0x718] sm:$0xff]
    %v308 = vld [vmem:[#allocation2 + $0x720] sm:$0xff]
    %v309 = vld [vmem:[#allocation2 + $0x728] sm:$0xff]
    %v310 = vld [vmem:[#allocation2 + $0x730] sm:$0xff]
    %v311 = vld [vmem:[#allocation2 + $0x738] sm:$0xff]
    %v312 = vld [vmem:[#allocation2 + $0x740] sm:$0xff]
    %v313 = vld [vmem:[#allocation2 + $0x748] sm:$0xff]
    %v314 = vld [vmem:[#allocation2 + $0x750] sm:$0xff]
    %v315 = vld [vmem:[#allocation2 + $0x758] sm:$0xff]
    %v316 = vld [vmem:[#allocation2 + $0x760] sm:$0xff]
    %v317 = vld [vmem:[#allocation2 + $0x768] sm:$0xff]
    %v318 = vld [vmem:[#allocation2 + $0x770] sm:$0xff]
    %v319 = vld [vmem:[#allocation2 + $0x778] sm:$0xff]
    %v320 = vld [vmem:[#allocation2 + $0x780] sm:$0xff]
    %v321 = vld [vmem:[#allocation2 + $0x788] sm:$0xff]
    %v322 = vld [vmem:[#allocation2 + $0x790] sm:$0xff]
    %v323 = vld [vmem:[#allocation2 + $0x798] sm:$0xff]
    %v324 = vld [vmem:[#allocation2 + $0x7a0] sm:$0xff]
    %v325 = vld [vmem:[#allocation2 + $0x7a8] sm:$0xff]
    %v326 = vld [vmem:[#allocation2 + $0x7b0] sm:$0xff]
    %v327 = vld [vmem:[#allocation2 + $0x7b8] sm:$0xff]
    %v328 = vld [vmem:[#allocation2 + $0x7c0] sm:$0xff]
    %v329 = vld [vmem:[#allocation2 + $0x7c8] sm:$0xff]
    %v330 = vld [vmem:[#allocation2 + $0x7d0] sm:$0xff]
    %v331 = vld [vmem:[#allocation2 + $0x7d8] sm:$0xff]
    %v332 = vld [vmem:[#allocation2 + $0x7e0] sm:$0xff]
    %v333 = vld [vmem:[#allocation2 + $0x7e8] sm:$0xff]
    %v334 = vld [vmem:[#allocation2 + $0x7f0] sm:$0xff]
    %v335 = vld [vmem:[#allocation2 + $0x7f8] sm:$0xff]
    %v336 = vld [vmem:[#allocation2 + $0x800] sm:$0xff]
    %v337 = vld [vmem:[#allocation2 + $0x808] sm:$0xff]
    %v338 = vld [vmem:[#allocation2 + $0x810] sm:$0xff]
    %v339 = vld [vmem:[#allocation2 + $0x818] sm:$0xff]
    %v340 = vld [vmem:[#allocation2 + $0x820] sm:$0xff]
    %v341 = vld [vmem:[#allocation2 + $0x828] sm:$0xff]
    %v342 = vld [vmem:[#allocation2 + $0x830] sm:$0xff]
    %v343 = vld [vmem:[#allocation2 + $0x838] sm:$0xff]
    %v344 = vld [vmem:[#allocation2 + $0x840] sm:$0xff]
    %v345 = vld [vmem:[#allocation2 + $0x848] sm:$0xff]
    %v346 = vld [vmem:[#allocation2 + $0x850] sm:$0xff]
    %v347 = vld [vmem:[#allocation2 + $0x858] sm:$0xff]
    %v348 = vld [vmem:[#allocation2 + $0x860] sm:$0xff]
    %v349 = vld [vmem:[#allocation2 + $0x868] sm:$0xff]
    %v350 = vld [vmem:[#allocation2 + $0x870] sm:$0xff]
    %v351 = vld [vmem:[#allocation2 + $0x878] sm:$0xff]
    %v352 = vld [vmem:[#allocation2 + $0x880] sm:$0xff]
    %v353 = vld [vmem:[#allocation2 + $0x888] sm:$0xff]
    %v354 = vld [vmem:[#allocation2 + $0x890] sm:$0xff]
    %v355 = vld [vmem:[#allocation2 + $0x898] sm:$0xff]
    %v356 = vld [vmem:[#allocation2 + $0x8a0] sm:$0xff]
    %v357 = vld [vmem:[#allocation2 + $0x8a8] sm:$0xff]
    %v358 = vld [vmem:[#allocation2 + $0x8b0] sm:$0xff]
    %v359 = vld [vmem:[#allocation2 + $0x8b8] sm:$0xff]
    %v360 = vld [vmem:[#allocation2 + $0x8c0] sm:$0xff]
    %v361 = vld [vmem:[#allocation2 + $0x8c8] sm:$0xff]
    %v362 = vld [vmem:[#allocation2 + $0x8d0] sm:$0xff]
    %v363 = vld [vmem:[#allocation2 + $0x8d8] sm:$0xff]
    %v364 = vld [vmem:[#allocation2 + $0x8e0] sm:$0xff]
    %v365 = vld [vmem:[#allocation2 + $0x8e8] sm:$0xff]
    %v366 = vld [vmem:[#allocation2 + $0x8f0] sm:$0xff]
    %v367 = vld [vmem:[#allocation2 + $0x8f8] sm:$0xff]
    %v368 = vld [vmem:[#allocation2 + $0x900] sm:$0xff]
    %v369 = vld [vmem:[#allocation2 + $0x908] sm:$0xff]
    %v370 = vld [vmem:[#allocation2 + $0x910] sm:$0xff]
    %v371 = vld [vmem:[#allocation2 + $0x918] sm:$0xff]
    %v372 = vld [vmem:[#allocation2 + $0x920] sm:$0xff]
    %v373 = vld [vmem:[#allocation2 + $0x928] sm:$0xff]
    %v374 = vld [vmem:[#allocation2 + $0x930] sm:$0xff]
    %v375 = vld [vmem:[#allocation2 + $0x938] sm:$0xff]
    %v376 = vld [vmem:[#allocation2 + $0x940] sm:$0xff]
    %v377 = vld [vmem:[#allocation2 + $0x948] sm:$0xff]
    %v378 = vld [vmem:[#allocation2 + $0x950] sm:$0xff]
    %v379 = vld [vmem:[#allocation2 + $0x958] sm:$0xff]
    %v380 = vld [vmem:[#allocation2 + $0x960] sm:$0xff]
    %v381 = vld [vmem:[#allocation2 + $0x968] sm:$0xff]
    %v382 = vld [vmem:[#allocation2 + $0x970] sm:$0xff]
    %v383 = vld [vmem:[#allocation2 + $0x978] sm:$0xff]
    %v384 = vld [vmem:[#allocation2 + $0x980] sm:$0xff]
    %v385 = vld [vmem:[#allocation2 + $0x988] sm:$0xff]
    %v386 = vld [vmem:[#allocation2 + $0x990] sm:$0xff]
    %v387 = vld [vmem:[#allocation2 + $0x998] sm:$0xff]
    %v388 = vld [vmem:[#allocation2 + $0x9a0] sm:$0xff]
    %v389 = vld [vmem:[#allocation2 + $0x9a8] sm:$0xff]
    %v390 = vld [vmem:[#allocation2 + $0x9b0] sm:$0xff]
    %v391 = vld [vmem:[#allocation2 + $0x9b8] sm:$0xff]
    %v392 = vld [vmem:[#allocation2 + $0x9c0] sm:$0xff]
    %v393 = vld [vmem:[#allocation2 + $0x9c8] sm:$0xff]
    %v394 = vld [vmem:[#allocation2 + $0x9d0] sm:$0xff]
    %v395 = vld [vmem:[#allocation2 + $0x9d8] sm:$0xff]
    %v396 = vld [vmem:[#allocation2 + $0x9e0] sm:$0xff]
    %v397 = vld [vmem:[#allocation2 + $0x9e8] sm:$0xff]
    %v398 = vld [vmem:[#allocation2 + $0x9f0] sm:$0xff]
    %v399 = vld [vmem:[#allocation2 + $0x9f8] sm:$0xff]
    %v400 = vld [vmem:[#allocation2 + $0xa00] sm:$0xff]
    %v401 = vld [vmem:[#allocation2 + $0xa08] sm:$0xff]
    %v402 = vld [vmem:[#allocation2 + $0xa10] sm:$0xff]
    %v403 = vld [vmem:[#allocation2 + $0xa18] sm:$0xff]
    %v404 = vld [vmem:[#allocation2 + $0xa20] sm:$0xff]
    %v405 = vld [vmem:[#allocation2 + $0xa28] sm:$0xff]
    %v406 = vld [vmem:[#allocation2 + $0xa30] sm:$0xff]
    %v407 = vld [vmem:[#allocation2 + $0xa38] sm:$0xff]
    %v408 = vld [vmem:[#allocation2 + $0xa40] sm:$0xff]
    %v409 = vld [vmem:[#allocation2 + $0xa48] sm:$0xff]
    %v410 = vld [vmem:[#allocation2 + $0xa50] sm:$0xff]
    %v411 = vld [vmem:[#allocation2 + $0xa58] sm:$0xff]
    %v412 = vld [vmem:[#allocation2 + $0xa60] sm:$0xff]
    %v413 = vld [vmem:[#allocation2 + $0xa68] sm:$0xff]
    %v414 = vld [vmem:[#allocation2 + $0xa70] sm:$0xff]
    %v415 = vld [vmem:[#allocation2 + $0xa78] sm:$0xff]
    %v416 = vld [vmem:[#allocation2 + $0xa80] sm:$0xff]
    %v417 = vld [vmem:[#allocation2 + $0xa88] sm:$0xff]
    %v418 = vld [vmem:[#allocation2 + $0xa90] sm:$0xff]
    %v419 = vld [vmem:[#allocation2 + $0xa98] sm:$0xff]
    %v420 = vld [vmem:[#allocation2 + $0xaa0] sm:$0xff]
    %v421 = vld [vmem:[#allocation2 + $0xaa8] sm:$0xff]
    %v422 = vld [vmem:[#allocation2 + $0xab0] sm:$0xff]
    %v423 = vld [vmem:[#allocation2 + $0xab8] sm:$0xff]
    %v424 = vld [vmem:[#allocation2 + $0xac0] sm:$0xff]
    %v425 = vld [vmem:[#allocation2 + $0xac8] sm:$0xff]
    %v426 = vld [vmem:[#allocation2 + $0xad0] sm:$0xff]
    %v427 = vld [vmem:[#allocation2 + $0xad8] sm:$0xff]
    %v428 = vld [vmem:[#allocation2 + $0xae0] sm:$0xff]
    %v429 = vld [vmem:[#allocation2 + $0xae8] sm:$0xff]
    %v430 = vld [vmem:[#allocation2 + $0xaf0] sm:$0xff]
    %v431 = vld [vmem:[#allocation2 + $0xaf8] sm:$0xff]
    %v432 = vld [vmem:[#allocation2 + $0xb00] sm:$0xff]
    %v433 = vld [vmem:[#allocation2 + $0xb08] sm:$0xff]
    %v434 = vld [vmem:[#allocation2 + $0xb10] sm:$0xff]
    %v435 = vld [vmem:[#allocation2 + $0xb18] sm:$0xff]
    %v436 = vld [vmem:[#allocation2 + $0xb20] sm:$0xff]
    %v437 = vld [vmem:[#allocation2 + $0xb28] sm:$0xff]
    %v438 = vld [vmem:[#allocation2 + $0xb30] sm:$0xff]
    %v439 = vld [vmem:[#allocation2 + $0xb38] sm:$0xff]
    %v440 = vld [vmem:[#allocation2 + $0xb40] sm:$0xff]
    %v441 = vld [vmem:[#allocation2 + $0xb48] sm:$0xff]
    %v442 = vld [vmem:[#allocation2 + $0xb50] sm:$0xff]
    %v443 = vld [vmem:[#allocation2 + $0xb58] sm:$0xff]
    %v444 = vld [vmem:[#allocation2 + $0xb60] sm:$0xff]
    %v445 = vld [vmem:[#allocation2 + $0xb68] sm:$0xff]
    %v446 = vld [vmem:[#allocation2 + $0xb70] sm:$0xff]
    %v447 = vld [vmem:[#allocation2 + $0xb78] sm:$0xff]
    %v448 = vld [vmem:[#allocation2 + $0xb80] sm:$0xff]
    %v449 = vld [vmem:[#allocation2 + $0xb88] sm:$0xff]
    %v450 = vld [vmem:[#allocation2 + $0xb90] sm:$0xff]
    %v451 = vld [vmem:[#allocation2 + $0xb98] sm:$0xff]
    %v452 = vld [vmem:[#allocation2 + $0xba0] sm:$0xff]
    %v453 = vld [vmem:[#allocation2 + $0xba8] sm:$0xff]
    %v454 = vld [vmem:[#allocation2 + $0xbb0] sm:$0xff]
    %v455 = vld [vmem:[#allocation2 + $0xbb8] sm:$0xff]
    %v456 = vld [vmem:[#allocation2 + $0xbc0] sm:$0xff]
    %v457 = vld [vmem:[#allocation2 + $0xbc8] sm:$0xff]
    %v458 = vld [vmem:[#allocation2 + $0xbd0] sm:$0xff]
    %v459 = vld [vmem:[#allocation2 + $0xbd8] sm:$0xff]
    %v460 = vld [vmem:[#allocation2 + $0xbe0] sm:$0xff]
    %v461 = vld [vmem:[#allocation2 + $0xbe8] sm:$0xff]
    %v462 = vld [vmem:[#allocation2 + $0xbf0] sm:$0xff]
    %v463 = vld [vmem:[#allocation2 + $0xbf8] sm:$0xff]
    %v464 = vld [vmem:[#allocation2 + $0xc00] sm:$0xff]
    %v465 = vld [vmem:[#allocation2 + $0xc08] sm:$0xff]
    %v466 = vld [vmem:[#allocation2 + $0xc10] sm:$0xff]
    %v467 = vld [vmem:[#allocation2 + $0xc18] sm:$0xff]
    %v468 = vld [vmem:[#allocation2 + $0xc20] sm:$0xff]
    %v469 = vld [vmem:[#allocation2 + $0xc28] sm:$0xff]
    %v470 = vld [vmem:[#allocation2 + $0xc30] sm:$0xff]
    %v471 = vld [vmem:[#allocation2 + $0xc38] sm:$0xff]
    %v472 = vld [vmem:[#allocation2 + $0xc40] sm:$0xff]
    %v473 = vld [vmem:[#allocation2 + $0xc48] sm:$0xff]
    %v474 = vld [vmem:[#allocation2 + $0xc50] sm:$0xff]
    %v475 = vld [vmem:[#allocation2 + $0xc58] sm:$0xff]
    %v476 = vld [vmem:[#allocation2 + $0xc60] sm:$0xff]
    %v477 = vld [vmem:[#allocation2 + $0xc68] sm:$0xff]
    %v478 = vld [vmem:[#allocation2 + $0xc70] sm:$0xff]
    %v479 = vld [vmem:[#allocation2 + $0xc78] sm:$0xff]
    %v480 = vld [vmem:[#allocation2 + $0xc80] sm:$0xff]
    %v481 = vld [vmem:[#allocation2 + $0xc88] sm:$0xff]
    %v482 = vld [vmem:[#allocation2 + $0xc90] sm:$0xff]
    %v483 = vld [vmem:[#allocation2 + $0xc98] sm:$0xff]
    %v484 = vld [vmem:[#allocation2 + $0xca0] sm:$0xff]
    %v485 = vld [vmem:[#allocation2 + $0xca8] sm:$0xff]
    %v486 = vld [vmem:[#allocation2 + $0xcb0] sm:$0xff]
    %v487 = vld [vmem:[#allocation2 + $0xcb8] sm:$0xff]
    %v488 = vld [vmem:[#allocation2 + $0xcc0] sm:$0xff]
    %v489 = vld [vmem:[#allocation2 + $0xcc8] sm:$0xff]
    %v490 = vld [vmem:[#allocation2 + $0xcd0] sm:$0xff]
    %v491 = vld [vmem:[#allocation2 + $0xcd8] sm:$0xff]
    %v492 = vld [vmem:[#allocation2 + $0xce0] sm:$0xff]
    %v493 = vld [vmem:[#allocation2 + $0xce8] sm:$0xff]
    %v494 = vld [vmem:[#allocation2 + $0xcf0] sm:$0xff]
    %v495 = vld [vmem:[#allocation2 + $0xcf8] sm:$0xff]
    %v496 = vld [vmem:[#allocation2 + $0xd00] sm:$0xff]
    %v497 = vld [vmem:[#allocation2 + $0xd08] sm:$0xff]
    %v498 = vld [vmem:[#allocation2 + $0xd10] sm:$0xff]
    %v499 = vld [vmem:[#allocation2 + $0xd18] sm:$0xff]
    %v500 = vld [vmem:[#allocation2 + $0xd20] sm:$0xff]
    %v501 = vld [vmem:[#allocation2 + $0xd28] sm:$0xff]
    %v502 = vld [vmem:[#allocation2 + $0xd30] sm:$0xff]
    %v503 = vld [vmem:[#allocation2 + $0xd38] sm:$0xff]
    %v504 = vld [vmem:[#allocation2 + $0xd40] sm:$0xff]
    %v505 = vld [vmem:[#allocation2 + $0xd48] sm:$0xff]
    %v506 = vld [vmem:[#allocation2 + $0xd50] sm:$0xff]
    %v507 = vld [vmem:[#allocation2 + $0xd58] sm:$0xff]
    %v508 = vld [vmem:[#allocation2 + $0xd60] sm:$0xff]
    %v509 = vld [vmem:[#allocation2 + $0xd68] sm:$0xff]
    %v510 = vld [vmem:[#allocation2 + $0xd70] sm:$0xff]
    %v511 = vld [vmem:[#allocation2 + $0xd78] sm:$0xff]
    %v512 = vld [vmem:[#allocation2 + $0xd80] sm:$0xff]
    %v513 = vld [vmem:[#allocation2 + $0xd88] sm:$0xff]
    %v514 = vld [vmem:[#allocation2 + $0xd90] sm:$0xff]
    %v515 = vld [vmem:[#allocation2 + $0xd98] sm:$0xff]
    %v516 = vld [vmem:[#allocation2 + $0xda0] sm:$0xff]
    %v517 = vld [vmem:[#allocation2 + $0xda8] sm:$0xff]
    %v518 = vld [vmem:[#allocation2 + $0xdb0] sm:$0xff]
    %v519 = vld [vmem:[#allocation2 + $0xdb8] sm:$0xff]
    %v520 = vld [vmem:[#allocation2 + $0xdc0] sm:$0xff]
    %v521 = vld [vmem:[#allocation2 + $0xdc8] sm:$0xff]
    %v522 = vld [vmem:[#allocation2 + $0xdd0] sm:$0xff]
    %v523 = vld [vmem:[#allocation2 + $0xdd8] sm:$0xff]
    %v524 = vld [vmem:[#allocation2 + $0xde0] sm:$0xff]
    %v525 = vld [vmem:[#allocation2 + $0xde8] sm:$0xff]
    %v526 = vld [vmem:[#allocation2 + $0xdf0] sm:$0xff]
    %v527 = vld [vmem:[#allocation2 + $0xdf8] sm:$0xff]
    %v528 = vld [vmem:[#allocation2 + $0xe00] sm:$0xff]
    %v529 = vld [vmem:[#allocation2 + $0xe08] sm:$0xff]
    %v530 = vld [vmem:[#allocation2 + $0xe10] sm:$0xff]
    %v531 = vld [vmem:[#allocation2 + $0xe18] sm:$0xff]
    %v532 = vld [vmem:[#allocation2 + $0xe20] sm:$0xff]
    %v533 = vld [vmem:[#allocation2 + $0xe28] sm:$0xff]
    %v534 = vld [vmem:[#allocation2 + $0xe30] sm:$0xff]
    %v535 = vld [vmem:[#allocation2 + $0xe38] sm:$0xff]
    %v536 = vld [vmem:[#allocation2 + $0xe40] sm:$0xff]
    %v537 = vld [vmem:[#allocation2 + $0xe48] sm:$0xff]
    %v538 = vld [vmem:[#allocation2 + $0xe50] sm:$0xff]
    %v539 = vld [vmem:[#allocation2 + $0xe58] sm:$0xff]
    %v540 = vld [vmem:[#allocation2 + $0xe60] sm:$0xff]
    %v541 = vld [vmem:[#allocation2 + $0xe68] sm:$0xff]
    %v542 = vld [vmem:[#allocation2 + $0xe70] sm:$0xff]
    %v543 = vld [vmem:[#allocation2 + $0xe78] sm:$0xff]
    %v544 = vld [vmem:[#allocation2 + $0xe80] sm:$0xff]
    %v545 = vld [vmem:[#allocation2 + $0xe88] sm:$0xff]
    %v546 = vld [vmem:[#allocation2 + $0xe90] sm:$0xff]
    %v547 = vld [vmem:[#allocation2 + $0xe98] sm:$0xff]
    %v548 = vld [vmem:[#allocation2 + $0xea0] sm:$0xff]
    %v549 = vld [vmem:[#allocation2 + $0xea8] sm:$0xff]
    %v550 = vld [vmem:[#allocation2 + $0xeb0] sm:$0xff]
    %v551 = vld [vmem:[#allocation2 + $0xeb8] sm:$0xff]
    %v552 = vld [vmem:[#allocation2 + $0xec0] sm:$0xff]
    %v553 = vld [vmem:[#allocation2 + $0xec8] sm:$0xff]
    %v554 = vld [vmem:[#allocation2 + $0xed0] sm:$0xff]
    %v555 = vld [vmem:[#allocation2 + $0xed8] sm:$0xff]
    %v556 = vld [vmem:[#allocation2 + $0xee0] sm:$0xff]
    %v557 = vld [vmem:[#allocation2 + $0xee8] sm:$0xff]
    %v558 = vld [vmem:[#allocation2 + $0xef0] sm:$0xff]
    %v559 = vld [vmem:[#allocation2 + $0xef8] sm:$0xff]
    %v560 = vld [vmem:[#allocation2 + $0xf00] sm:$0xff]
    %v561 = vld [vmem:[#allocation2 + $0xf08] sm:$0xff]
    %v562 = vld [vmem:[#allocation2 + $0xf10] sm:$0xff]
    %v563 = vld [vmem:[#allocation2 + $0xf18] sm:$0xff]
    %v564 = vld [vmem:[#allocation2 + $0xf20] sm:$0xff]
    %v565 = vld [vmem:[#allocation2 + $0xf28] sm:$0xff]
    %v566 = vld [vmem:[#allocation2 + $0xf30] sm:$0xff]
    %v567 = vld [vmem:[#allocation2 + $0xf38] sm:$0xff]
    %v568 = vld [vmem:[#allocation2 + $0xf40] sm:$0xff]
    %v569 = vld [vmem:[#allocation2 + $0xf48] sm:$0xff]
    %v570 = vld [vmem:[#allocation2 + $0xf50] sm:$0xff]
    %v571 = vld [vmem:[#allocation2 + $0xf58] sm:$0xff]
    %v572 = vld [vmem:[#allocation2 + $0xf60] sm:$0xff]
    %v573 = vld [vmem:[#allocation2 + $0xf68] sm:$0xff]
    %v574 = vld [vmem:[#allocation2 + $0xf70] sm:$0xff]
    %v575 = vld [vmem:[#allocation2 + $0xf78] sm:$0xff]
    %v576 = vld [vmem:[#allocation2 + $0xf80] sm:$0xff]
    %v577 = vld [vmem:[#allocation2 + $0xf88] sm:$0xff]
    %v578 = vld [vmem:[#allocation2 + $0xf90] sm:$0xff]
    %v579 = vld [vmem:[#allocation2 + $0xf98] sm:$0xff]
    %v580 = vld [vmem:[#allocation2 + $0xfa0] sm:$0xff]
    %v581 = vld [vmem:[#allocation2 + $0xfa8] sm:$0xff]
    %v582 = vld [vmem:[#allocation2 + $0xfb0] sm:$0xff]
    %v583 = vld [vmem:[#allocation2 + $0xfb8] sm:$0xff]
    %v584 = vld [vmem:[#allocation2 + $0xfc0] sm:$0xff]
    %v585 = vld [vmem:[#allocation2 + $0xfc8] sm:$0xff]
    %v586 = vld [vmem:[#allocation2 + $0xfd0] sm:$0xff]
    %v587 = vld [vmem:[#allocation2 + $0xfd8] sm:$0xff]
    %v588 = vld [vmem:[#allocation2 + $0xfe0] sm:$0xff]
    %v589 = vld [vmem:[#allocation2 + $0xfe8] sm:$0xff]
    %v590 = vld [vmem:[#allocation2 + $0xff0] sm:$0xff]
    %v591 = vld [vmem:[#allocation2 + $0xff8] sm:$0xff]
    %v592 = vld [vmem:[#allocation4] sm:$0xff]
    %v594 = vlaneseq
    %v595 = vshrl.u32 %v594, 7
    %v596 = vsub.s32 0, %v595
    %v597 = vrot.slane %v592, %v596
    %v598 = vlaneseq
    %v599 = vshrl.u32 %v598, 7
    %v600 = vsub.s32 1, %v599
    %v601 = vrot.slane %v592, %v600
    %v602 = vlaneseq
    %v603 = vshrl.u32 %v602, 7
    %v604 = vsub.s32 2, %v603
    %v605 = vrot.slane %v592, %v604
    %v606 = vlaneseq
    %v607 = vshrl.u32 %v606, 7
    %v608 = vsub.s32 3, %v607
    %v609 = vrot.slane %v592, %v608
    %v610 = vlaneseq
    %v611 = vshrl.u32 %v610, 7
    %v612 = vsub.s32 4, %v611
    %v613 = vrot.slane %v592, %v612
    %v614 = vlaneseq
    %v615 = vshrl.u32 %v614, 7
    %v616 = vsub.s32 5, %v615
    %v617 = vrot.slane %v592, %v616
    %v618 = vlaneseq
    %v619 = vshrl.u32 %v618, 7
    %v620 = vsub.s32 6, %v619
    %v621 = vrot.slane %v592, %v620
    %v622 = vlaneseq
    %v623 = vshrl.u32 %v622, 7
    %v624 = vsub.s32 7, %v623
    %v625 = vrot.slane %v592, %v624
    %v642 = vunpack.c.l.b16 %v72
    %v643 = vunpack.c.h.b16 %v72
    %v644 = vunpack.c.l.b16 %v73
    %v645 = vunpack.c.h.b16 %v73
    %v646 = vunpack.c.l.b16 %v74
    %v647 = vunpack.c.h.b16 %v74
    %v648 = vunpack.c.l.b16 %v75
    %v649 = vunpack.c.h.b16 %v75
    %v650 = vunpack.c.l.b16 %v76
    %v651 = vunpack.c.h.b16 %v76
    %v652 = vunpack.c.l.b16 %v77
    %v653 = vunpack.c.h.b16 %v77
    %v654 = vunpack.c.l.b16 %v78
    %v655 = vunpack.c.h.b16 %v78
    %v656 = vunpack.c.l.b16 %v79
    %v657 = vunpack.c.h.b16 %v79
    %v658 = vpack.c.b16 %v650, %v642
    %v659 = vpack.c.b16 %v651, %v643
    %v660 = vpack.c.b16 %v652, %v644
    %v661 = vpack.c.b16 %v653, %v645
    %v662 = vpack.c.b16 %v654, %v646
    %v663 = vpack.c.b16 %v655, %v647
    %v664 = vpack.c.b16 %v656, %v648
    %v665 = vpack.c.b16 %v657, %v649
    %v1186 = vunpack.c.l.b16 %v80
    %v1187 = vunpack.c.h.b16 %v80
    %v1188 = vunpack.c.l.b16 %v81
    %v1189 = vunpack.c.h.b16 %v81
    %v1190 = vunpack.c.l.b16 %v82
    %v1191 = vunpack.c.h.b16 %v82
    %v1192 = vunpack.c.l.b16 %v83
    %v1193 = vunpack.c.h.b16 %v83
    %v1194 = vunpack.c.l.b16 %v84
    %v1195 = vunpack.c.h.b16 %v84
    %v1196 = vunpack.c.l.b16 %v85
    %v1197 = vunpack.c.h.b16 %v85
    %v1198 = vunpack.c.l.b16 %v86
    %v1199 = vunpack.c.h.b16 %v86
    %v1200 = vunpack.c.l.b16 %v87
    %v1201 = vunpack.c.h.b16 %v87
    %v1202 = vunpack.c.l.b16 %v88
    %v1203 = vunpack.c.h.b16 %v88
    %v1204 = vunpack.c.l.b16 %v89
    %v1205 = vunpack.c.h.b16 %v89
    %v1206 = vunpack.c.l.b16 %v90
    %v1207 = vunpack.c.h.b16 %v90
    %v1208 = vunpack.c.l.b16 %v91
    %v1209 = vunpack.c.h.b16 %v91
    %v1210 = vunpack.c.l.b16 %v92
    %v1211 = vunpack.c.h.b16 %v92
    %v1212 = vunpack.c.l.b16 %v93
    %v1213 = vunpack.c.h.b16 %v93
    %v1214 = vunpack.c.l.b16 %v94
    %v1215 = vunpack.c.h.b16 %v94
    %v1216 = vunpack.c.l.b16 %v95
    %v1217 = vunpack.c.h.b16 %v95
    %v1218 = vunpack.c.l.b16 %v96
    %v1219 = vunpack.c.h.b16 %v96
    %v1220 = vunpack.c.l.b16 %v97
    %v1221 = vunpack.c.h.b16 %v97
    %v1222 = vunpack.c.l.b16 %v98
    %v1223 = vunpack.c.h.b16 %v98
    %v1224 = vunpack.c.l.b16 %v99
    %v1225 = vunpack.c.h.b16 %v99
    %v1226 = vunpack.c.l.b16 %v100
    %v1227 = vunpack.c.h.b16 %v100
    %v1228 = vunpack.c.l.b16 %v101
    %v1229 = vunpack.c.h.b16 %v101
    %v1230 = vunpack.c.l.b16 %v102
    %v1231 = vunpack.c.h.b16 %v102
    %v1232 = vunpack.c.l.b16 %v103
    %v1233 = vunpack.c.h.b16 %v103
    %v1234 = vunpack.c.l.b16 %v104
    %v1235 = vunpack.c.h.b16 %v104
    %v1236 = vunpack.c.l.b16 %v105
    %v1237 = vunpack.c.h.b16 %v105
    %v1238 = vunpack.c.l.b16 %v106
    %v1239 = vunpack.c.h.b16 %v106
    %v1240 = vunpack.c.l.b16 %v107
    %v1241 = vunpack.c.h.b16 %v107
    %v1242 = vunpack.c.l.b16 %v108
    %v1243 = vunpack.c.h.b16 %v108
    %v1244 = vunpack.c.l.b16 %v109
    %v1245 = vunpack.c.h.b16 %v109
    %v1246 = vunpack.c.l.b16 %v110
    %v1247 = vunpack.c.h.b16 %v110
    %v1248 = vunpack.c.l.b16 %v111
    %v1249 = vunpack.c.h.b16 %v111
    %v1250 = vunpack.c.l.b16 %v112
    %v1251 = vunpack.c.h.b16 %v112
    %v1252 = vunpack.c.l.b16 %v113
    %v1253 = vunpack.c.h.b16 %v113
    %v1254 = vunpack.c.l.b16 %v114
    %v1255 = vunpack.c.h.b16 %v114
    %v1256 = vunpack.c.l.b16 %v115
    %v1257 = vunpack.c.h.b16 %v115
    %v1258 = vunpack.c.l.b16 %v116
    %v1259 = vunpack.c.h.b16 %v116
    %v1260 = vunpack.c.l.b16 %v117
    %v1261 = vunpack.c.h.b16 %v117
    %v1262 = vunpack.c.l.b16 %v118
    %v1263 = vunpack.c.h.b16 %v118
    %v1264 = vunpack.c.l.b16 %v119
    %v1265 = vunpack.c.h.b16 %v119
    %v1266 = vunpack.c.l.b16 %v120
    %v1267 = vunpack.c.h.b16 %v120
    %v1268 = vunpack.c.l.b16 %v121
    %v1269 = vunpack.c.h.b16 %v121
    %v1270 = vunpack.c.l.b16 %v122
    %v1271 = vunpack.c.h.b16 %v122
    %v1272 = vunpack.c.l.b16 %v123
    %v1273 = vunpack.c.h.b16 %v123
    %v1274 = vunpack.c.l.b16 %v124
    %v1275 = vunpack.c.h.b16 %v124
    %v1276 = vunpack.c.l.b16 %v125
    %v1277 = vunpack.c.h.b16 %v125
    %v1278 = vunpack.c.l.b16 %v126
    %v1279 = vunpack.c.h.b16 %v126
    %v1280 = vunpack.c.l.b16 %v127
    %v1281 = vunpack.c.h.b16 %v127
    %v1282 = vunpack.c.l.b16 %v128
    %v1283 = vunpack.c.h.b16 %v128
    %v1284 = vunpack.c.l.b16 %v129
    %v1285 = vunpack.c.h.b16 %v129
    %v1286 = vunpack.c.l.b16 %v130
    %v1287 = vunpack.c.h.b16 %v130
    %v1288 = vunpack.c.l.b16 %v131
    %v1289 = vunpack.c.h.b16 %v131
    %v1290 = vunpack.c.l.b16 %v132
    %v1291 = vunpack.c.h.b16 %v132
    %v1292 = vunpack.c.l.b16 %v133
    %v1293 = vunpack.c.h.b16 %v133
    %v1294 = vunpack.c.l.b16 %v134
    %v1295 = vunpack.c.h.b16 %v134
    %v1296 = vunpack.c.l.b16 %v135
    %v1297 = vunpack.c.h.b16 %v135
    %v1298 = vunpack.c.l.b16 %v136
    %v1299 = vunpack.c.h.b16 %v136
    %v1300 = vunpack.c.l.b16 %v137
    %v1301 = vunpack.c.h.b16 %v137
    %v1302 = vunpack.c.l.b16 %v138
    %v1303 = vunpack.c.h.b16 %v138
    %v1304 = vunpack.c.l.b16 %v139
    %v1305 = vunpack.c.h.b16 %v139
    %v1306 = vunpack.c.l.b16 %v140
    %v1307 = vunpack.c.h.b16 %v140
    %v1308 = vunpack.c.l.b16 %v141
    %v1309 = vunpack.c.h.b16 %v141
    %v1310 = vunpack.c.l.b16 %v142
    %v1311 = vunpack.c.h.b16 %v142
    %v1312 = vunpack.c.l.b16 %v143
    %v1313 = vunpack.c.h.b16 %v143
    %v1314 = vunpack.c.l.b16 %v144
    %v1315 = vunpack.c.h.b16 %v144
    %v1316 = vunpack.c.l.b16 %v145
    %v1317 = vunpack.c.h.b16 %v145
    %v1318 = vunpack.c.l.b16 %v146
    %v1319 = vunpack.c.h.b16 %v146
    %v1320 = vunpack.c.l.b16 %v147
    %v1321 = vunpack.c.h.b16 %v147
    %v1322 = vunpack.c.l.b16 %v148
    %v1323 = vunpack.c.h.b16 %v148
    %v1324 = vunpack.c.l.b16 %v149
    %v1325 = vunpack.c.h.b16 %v149
    %v1326 = vunpack.c.l.b16 %v150
    %v1327 = vunpack.c.h.b16 %v150
    %v1328 = vunpack.c.l.b16 %v151
    %v1329 = vunpack.c.h.b16 %v151
    %v1330 = vunpack.c.l.b16 %v152
    %v1331 = vunpack.c.h.b16 %v152
    %v1332 = vunpack.c.l.b16 %v153
    %v1333 = vunpack.c.h.b16 %v153
    %v1334 = vunpack.c.l.b16 %v154
    %v1335 = vunpack.c.h.b16 %v154
    %v1336 = vunpack.c.l.b16 %v155
    %v1337 = vunpack.c.h.b16 %v155
    %v1338 = vunpack.c.l.b16 %v156
    %v1339 = vunpack.c.h.b16 %v156
    %v1340 = vunpack.c.l.b16 %v157
    %v1341 = vunpack.c.h.b16 %v157
    %v1342 = vunpack.c.l.b16 %v158
    %v1343 = vunpack.c.h.b16 %v158
    %v1344 = vunpack.c.l.b16 %v159
    %v1345 = vunpack.c.h.b16 %v159
    %v1346 = vunpack.c.l.b16 %v160
    %v1347 = vunpack.c.h.b16 %v160
    %v1348 = vunpack.c.l.b16 %v161
    %v1349 = vunpack.c.h.b16 %v161
    %v1350 = vunpack.c.l.b16 %v162
    %v1351 = vunpack.c.h.b16 %v162
    %v1352 = vunpack.c.l.b16 %v163
    %v1353 = vunpack.c.h.b16 %v163
    %v1354 = vunpack.c.l.b16 %v164
    %v1355 = vunpack.c.h.b16 %v164
    %v1356 = vunpack.c.l.b16 %v165
    %v1357 = vunpack.c.h.b16 %v165
    %v1358 = vunpack.c.l.b16 %v166
    %v1359 = vunpack.c.h.b16 %v166
    %v1360 = vunpack.c.l.b16 %v167
    %v1361 = vunpack.c.h.b16 %v167
    %v1362 = vunpack.c.l.b16 %v168
    %v1363 = vunpack.c.h.b16 %v168
    %v1364 = vunpack.c.l.b16 %v169
    %v1365 = vunpack.c.h.b16 %v169
    %v1366 = vunpack.c.l.b16 %v170
    %v1367 = vunpack.c.h.b16 %v170
    %v1368 = vunpack.c.l.b16 %v171
    %v1369 = vunpack.c.h.b16 %v171
    %v1370 = vunpack.c.l.b16 %v172
    %v1371 = vunpack.c.h.b16 %v172
    %v1372 = vunpack.c.l.b16 %v173
    %v1373 = vunpack.c.h.b16 %v173
    %v1374 = vunpack.c.l.b16 %v174
    %v1375 = vunpack.c.h.b16 %v174
    %v1376 = vunpack.c.l.b16 %v175
    %v1377 = vunpack.c.h.b16 %v175
    %v1378 = vunpack.c.l.b16 %v176
    %v1379 = vunpack.c.h.b16 %v176
    %v1380 = vunpack.c.l.b16 %v177
    %v1381 = vunpack.c.h.b16 %v177
    %v1382 = vunpack.c.l.b16 %v178
    %v1383 = vunpack.c.h.b16 %v178
    %v1384 = vunpack.c.l.b16 %v179
    %v1385 = vunpack.c.h.b16 %v179
    %v1386 = vunpack.c.l.b16 %v180
    %v1387 = vunpack.c.h.b16 %v180
    %v1388 = vunpack.c.l.b16 %v181
    %v1389 = vunpack.c.h.b16 %v181
    %v1390 = vunpack.c.l.b16 %v182
    %v1391 = vunpack.c.h.b16 %v182
    %v1392 = vunpack.c.l.b16 %v183
    %v1393 = vunpack.c.h.b16 %v183
    %v1394 = vunpack.c.l.b16 %v184
    %v1395 = vunpack.c.h.b16 %v184
    %v1396 = vunpack.c.l.b16 %v185
    %v1397 = vunpack.c.h.b16 %v185
    %v1398 = vunpack.c.l.b16 %v186
    %v1399 = vunpack.c.h.b16 %v186
    %v1400 = vunpack.c.l.b16 %v187
    %v1401 = vunpack.c.h.b16 %v187
    %v1402 = vunpack.c.l.b16 %v188
    %v1403 = vunpack.c.h.b16 %v188
    %v1404 = vunpack.c.l.b16 %v189
    %v1405 = vunpack.c.h.b16 %v189
    %v1406 = vunpack.c.l.b16 %v190
    %v1407 = vunpack.c.h.b16 %v190
    %v1408 = vunpack.c.l.b16 %v191
    %v1409 = vunpack.c.h.b16 %v191
    %v1410 = vunpack.c.l.b16 %v192
    %v1411 = vunpack.c.h.b16 %v192
    %v1412 = vunpack.c.l.b16 %v193
    %v1413 = vunpack.c.h.b16 %v193
    %v1414 = vunpack.c.l.b16 %v194
    %v1415 = vunpack.c.h.b16 %v194
    %v1416 = vunpack.c.l.b16 %v195
    %v1417 = vunpack.c.h.b16 %v195
    %v1418 = vunpack.c.l.b16 %v196
    %v1419 = vunpack.c.h.b16 %v196
    %v1420 = vunpack.c.l.b16 %v197
    %v1421 = vunpack.c.h.b16 %v197
    %v1422 = vunpack.c.l.b16 %v198
    %v1423 = vunpack.c.h.b16 %v198
    %v1424 = vunpack.c.l.b16 %v199
    %v1425 = vunpack.c.h.b16 %v199
    %v1426 = vunpack.c.l.b16 %v200
    %v1427 = vunpack.c.h.b16 %v200
    %v1428 = vunpack.c.l.b16 %v201
    %v1429 = vunpack.c.h.b16 %v201
    %v1430 = vunpack.c.l.b16 %v202
    %v1431 = vunpack.c.h.b16 %v202
    %v1432 = vunpack.c.l.b16 %v203
    %v1433 = vunpack.c.h.b16 %v203
    %v1434 = vunpack.c.l.b16 %v204
    %v1435 = vunpack.c.h.b16 %v204
    %v1436 = vunpack.c.l.b16 %v205
    %v1437 = vunpack.c.h.b16 %v205
    %v1438 = vunpack.c.l.b16 %v206
    %v1439 = vunpack.c.h.b16 %v206
    %v1440 = vunpack.c.l.b16 %v207
    %v1441 = vunpack.c.h.b16 %v207
    %v1442 = vunpack.c.l.b16 %v208
    %v1443 = vunpack.c.h.b16 %v208
    %v1444 = vunpack.c.l.b16 %v209
    %v1445 = vunpack.c.h.b16 %v209
    %v1446 = vunpack.c.l.b16 %v210
    %v1447 = vunpack.c.h.b16 %v210
    %v1448 = vunpack.c.l.b16 %v211
    %v1449 = vunpack.c.h.b16 %v211
    %v1450 = vunpack.c.l.b16 %v212
    %v1451 = vunpack.c.h.b16 %v212
    %v1452 = vunpack.c.l.b16 %v213
    %v1453 = vunpack.c.h.b16 %v213
    %v1454 = vunpack.c.l.b16 %v214
    %v1455 = vunpack.c.h.b16 %v214
    %v1456 = vunpack.c.l.b16 %v215
    %v1457 = vunpack.c.h.b16 %v215
    %v1458 = vunpack.c.l.b16 %v216
    %v1459 = vunpack.c.h.b16 %v216
    %v1460 = vunpack.c.l.b16 %v217
    %v1461 = vunpack.c.h.b16 %v217
    %v1462 = vunpack.c.l.b16 %v218
    %v1463 = vunpack.c.h.b16 %v218
    %v1464 = vunpack.c.l.b16 %v219
    %v1465 = vunpack.c.h.b16 %v219
    %v1466 = vunpack.c.l.b16 %v220
    %v1467 = vunpack.c.h.b16 %v220
    %v1468 = vunpack.c.l.b16 %v221
    %v1469 = vunpack.c.h.b16 %v221
    %v1470 = vunpack.c.l.b16 %v222
    %v1471 = vunpack.c.h.b16 %v222
    %v1472 = vunpack.c.l.b16 %v223
    %v1473 = vunpack.c.h.b16 %v223
    %v1474 = vunpack.c.l.b16 %v224
    %v1475 = vunpack.c.h.b16 %v224
    %v1476 = vunpack.c.l.b16 %v225
    %v1477 = vunpack.c.h.b16 %v225
    %v1478 = vunpack.c.l.b16 %v226
    %v1479 = vunpack.c.h.b16 %v226
    %v1480 = vunpack.c.l.b16 %v227
    %v1481 = vunpack.c.h.b16 %v227
    %v1482 = vunpack.c.l.b16 %v228
    %v1483 = vunpack.c.h.b16 %v228
    %v1484 = vunpack.c.l.b16 %v229
    %v1485 = vunpack.c.h.b16 %v229
    %v1486 = vunpack.c.l.b16 %v230
    %v1487 = vunpack.c.h.b16 %v230
    %v1488 = vunpack.c.l.b16 %v231
    %v1489 = vunpack.c.h.b16 %v231
    %v1490 = vunpack.c.l.b16 %v232
    %v1491 = vunpack.c.h.b16 %v232
    %v1492 = vunpack.c.l.b16 %v233
    %v1493 = vunpack.c.h.b16 %v233
    %v1494 = vunpack.c.l.b16 %v234
    %v1495 = vunpack.c.h.b16 %v234
    %v1496 = vunpack.c.l.b16 %v235
    %v1497 = vunpack.c.h.b16 %v235
    %v1498 = vunpack.c.l.b16 %v236
    %v1499 = vunpack.c.h.b16 %v236
    %v1500 = vunpack.c.l.b16 %v237
    %v1501 = vunpack.c.h.b16 %v237
    %v1502 = vunpack.c.l.b16 %v238
    %v1503 = vunpack.c.h.b16 %v238
    %v1504 = vunpack.c.l.b16 %v239
    %v1505 = vunpack.c.h.b16 %v239
    %v1506 = vunpack.c.l.b16 %v240
    %v1507 = vunpack.c.h.b16 %v240
    %v1508 = vunpack.c.l.b16 %v241
    %v1509 = vunpack.c.h.b16 %v241
    %v1510 = vunpack.c.l.b16 %v242
    %v1511 = vunpack.c.h.b16 %v242
    %v1512 = vunpack.c.l.b16 %v243
    %v1513 = vunpack.c.h.b16 %v243
    %v1514 = vunpack.c.l.b16 %v244
    %v1515 = vunpack.c.h.b16 %v244
    %v1516 = vunpack.c.l.b16 %v245
    %v1517 = vunpack.c.h.b16 %v245
    %v1518 = vunpack.c.l.b16 %v246
    %v1519 = vunpack.c.h.b16 %v246
    %v1520 = vunpack.c.l.b16 %v247
    %v1521 = vunpack.c.h.b16 %v247
    %v1522 = vunpack.c.l.b16 %v248
    %v1523 = vunpack.c.h.b16 %v248
    %v1524 = vunpack.c.l.b16 %v249
    %v1525 = vunpack.c.h.b16 %v249
    %v1526 = vunpack.c.l.b16 %v250
    %v1527 = vunpack.c.h.b16 %v250
    %v1528 = vunpack.c.l.b16 %v251
    %v1529 = vunpack.c.h.b16 %v251
    %v1530 = vunpack.c.l.b16 %v252
    %v1531 = vunpack.c.h.b16 %v252
    %v1532 = vunpack.c.l.b16 %v253
    %v1533 = vunpack.c.h.b16 %v253
    %v1534 = vunpack.c.l.b16 %v254
    %v1535 = vunpack.c.h.b16 %v254
    %v1536 = vunpack.c.l.b16 %v255
    %v1537 = vunpack.c.h.b16 %v255
    %v1538 = vunpack.c.l.b16 %v256
    %v1539 = vunpack.c.h.b16 %v256
    %v1540 = vunpack.c.l.b16 %v257
    %v1541 = vunpack.c.h.b16 %v257
    %v1542 = vunpack.c.l.b16 %v258
    %v1543 = vunpack.c.h.b16 %v258
    %v1544 = vunpack.c.l.b16 %v259
    %v1545 = vunpack.c.h.b16 %v259
    %v1546 = vunpack.c.l.b16 %v260
    %v1547 = vunpack.c.h.b16 %v260
    %v1548 = vunpack.c.l.b16 %v261
    %v1549 = vunpack.c.h.b16 %v261
    %v1550 = vunpack.c.l.b16 %v262
    %v1551 = vunpack.c.h.b16 %v262
    %v1552 = vunpack.c.l.b16 %v263
    %v1553 = vunpack.c.h.b16 %v263
    %v1554 = vunpack.c.l.b16 %v264
    %v1555 = vunpack.c.h.b16 %v264
    %v1556 = vunpack.c.l.b16 %v265
    %v1557 = vunpack.c.h.b16 %v265
    %v1558 = vunpack.c.l.b16 %v266
    %v1559 = vunpack.c.h.b16 %v266
    %v1560 = vunpack.c.l.b16 %v267
    %v1561 = vunpack.c.h.b16 %v267
    %v1562 = vunpack.c.l.b16 %v268
    %v1563 = vunpack.c.h.b16 %v268
    %v1564 = vunpack.c.l.b16 %v269
    %v1565 = vunpack.c.h.b16 %v269
    %v1566 = vunpack.c.l.b16 %v270
    %v1567 = vunpack.c.h.b16 %v270
    %v1568 = vunpack.c.l.b16 %v271
    %v1569 = vunpack.c.h.b16 %v271
    %v1570 = vunpack.c.l.b16 %v272
    %v1571 = vunpack.c.h.b16 %v272
    %v1572 = vunpack.c.l.b16 %v273
    %v1573 = vunpack.c.h.b16 %v273
    %v1574 = vunpack.c.l.b16 %v274
    %v1575 = vunpack.c.h.b16 %v274
    %v1576 = vunpack.c.l.b16 %v275
    %v1577 = vunpack.c.h.b16 %v275
    %v1578 = vunpack.c.l.b16 %v276
    %v1579 = vunpack.c.h.b16 %v276
    %v1580 = vunpack.c.l.b16 %v277
    %v1581 = vunpack.c.h.b16 %v277
    %v1582 = vunpack.c.l.b16 %v278
    %v1583 = vunpack.c.h.b16 %v278
    %v1584 = vunpack.c.l.b16 %v279
    %v1585 = vunpack.c.h.b16 %v279
    %v1586 = vunpack.c.l.b16 %v280
    %v1587 = vunpack.c.h.b16 %v280
    %v1588 = vunpack.c.l.b16 %v281
    %v1589 = vunpack.c.h.b16 %v281
    %v1590 = vunpack.c.l.b16 %v282
    %v1591 = vunpack.c.h.b16 %v282
    %v1592 = vunpack.c.l.b16 %v283
    %v1593 = vunpack.c.h.b16 %v283
    %v1594 = vunpack.c.l.b16 %v284
    %v1595 = vunpack.c.h.b16 %v284
    %v1596 = vunpack.c.l.b16 %v285
    %v1597 = vunpack.c.h.b16 %v285
    %v1598 = vunpack.c.l.b16 %v286
    %v1599 = vunpack.c.h.b16 %v286
    %v1600 = vunpack.c.l.b16 %v287
    %v1601 = vunpack.c.h.b16 %v287
    %v1602 = vunpack.c.l.b16 %v288
    %v1603 = vunpack.c.h.b16 %v288
    %v1604 = vunpack.c.l.b16 %v289
    %v1605 = vunpack.c.h.b16 %v289
    %v1606 = vunpack.c.l.b16 %v290
    %v1607 = vunpack.c.h.b16 %v290
    %v1608 = vunpack.c.l.b16 %v291
    %v1609 = vunpack.c.h.b16 %v291
    %v1610 = vunpack.c.l.b16 %v292
    %v1611 = vunpack.c.h.b16 %v292
    %v1612 = vunpack.c.l.b16 %v293
    %v1613 = vunpack.c.h.b16 %v293
    %v1614 = vunpack.c.l.b16 %v294
    %v1615 = vunpack.c.h.b16 %v294
    %v1616 = vunpack.c.l.b16 %v295
    %v1617 = vunpack.c.h.b16 %v295
    %v1618 = vunpack.c.l.b16 %v296
    %v1619 = vunpack.c.h.b16 %v296
    %v1620 = vunpack.c.l.b16 %v297
    %v1621 = vunpack.c.h.b16 %v297
    %v1622 = vunpack.c.l.b16 %v298
    %v1623 = vunpack.c.h.b16 %v298
    %v1624 = vunpack.c.l.b16 %v299
    %v1625 = vunpack.c.h.b16 %v299
    %v1626 = vunpack.c.l.b16 %v300
    %v1627 = vunpack.c.h.b16 %v300
    %v1628 = vunpack.c.l.b16 %v301
    %v1629 = vunpack.c.h.b16 %v301
    %v1630 = vunpack.c.l.b16 %v302
    %v1631 = vunpack.c.h.b16 %v302
    %v1632 = vunpack.c.l.b16 %v303
    %v1633 = vunpack.c.h.b16 %v303
    %v1634 = vunpack.c.l.b16 %v304
    %v1635 = vunpack.c.h.b16 %v304
    %v1636 = vunpack.c.l.b16 %v305
    %v1637 = vunpack.c.h.b16 %v305
    %v1638 = vunpack.c.l.b16 %v306
    %v1639 = vunpack.c.h.b16 %v306
    %v1640 = vunpack.c.l.b16 %v307
    %v1641 = vunpack.c.h.b16 %v307
    %v1642 = vunpack.c.l.b16 %v308
    %v1643 = vunpack.c.h.b16 %v308
    %v1644 = vunpack.c.l.b16 %v309
    %v1645 = vunpack.c.h.b16 %v309
    %v1646 = vunpack.c.l.b16 %v310
    %v1647 = vunpack.c.h.b16 %v310
    %v1648 = vunpack.c.l.b16 %v311
    %v1649 = vunpack.c.h.b16 %v311
    %v1650 = vunpack.c.l.b16 %v312
    %v1651 = vunpack.c.h.b16 %v312
    %v1652 = vunpack.c.l.b16 %v313
    %v1653 = vunpack.c.h.b16 %v313
    %v1654 = vunpack.c.l.b16 %v314
    %v1655 = vunpack.c.h.b16 %v314
    %v1656 = vunpack.c.l.b16 %v315
    %v1657 = vunpack.c.h.b16 %v315
    %v1658 = vunpack.c.l.b16 %v316
    %v1659 = vunpack.c.h.b16 %v316
    %v1660 = vunpack.c.l.b16 %v317
    %v1661 = vunpack.c.h.b16 %v317
    %v1662 = vunpack.c.l.b16 %v318
    %v1663 = vunpack.c.h.b16 %v318
    %v1664 = vunpack.c.l.b16 %v319
    %v1665 = vunpack.c.h.b16 %v319
    %v1666 = vunpack.c.l.b16 %v320
    %v1667 = vunpack.c.h.b16 %v320
    %v1668 = vunpack.c.l.b16 %v321
    %v1669 = vunpack.c.h.b16 %v321
    %v1670 = vunpack.c.l.b16 %v322
    %v1671 = vunpack.c.h.b16 %v322
    %v1672 = vunpack.c.l.b16 %v323
    %v1673 = vunpack.c.h.b16 %v323
    %v1674 = vunpack.c.l.b16 %v324
    %v1675 = vunpack.c.h.b16 %v324
    %v1676 = vunpack.c.l.b16 %v325
    %v1677 = vunpack.c.h.b16 %v325
    %v1678 = vunpack.c.l.b16 %v326
    %v1679 = vunpack.c.h.b16 %v326
    %v1680 = vunpack.c.l.b16 %v327
    %v1681 = vunpack.c.h.b16 %v327
    %v1682 = vunpack.c.l.b16 %v328
    %v1683 = vunpack.c.h.b16 %v328
    %v1684 = vunpack.c.l.b16 %v329
    %v1685 = vunpack.c.h.b16 %v329
    %v1686 = vunpack.c.l.b16 %v330
    %v1687 = vunpack.c.h.b16 %v330
    %v1688 = vunpack.c.l.b16 %v331
    %v1689 = vunpack.c.h.b16 %v331
    %v1690 = vunpack.c.l.b16 %v332
    %v1691 = vunpack.c.h.b16 %v332
    %v1692 = vunpack.c.l.b16 %v333
    %v1693 = vunpack.c.h.b16 %v333
    %v1694 = vunpack.c.l.b16 %v334
    %v1695 = vunpack.c.h.b16 %v334
    %v1696 = vunpack.c.l.b16 %v335
    %v1697 = vunpack.c.h.b16 %v335
    %v1698 = vunpack.c.l.b16 %v336
    %v1699 = vunpack.c.h.b16 %v336
    %v1700 = vunpack.c.l.b16 %v337
    %v1701 = vunpack.c.h.b16 %v337
    %v1702 = vunpack.c.l.b16 %v338
    %v1703 = vunpack.c.h.b16 %v338
    %v1704 = vunpack.c.l.b16 %v339
    %v1705 = vunpack.c.h.b16 %v339
    %v1706 = vunpack.c.l.b16 %v340
    %v1707 = vunpack.c.h.b16 %v340
    %v1708 = vunpack.c.l.b16 %v341
    %v1709 = vunpack.c.h.b16 %v341
    %v1710 = vunpack.c.l.b16 %v342
    %v1711 = vunpack.c.h.b16 %v342
    %v1712 = vunpack.c.l.b16 %v343
    %v1713 = vunpack.c.h.b16 %v343
    %v1714 = vunpack.c.l.b16 %v344
    %v1715 = vunpack.c.h.b16 %v344
    %v1716 = vunpack.c.l.b16 %v345
    %v1717 = vunpack.c.h.b16 %v345
    %v1718 = vunpack.c.l.b16 %v346
    %v1719 = vunpack.c.h.b16 %v346
    %v1720 = vunpack.c.l.b16 %v347
    %v1721 = vunpack.c.h.b16 %v347
    %v1722 = vunpack.c.l.b16 %v348
    %v1723 = vunpack.c.h.b16 %v348
    %v1724 = vunpack.c.l.b16 %v349
    %v1725 = vunpack.c.h.b16 %v349
    %v1726 = vunpack.c.l.b16 %v350
    %v1727 = vunpack.c.h.b16 %v350
    %v1728 = vunpack.c.l.b16 %v351
    %v1729 = vunpack.c.h.b16 %v351
    %v1730 = vunpack.c.l.b16 %v352
    %v1731 = vunpack.c.h.b16 %v352
    %v1732 = vunpack.c.l.b16 %v353
    %v1733 = vunpack.c.h.b16 %v353
    %v1734 = vunpack.c.l.b16 %v354
    %v1735 = vunpack.c.h.b16 %v354
    %v1736 = vunpack.c.l.b16 %v355
    %v1737 = vunpack.c.h.b16 %v355
    %v1738 = vunpack.c.l.b16 %v356
    %v1739 = vunpack.c.h.b16 %v356
    %v1740 = vunpack.c.l.b16 %v357
    %v1741 = vunpack.c.h.b16 %v357
    %v1742 = vunpack.c.l.b16 %v358
    %v1743 = vunpack.c.h.b16 %v358
    %v1744 = vunpack.c.l.b16 %v359
    %v1745 = vunpack.c.h.b16 %v359
    %v1746 = vunpack.c.l.b16 %v360
    %v1747 = vunpack.c.h.b16 %v360
    %v1748 = vunpack.c.l.b16 %v361
    %v1749 = vunpack.c.h.b16 %v361
    %v1750 = vunpack.c.l.b16 %v362
    %v1751 = vunpack.c.h.b16 %v362
    %v1752 = vunpack.c.l.b16 %v363
    %v1753 = vunpack.c.h.b16 %v363
    %v1754 = vunpack.c.l.b16 %v364
    %v1755 = vunpack.c.h.b16 %v364
    %v1756 = vunpack.c.l.b16 %v365
    %v1757 = vunpack.c.h.b16 %v365
    %v1758 = vunpack.c.l.b16 %v366
    %v1759 = vunpack.c.h.b16 %v366
    %v1760 = vunpack.c.l.b16 %v367
    %v1761 = vunpack.c.h.b16 %v367
    %v1762 = vunpack.c.l.b16 %v368
    %v1763 = vunpack.c.h.b16 %v368
    %v1764 = vunpack.c.l.b16 %v369
    %v1765 = vunpack.c.h.b16 %v369
    %v1766 = vunpack.c.l.b16 %v370
    %v1767 = vunpack.c.h.b16 %v370
    %v1768 = vunpack.c.l.b16 %v371
    %v1769 = vunpack.c.h.b16 %v371
    %v1770 = vunpack.c.l.b16 %v372
    %v1771 = vunpack.c.h.b16 %v372
    %v1772 = vunpack.c.l.b16 %v373
    %v1773 = vunpack.c.h.b16 %v373
    %v1774 = vunpack.c.l.b16 %v374
    %v1775 = vunpack.c.h.b16 %v374
    %v1776 = vunpack.c.l.b16 %v375
    %v1777 = vunpack.c.h.b16 %v375
    %v1778 = vunpack.c.l.b16 %v376
    %v1779 = vunpack.c.h.b16 %v376
    %v1780 = vunpack.c.l.b16 %v377
    %v1781 = vunpack.c.h.b16 %v377
    %v1782 = vunpack.c.l.b16 %v378
    %v1783 = vunpack.c.h.b16 %v378
    %v1784 = vunpack.c.l.b16 %v379
    %v1785 = vunpack.c.h.b16 %v379
    %v1786 = vunpack.c.l.b16 %v380
    %v1787 = vunpack.c.h.b16 %v380
    %v1788 = vunpack.c.l.b16 %v381
    %v1789 = vunpack.c.h.b16 %v381
    %v1790 = vunpack.c.l.b16 %v382
    %v1791 = vunpack.c.h.b16 %v382
    %v1792 = vunpack.c.l.b16 %v383
    %v1793 = vunpack.c.h.b16 %v383
    %v1794 = vunpack.c.l.b16 %v384
    %v1795 = vunpack.c.h.b16 %v384
    %v1796 = vunpack.c.l.b16 %v385
    %v1797 = vunpack.c.h.b16 %v385
    %v1798 = vunpack.c.l.b16 %v386
    %v1799 = vunpack.c.h.b16 %v386
    %v1800 = vunpack.c.l.b16 %v387
    %v1801 = vunpack.c.h.b16 %v387
    %v1802 = vunpack.c.l.b16 %v388
    %v1803 = vunpack.c.h.b16 %v388
    %v1804 = vunpack.c.l.b16 %v389
    %v1805 = vunpack.c.h.b16 %v389
    %v1806 = vunpack.c.l.b16 %v390
    %v1807 = vunpack.c.h.b16 %v390
    %v1808 = vunpack.c.l.b16 %v391
    %v1809 = vunpack.c.h.b16 %v391
    %v1810 = vunpack.c.l.b16 %v392
    %v1811 = vunpack.c.h.b16 %v392
    %v1812 = vunpack.c.l.b16 %v393
    %v1813 = vunpack.c.h.b16 %v393
    %v1814 = vunpack.c.l.b16 %v394
    %v1815 = vunpack.c.h.b16 %v394
    %v1816 = vunpack.c.l.b16 %v395
    %v1817 = vunpack.c.h.b16 %v395
    %v1818 = vunpack.c.l.b16 %v396
    %v1819 = vunpack.c.h.b16 %v396
    %v1820 = vunpack.c.l.b16 %v397
    %v1821 = vunpack.c.h.b16 %v397
    %v1822 = vunpack.c.l.b16 %v398
    %v1823 = vunpack.c.h.b16 %v398
    %v1824 = vunpack.c.l.b16 %v399
    %v1825 = vunpack.c.h.b16 %v399
    %v1826 = vunpack.c.l.b16 %v400
    %v1827 = vunpack.c.h.b16 %v400
    %v1828 = vunpack.c.l.b16 %v401
    %v1829 = vunpack.c.h.b16 %v401
    %v1830 = vunpack.c.l.b16 %v402
    %v1831 = vunpack.c.h.b16 %v402
    %v1832 = vunpack.c.l.b16 %v403
    %v1833 = vunpack.c.h.b16 %v403
    %v1834 = vunpack.c.l.b16 %v404
    %v1835 = vunpack.c.h.b16 %v404
    %v1836 = vunpack.c.l.b16 %v405
    %v1837 = vunpack.c.h.b16 %v405
    %v1838 = vunpack.c.l.b16 %v406
    %v1839 = vunpack.c.h.b16 %v406
    %v1840 = vunpack.c.l.b16 %v407
    %v1841 = vunpack.c.h.b16 %v407
    %v1842 = vunpack.c.l.b16 %v408
    %v1843 = vunpack.c.h.b16 %v408
    %v1844 = vunpack.c.l.b16 %v409
    %v1845 = vunpack.c.h.b16 %v409
    %v1846 = vunpack.c.l.b16 %v410
    %v1847 = vunpack.c.h.b16 %v410
    %v1848 = vunpack.c.l.b16 %v411
    %v1849 = vunpack.c.h.b16 %v411
    %v1850 = vunpack.c.l.b16 %v412
    %v1851 = vunpack.c.h.b16 %v412
    %v1852 = vunpack.c.l.b16 %v413
    %v1853 = vunpack.c.h.b16 %v413
    %v1854 = vunpack.c.l.b16 %v414
    %v1855 = vunpack.c.h.b16 %v414
    %v1856 = vunpack.c.l.b16 %v415
    %v1857 = vunpack.c.h.b16 %v415
    %v1858 = vunpack.c.l.b16 %v416
    %v1859 = vunpack.c.h.b16 %v416
    %v1860 = vunpack.c.l.b16 %v417
    %v1861 = vunpack.c.h.b16 %v417
    %v1862 = vunpack.c.l.b16 %v418
    %v1863 = vunpack.c.h.b16 %v418
    %v1864 = vunpack.c.l.b16 %v419
    %v1865 = vunpack.c.h.b16 %v419
    %v1866 = vunpack.c.l.b16 %v420
    %v1867 = vunpack.c.h.b16 %v420
    %v1868 = vunpack.c.l.b16 %v421
    %v1869 = vunpack.c.h.b16 %v421
    %v1870 = vunpack.c.l.b16 %v422
    %v1871 = vunpack.c.h.b16 %v422
    %v1872 = vunpack.c.l.b16 %v423
    %v1873 = vunpack.c.h.b16 %v423
    %v1874 = vunpack.c.l.b16 %v424
    %v1875 = vunpack.c.h.b16 %v424
    %v1876 = vunpack.c.l.b16 %v425
    %v1877 = vunpack.c.h.b16 %v425
    %v1878 = vunpack.c.l.b16 %v426
    %v1879 = vunpack.c.h.b16 %v426
    %v1880 = vunpack.c.l.b16 %v427
    %v1881 = vunpack.c.h.b16 %v427
    %v1882 = vunpack.c.l.b16 %v428
    %v1883 = vunpack.c.h.b16 %v428
    %v1884 = vunpack.c.l.b16 %v429
    %v1885 = vunpack.c.h.b16 %v429
    %v1886 = vunpack.c.l.b16 %v430
    %v1887 = vunpack.c.h.b16 %v430
    %v1888 = vunpack.c.l.b16 %v431
    %v1889 = vunpack.c.h.b16 %v431
    %v1890 = vunpack.c.l.b16 %v432
    %v1891 = vunpack.c.h.b16 %v432
    %v1892 = vunpack.c.l.b16 %v433
    %v1893 = vunpack.c.h.b16 %v433
    %v1894 = vunpack.c.l.b16 %v434
    %v1895 = vunpack.c.h.b16 %v434
    %v1896 = vunpack.c.l.b16 %v435
    %v1897 = vunpack.c.h.b16 %v435
    %v1898 = vunpack.c.l.b16 %v436
    %v1899 = vunpack.c.h.b16 %v436
    %v1900 = vunpack.c.l.b16 %v437
    %v1901 = vunpack.c.h.b16 %v437
    %v1902 = vunpack.c.l.b16 %v438
    %v1903 = vunpack.c.h.b16 %v438
    %v1904 = vunpack.c.l.b16 %v439
    %v1905 = vunpack.c.h.b16 %v439
    %v1906 = vunpack.c.l.b16 %v440
    %v1907 = vunpack.c.h.b16 %v440
    %v1908 = vunpack.c.l.b16 %v441
    %v1909 = vunpack.c.h.b16 %v441
    %v1910 = vunpack.c.l.b16 %v442
    %v1911 = vunpack.c.h.b16 %v442
    %v1912 = vunpack.c.l.b16 %v443
    %v1913 = vunpack.c.h.b16 %v443
    %v1914 = vunpack.c.l.b16 %v444
    %v1915 = vunpack.c.h.b16 %v444
    %v1916 = vunpack.c.l.b16 %v445
    %v1917 = vunpack.c.h.b16 %v445
    %v1918 = vunpack.c.l.b16 %v446
    %v1919 = vunpack.c.h.b16 %v446
    %v1920 = vunpack.c.l.b16 %v447
    %v1921 = vunpack.c.h.b16 %v447
    %v1922 = vunpack.c.l.b16 %v448
    %v1923 = vunpack.c.h.b16 %v448
    %v1924 = vunpack.c.l.b16 %v449
    %v1925 = vunpack.c.h.b16 %v449
    %v1926 = vunpack.c.l.b16 %v450
    %v1927 = vunpack.c.h.b16 %v450
    %v1928 = vunpack.c.l.b16 %v451
    %v1929 = vunpack.c.h.b16 %v451
    %v1930 = vunpack.c.l.b16 %v452
    %v1931 = vunpack.c.h.b16 %v452
    %v1932 = vunpack.c.l.b16 %v453
    %v1933 = vunpack.c.h.b16 %v453
    %v1934 = vunpack.c.l.b16 %v454
    %v1935 = vunpack.c.h.b16 %v454
    %v1936 = vunpack.c.l.b16 %v455
    %v1937 = vunpack.c.h.b16 %v455
    %v1938 = vunpack.c.l.b16 %v456
    %v1939 = vunpack.c.h.b16 %v456
    %v1940 = vunpack.c.l.b16 %v457
    %v1941 = vunpack.c.h.b16 %v457
    %v1942 = vunpack.c.l.b16 %v458
    %v1943 = vunpack.c.h.b16 %v458
    %v1944 = vunpack.c.l.b16 %v459
    %v1945 = vunpack.c.h.b16 %v459
    %v1946 = vunpack.c.l.b16 %v460
    %v1947 = vunpack.c.h.b16 %v460
    %v1948 = vunpack.c.l.b16 %v461
    %v1949 = vunpack.c.h.b16 %v461
    %v1950 = vunpack.c.l.b16 %v462
    %v1951 = vunpack.c.h.b16 %v462
    %v1952 = vunpack.c.l.b16 %v463
    %v1953 = vunpack.c.h.b16 %v463
    %v1954 = vunpack.c.l.b16 %v464
    %v1955 = vunpack.c.h.b16 %v464
    %v1956 = vunpack.c.l.b16 %v465
    %v1957 = vunpack.c.h.b16 %v465
    %v1958 = vunpack.c.l.b16 %v466
    %v1959 = vunpack.c.h.b16 %v466
    %v1960 = vunpack.c.l.b16 %v467
    %v1961 = vunpack.c.h.b16 %v467
    %v1962 = vunpack.c.l.b16 %v468
    %v1963 = vunpack.c.h.b16 %v468
    %v1964 = vunpack.c.l.b16 %v469
    %v1965 = vunpack.c.h.b16 %v469
    %v1966 = vunpack.c.l.b16 %v470
    %v1967 = vunpack.c.h.b16 %v470
    %v1968 = vunpack.c.l.b16 %v471
    %v1969 = vunpack.c.h.b16 %v471
    %v1970 = vunpack.c.l.b16 %v472
    %v1971 = vunpack.c.h.b16 %v472
    %v1972 = vunpack.c.l.b16 %v473
    %v1973 = vunpack.c.h.b16 %v473
    %v1974 = vunpack.c.l.b16 %v474
    %v1975 = vunpack.c.h.b16 %v474
    %v1976 = vunpack.c.l.b16 %v475
    %v1977 = vunpack.c.h.b16 %v475
    %v1978 = vunpack.c.l.b16 %v476
    %v1979 = vunpack.c.h.b16 %v476
    %v1980 = vunpack.c.l.b16 %v477
    %v1981 = vunpack.c.h.b16 %v477
    %v1982 = vunpack.c.l.b16 %v478
    %v1983 = vunpack.c.h.b16 %v478
    %v1984 = vunpack.c.l.b16 %v479
    %v1985 = vunpack.c.h.b16 %v479
    %v1986 = vunpack.c.l.b16 %v480
    %v1987 = vunpack.c.h.b16 %v480
    %v1988 = vunpack.c.l.b16 %v481
    %v1989 = vunpack.c.h.b16 %v481
    %v1990 = vunpack.c.l.b16 %v482
    %v1991 = vunpack.c.h.b16 %v482
    %v1992 = vunpack.c.l.b16 %v483
    %v1993 = vunpack.c.h.b16 %v483
    %v1994 = vunpack.c.l.b16 %v484
    %v1995 = vunpack.c.h.b16 %v484
    %v1996 = vunpack.c.l.b16 %v485
    %v1997 = vunpack.c.h.b16 %v485
    %v1998 = vunpack.c.l.b16 %v486
    %v1999 = vunpack.c.h.b16 %v486
    %v2000 = vunpack.c.l.b16 %v487
    %v2001 = vunpack.c.h.b16 %v487
    %v2002 = vunpack.c.l.b16 %v488
    %v2003 = vunpack.c.h.b16 %v488
    %v2004 = vunpack.c.l.b16 %v489
    %v2005 = vunpack.c.h.b16 %v489
    %v2006 = vunpack.c.l.b16 %v490
    %v2007 = vunpack.c.h.b16 %v490
    %v2008 = vunpack.c.l.b16 %v491
    %v2009 = vunpack.c.h.b16 %v491
    %v2010 = vunpack.c.l.b16 %v492
    %v2011 = vunpack.c.h.b16 %v492
    %v2012 = vunpack.c.l.b16 %v493
    %v2013 = vunpack.c.h.b16 %v493
    %v2014 = vunpack.c.l.b16 %v494
    %v2015 = vunpack.c.h.b16 %v494
    %v2016 = vunpack.c.l.b16 %v495
    %v2017 = vunpack.c.h.b16 %v495
    %v2018 = vunpack.c.l.b16 %v496
    %v2019 = vunpack.c.h.b16 %v496
    %v2020 = vunpack.c.l.b16 %v497
    %v2021 = vunpack.c.h.b16 %v497
    %v2022 = vunpack.c.l.b16 %v498
    %v2023 = vunpack.c.h.b16 %v498
    %v2024 = vunpack.c.l.b16 %v499
    %v2025 = vunpack.c.h.b16 %v499
    %v2026 = vunpack.c.l.b16 %v500
    %v2027 = vunpack.c.h.b16 %v500
    %v2028 = vunpack.c.l.b16 %v501
    %v2029 = vunpack.c.h.b16 %v501
    %v2030 = vunpack.c.l.b16 %v502
    %v2031 = vunpack.c.h.b16 %v502
    %v2032 = vunpack.c.l.b16 %v503
    %v2033 = vunpack.c.h.b16 %v503
    %v2034 = vunpack.c.l.b16 %v504
    %v2035 = vunpack.c.h.b16 %v504
    %v2036 = vunpack.c.l.b16 %v505
    %v2037 = vunpack.c.h.b16 %v505
    %v2038 = vunpack.c.l.b16 %v506
    %v2039 = vunpack.c.h.b16 %v506
    %v2040 = vunpack.c.l.b16 %v507
    %v2041 = vunpack.c.h.b16 %v507
    %v2042 = vunpack.c.l.b16 %v508
    %v2043 = vunpack.c.h.b16 %v508
    %v2044 = vunpack.c.l.b16 %v509
    %v2045 = vunpack.c.h.b16 %v509
    %v2046 = vunpack.c.l.b16 %v510
    %v2047 = vunpack.c.h.b16 %v510
    %v2048 = vunpack.c.l.b16 %v511
    %v2049 = vunpack.c.h.b16 %v511
    %v2050 = vunpack.c.l.b16 %v512
    %v2051 = vunpack.c.h.b16 %v512
    %v2052 = vunpack.c.l.b16 %v513
    %v2053 = vunpack.c.h.b16 %v513
    %v2054 = vunpack.c.l.b16 %v514
    %v2055 = vunpack.c.h.b16 %v514
    %v2056 = vunpack.c.l.b16 %v515
    %v2057 = vunpack.c.h.b16 %v515
    %v2058 = vunpack.c.l.b16 %v516
    %v2059 = vunpack.c.h.b16 %v516
    %v2060 = vunpack.c.l.b16 %v517
    %v2061 = vunpack.c.h.b16 %v517
    %v2062 = vunpack.c.l.b16 %v518
    %v2063 = vunpack.c.h.b16 %v518
    %v2064 = vunpack.c.l.b16 %v519
    %v2065 = vunpack.c.h.b16 %v519
    %v2066 = vunpack.c.l.b16 %v520
    %v2067 = vunpack.c.h.b16 %v520
    %v2068 = vunpack.c.l.b16 %v521
    %v2069 = vunpack.c.h.b16 %v521
    %v2070 = vunpack.c.l.b16 %v522
    %v2071 = vunpack.c.h.b16 %v522
    %v2072 = vunpack.c.l.b16 %v523
    %v2073 = vunpack.c.h.b16 %v523
    %v2074 = vunpack.c.l.b16 %v524
    %v2075 = vunpack.c.h.b16 %v524
    %v2076 = vunpack.c.l.b16 %v525
    %v2077 = vunpack.c.h.b16 %v525
    %v2078 = vunpack.c.l.b16 %v526
    %v2079 = vunpack.c.h.b16 %v526
    %v2080 = vunpack.c.l.b16 %v527
    %v2081 = vunpack.c.h.b16 %v527
    %v2082 = vunpack.c.l.b16 %v528
    %v2083 = vunpack.c.h.b16 %v528
    %v2084 = vunpack.c.l.b16 %v529
    %v2085 = vunpack.c.h.b16 %v529
    %v2086 = vunpack.c.l.b16 %v530
    %v2087 = vunpack.c.h.b16 %v530
    %v2088 = vunpack.c.l.b16 %v531
    %v2089 = vunpack.c.h.b16 %v531
    %v2090 = vunpack.c.l.b16 %v532
    %v2091 = vunpack.c.h.b16 %v532
    %v2092 = vunpack.c.l.b16 %v533
    %v2093 = vunpack.c.h.b16 %v533
    %v2094 = vunpack.c.l.b16 %v534
    %v2095 = vunpack.c.h.b16 %v534
    %v2096 = vunpack.c.l.b16 %v535
    %v2097 = vunpack.c.h.b16 %v535
    %v2098 = vunpack.c.l.b16 %v536
    %v2099 = vunpack.c.h.b16 %v536
    %v2100 = vunpack.c.l.b16 %v537
    %v2101 = vunpack.c.h.b16 %v537
    %v2102 = vunpack.c.l.b16 %v538
    %v2103 = vunpack.c.h.b16 %v538
    %v2104 = vunpack.c.l.b16 %v539
    %v2105 = vunpack.c.h.b16 %v539
    %v2106 = vunpack.c.l.b16 %v540
    %v2107 = vunpack.c.h.b16 %v540
    %v2108 = vunpack.c.l.b16 %v541
    %v2109 = vunpack.c.h.b16 %v541
    %v2110 = vunpack.c.l.b16 %v542
    %v2111 = vunpack.c.h.b16 %v542
    %v2112 = vunpack.c.l.b16 %v543
    %v2113 = vunpack.c.h.b16 %v543
    %v2114 = vunpack.c.l.b16 %v544
    %v2115 = vunpack.c.h.b16 %v544
    %v2116 = vunpack.c.l.b16 %v545
    %v2117 = vunpack.c.h.b16 %v545
    %v2118 = vunpack.c.l.b16 %v546
    %v2119 = vunpack.c.h.b16 %v546
    %v2120 = vunpack.c.l.b16 %v547
    %v2121 = vunpack.c.h.b16 %v547
    %v2122 = vunpack.c.l.b16 %v548
    %v2123 = vunpack.c.h.b16 %v548
    %v2124 = vunpack.c.l.b16 %v549
    %v2125 = vunpack.c.h.b16 %v549
    %v2126 = vunpack.c.l.b16 %v550
    %v2127 = vunpack.c.h.b16 %v550
    %v2128 = vunpack.c.l.b16 %v551
    %v2129 = vunpack.c.h.b16 %v551
    %v2130 = vunpack.c.l.b16 %v552
    %v2131 = vunpack.c.h.b16 %v552
    %v2132 = vunpack.c.l.b16 %v553
    %v2133 = vunpack.c.h.b16 %v553
    %v2134 = vunpack.c.l.b16 %v554
    %v2135 = vunpack.c.h.b16 %v554
    %v2136 = vunpack.c.l.b16 %v555
    %v2137 = vunpack.c.h.b16 %v555
    %v2138 = vunpack.c.l.b16 %v556
    %v2139 = vunpack.c.h.b16 %v556
    %v2140 = vunpack.c.l.b16 %v557
    %v2141 = vunpack.c.h.b16 %v557
    %v2142 = vunpack.c.l.b16 %v558
    %v2143 = vunpack.c.h.b16 %v558
    %v2144 = vunpack.c.l.b16 %v559
    %v2145 = vunpack.c.h.b16 %v559
    %v2146 = vunpack.c.l.b16 %v560
    %v2147 = vunpack.c.h.b16 %v560
    %v2148 = vunpack.c.l.b16 %v561
    %v2149 = vunpack.c.h.b16 %v561
    %v2150 = vunpack.c.l.b16 %v562
    %v2151 = vunpack.c.h.b16 %v562
    %v2152 = vunpack.c.l.b16 %v563
    %v2153 = vunpack.c.h.b16 %v563
    %v2154 = vunpack.c.l.b16 %v564
    %v2155 = vunpack.c.h.b16 %v564
    %v2156 = vunpack.c.l.b16 %v565
    %v2157 = vunpack.c.h.b16 %v565
    %v2158 = vunpack.c.l.b16 %v566
    %v2159 = vunpack.c.h.b16 %v566
    %v2160 = vunpack.c.l.b16 %v567
    %v2161 = vunpack.c.h.b16 %v567
    %v2162 = vunpack.c.l.b16 %v568
    %v2163 = vunpack.c.h.b16 %v568
    %v2164 = vunpack.c.l.b16 %v569
    %v2165 = vunpack.c.h.b16 %v569
    %v2166 = vunpack.c.l.b16 %v570
    %v2167 = vunpack.c.h.b16 %v570
    %v2168 = vunpack.c.l.b16 %v571
    %v2169 = vunpack.c.h.b16 %v571
    %v2170 = vunpack.c.l.b16 %v572
    %v2171 = vunpack.c.h.b16 %v572
    %v2172 = vunpack.c.l.b16 %v573
    %v2173 = vunpack.c.h.b16 %v573
    %v2174 = vunpack.c.l.b16 %v574
    %v2175 = vunpack.c.h.b16 %v574
    %v2176 = vunpack.c.l.b16 %v575
    %v2177 = vunpack.c.h.b16 %v575
    %v2178 = vunpack.c.l.b16 %v576
    %v2179 = vunpack.c.h.b16 %v576
    %v2180 = vunpack.c.l.b16 %v577
    %v2181 = vunpack.c.h.b16 %v577
    %v2182 = vunpack.c.l.b16 %v578
    %v2183 = vunpack.c.h.b16 %v578
    %v2184 = vunpack.c.l.b16 %v579
    %v2185 = vunpack.c.h.b16 %v579
    %v2186 = vunpack.c.l.b16 %v580
    %v2187 = vunpack.c.h.b16 %v580
    %v2188 = vunpack.c.l.b16 %v581
    %v2189 = vunpack.c.h.b16 %v581
    %v2190 = vunpack.c.l.b16 %v582
    %v2191 = vunpack.c.h.b16 %v582
    %v2192 = vunpack.c.l.b16 %v583
    %v2193 = vunpack.c.h.b16 %v583
    %v2194 = vunpack.c.l.b16 %v584
    %v2195 = vunpack.c.h.b16 %v584
    %v2196 = vunpack.c.l.b16 %v585
    %v2197 = vunpack.c.h.b16 %v585
    %v2198 = vunpack.c.l.b16 %v586
    %v2199 = vunpack.c.h.b16 %v586
    %v2200 = vunpack.c.l.b16 %v587
    %v2201 = vunpack.c.h.b16 %v587
    %v2202 = vunpack.c.l.b16 %v588
    %v2203 = vunpack.c.h.b16 %v588
    %v2204 = vunpack.c.l.b16 %v589
    %v2205 = vunpack.c.h.b16 %v589
    %v2206 = vunpack.c.l.b16 %v590
    %v2207 = vunpack.c.h.b16 %v590
    %v2208 = vunpack.c.l.b16 %v591
    %v2209 = vunpack.c.h.b16 %v591
    %v2210 = vpack.c.b16 %v1194, %v1186
    %v2211 = vpack.c.b16 %v1195, %v1187
    %v2212 = vpack.c.b16 %v1196, %v1188
    %v2213 = vpack.c.b16 %v1197, %v1189
    %v2214 = vpack.c.b16 %v1198, %v1190
    %v2215 = vpack.c.b16 %v1199, %v1191
    %v2216 = vpack.c.b16 %v1200, %v1192
    %v2217 = vpack.c.b16 %v1201, %v1193
    %v2218 = vpack.c.b16 %v1210, %v1202
    %v2219 = vpack.c.b16 %v1211, %v1203
    %v2220 = vpack.c.b16 %v1212, %v1204
    %v2221 = vpack.c.b16 %v1213, %v1205
    %v2222 = vpack.c.b16 %v1214, %v1206
    %v2223 = vpack.c.b16 %v1215, %v1207
    %v2224 = vpack.c.b16 %v1216, %v1208
    %v2225 = vpack.c.b16 %v1217, %v1209
    %v2226 = vpack.c.b16 %v1226, %v1218
    %v2227 = vpack.c.b16 %v1227, %v1219
    %v2228 = vpack.c.b16 %v1228, %v1220
    %v2229 = vpack.c.b16 %v1229, %v1221
    %v2230 = vpack.c.b16 %v1230, %v1222
    %v2231 = vpack.c.b16 %v1231, %v1223
    %v2232 = vpack.c.b16 %v1232, %v1224
    %v2233 = vpack.c.b16 %v1233, %v1225
    %v2234 = vpack.c.b16 %v1242, %v1234
    %v2235 = vpack.c.b16 %v1243, %v1235
    %v2236 = vpack.c.b16 %v1244, %v1236
    %v2237 = vpack.c.b16 %v1245, %v1237
    %v2238 = vpack.c.b16 %v1246, %v1238
    %v2239 = vpack.c.b16 %v1247, %v1239
    %v2240 = vpack.c.b16 %v1248, %v1240
    %v2241 = vpack.c.b16 %v1249, %v1241
    %v2242 = vpack.c.b16 %v1258, %v1250
    %v2243 = vpack.c.b16 %v1259, %v1251
    %v2244 = vpack.c.b16 %v1260, %v1252
    %v2245 = vpack.c.b16 %v1261, %v1253
    %v2246 = vpack.c.b16 %v1262, %v1254
    %v2247 = vpack.c.b16 %v1263, %v1255
    %v2248 = vpack.c.b16 %v1264, %v1256
    %v2249 = vpack.c.b16 %v1265, %v1257
    %v2250 = vpack.c.b16 %v1274, %v1266
    %v2251 = vpack.c.b16 %v1275, %v1267
    %v2252 = vpack.c.b16 %v1276, %v1268
    %v2253 = vpack.c.b16 %v1277, %v1269
    %v2254 = vpack.c.b16 %v1278, %v1270
    %v2255 = vpack.c.b16 %v1279, %v1271
    %v2256 = vpack.c.b16 %v1280, %v1272
    %v2257 = vpack.c.b16 %v1281, %v1273
    %v2258 = vpack.c.b16 %v1290, %v1282
    %v2259 = vpack.c.b16 %v1291, %v1283
    %v2260 = vpack.c.b16 %v1292, %v1284
    %v2261 = vpack.c.b16 %v1293, %v1285
    %v2262 = vpack.c.b16 %v1294, %v1286
    %v2263 = vpack.c.b16 %v1295, %v1287
    %v2264 = vpack.c.b16 %v1296, %v1288
    %v2265 = vpack.c.b16 %v1297, %v1289
    %v2266 = vpack.c.b16 %v1306, %v1298
    %v2267 = vpack.c.b16 %v1307, %v1299
    %v2268 = vpack.c.b16 %v1308, %v1300
    %v2269 = vpack.c.b16 %v1309, %v1301
    %v2270 = vpack.c.b16 %v1310, %v1302
    %v2271 = vpack.c.b16 %v1311, %v1303
    %v2272 = vpack.c.b16 %v1312, %v1304
    %v2273 = vpack.c.b16 %v1313, %v1305
    %v2274 = vpack.c.b16 %v1322, %v1314
    %v2275 = vpack.c.b16 %v1323, %v1315
    %v2276 = vpack.c.b16 %v1324, %v1316
    %v2277 = vpack.c.b16 %v1325, %v1317
    %v2278 = vpack.c.b16 %v1326, %v1318
    %v2279 = vpack.c.b16 %v1327, %v1319
    %v2280 = vpack.c.b16 %v1328, %v1320
    %v2281 = vpack.c.b16 %v1329, %v1321
    %v2282 = vpack.c.b16 %v1338, %v1330
    %v2283 = vpack.c.b16 %v1339, %v1331
    %v2284 = vpack.c.b16 %v1340, %v1332
    %v2285 = vpack.c.b16 %v1341, %v1333
    %v2286 = vpack.c.b16 %v1342, %v1334
    %v2287 = vpack.c.b16 %v1343, %v1335
    %v2288 = vpack.c.b16 %v1344, %v1336
    %v2289 = vpack.c.b16 %v1345, %v1337
    %v2290 = vpack.c.b16 %v1354, %v1346
    %v2291 = vpack.c.b16 %v1355, %v1347
    %v2292 = vpack.c.b16 %v1356, %v1348
    %v2293 = vpack.c.b16 %v1357, %v1349
    %v2294 = vpack.c.b16 %v1358, %v1350
    %v2295 = vpack.c.b16 %v1359, %v1351
    %v2296 = vpack.c.b16 %v1360, %v1352
    %v2297 = vpack.c.b16 %v1361, %v1353
    %v2298 = vpack.c.b16 %v1370, %v1362
    %v2299 = vpack.c.b16 %v1371, %v1363
    %v2300 = vpack.c.b16 %v1372, %v1364
    %v2301 = vpack.c.b16 %v1373, %v1365
    %v2302 = vpack.c.b16 %v1374, %v1366
    %v2303 = vpack.c.b16 %v1375, %v1367
    %v2304 = vpack.c.b16 %v1376, %v1368
    %v2305 = vpack.c.b16 %v1377, %v1369
    %v2306 = vpack.c.b16 %v1386, %v1378
    %v2307 = vpack.c.b16 %v1387, %v1379
    %v2308 = vpack.c.b16 %v1388, %v1380
    %v2309 = vpack.c.b16 %v1389, %v1381
    %v2310 = vpack.c.b16 %v1390, %v1382
    %v2311 = vpack.c.b16 %v1391, %v1383
    %v2312 = vpack.c.b16 %v1392, %v1384
    %v2313 = vpack.c.b16 %v1393, %v1385
    %v2314 = vpack.c.b16 %v1402, %v1394
    %v2315 = vpack.c.b16 %v1403, %v1395
    %v2316 = vpack.c.b16 %v1404, %v1396
    %v2317 = vpack.c.b16 %v1405, %v1397
    %v2318 = vpack.c.b16 %v1406, %v1398
    %v2319 = vpack.c.b16 %v1407, %v1399
    %v2320 = vpack.c.b16 %v1408, %v1400
    %v2321 = vpack.c.b16 %v1409, %v1401
    %v2322 = vpack.c.b16 %v1418, %v1410
    %v2323 = vpack.c.b16 %v1419, %v1411
    %v2324 = vpack.c.b16 %v1420, %v1412
    %v2325 = vpack.c.b16 %v1421, %v1413
    %v2326 = vpack.c.b16 %v1422, %v1414
    %v2327 = vpack.c.b16 %v1423, %v1415
    %v2328 = vpack.c.b16 %v1424, %v1416
    %v2329 = vpack.c.b16 %v1425, %v1417
    %v2330 = vpack.c.b16 %v1434, %v1426
    %v2331 = vpack.c.b16 %v1435, %v1427
    %v2332 = vpack.c.b16 %v1436, %v1428
    %v2333 = vpack.c.b16 %v1437, %v1429
    %v2334 = vpack.c.b16 %v1438, %v1430
    %v2335 = vpack.c.b16 %v1439, %v1431
    %v2336 = vpack.c.b16 %v1440, %v1432
    %v2337 = vpack.c.b16 %v1441, %v1433
    %v2338 = vpack.c.b16 %v1450, %v1442
    %v2339 = vpack.c.b16 %v1451, %v1443
    %v2340 = vpack.c.b16 %v1452, %v1444
    %v2341 = vpack.c.b16 %v1453, %v1445
    %v2342 = vpack.c.b16 %v1454, %v1446
    %v2343 = vpack.c.b16 %v1455, %v1447
    %v2344 = vpack.c.b16 %v1456, %v1448
    %v2345 = vpack.c.b16 %v1457, %v1449
    %v2346 = vpack.c.b16 %v1466, %v1458
    %v2347 = vpack.c.b16 %v1467, %v1459
    %v2348 = vpack.c.b16 %v1468, %v1460
    %v2349 = vpack.c.b16 %v1469, %v1461
    %v2350 = vpack.c.b16 %v1470, %v1462
    %v2351 = vpack.c.b16 %v1471, %v1463
    %v2352 = vpack.c.b16 %v1472, %v1464
    %v2353 = vpack.c.b16 %v1473, %v1465
    %v2354 = vpack.c.b16 %v1482, %v1474
    %v2355 = vpack.c.b16 %v1483, %v1475
    %v2356 = vpack.c.b16 %v1484, %v1476
    %v2357 = vpack.c.b16 %v1485, %v1477
    %v2358 = vpack.c.b16 %v1486, %v1478
    %v2359 = vpack.c.b16 %v1487, %v1479
    %v2360 = vpack.c.b16 %v1488, %v1480
    %v2361 = vpack.c.b16 %v1489, %v1481
    %v2362 = vpack.c.b16 %v1498, %v1490
    %v2363 = vpack.c.b16 %v1499, %v1491
    %v2364 = vpack.c.b16 %v1500, %v1492
    %v2365 = vpack.c.b16 %v1501, %v1493
    %v2366 = vpack.c.b16 %v1502, %v1494
    %v2367 = vpack.c.b16 %v1503, %v1495
    %v2368 = vpack.c.b16 %v1504, %v1496
    %v2369 = vpack.c.b16 %v1505, %v1497
    %v2370 = vpack.c.b16 %v1514, %v1506
    %v2371 = vpack.c.b16 %v1515, %v1507
    %v2372 = vpack.c.b16 %v1516, %v1508
    %v2373 = vpack.c.b16 %v1517, %v1509
    %v2374 = vpack.c.b16 %v1518, %v1510
    %v2375 = vpack.c.b16 %v1519, %v1511
    %v2376 = vpack.c.b16 %v1520, %v1512
    %v2377 = vpack.c.b16 %v1521, %v1513
    %v2378 = vpack.c.b16 %v1530, %v1522
    %v2379 = vpack.c.b16 %v1531, %v1523
    %v2380 = vpack.c.b16 %v1532, %v1524
    %v2381 = vpack.c.b16 %v1533, %v1525
    %v2382 = vpack.c.b16 %v1534, %v1526
    %v2383 = vpack.c.b16 %v1535, %v1527
    %v2384 = vpack.c.b16 %v1536, %v1528
    %v2385 = vpack.c.b16 %v1537, %v1529
    %v2386 = vpack.c.b16 %v1546, %v1538
    %v2387 = vpack.c.b16 %v1547, %v1539
    %v2388 = vpack.c.b16 %v1548, %v1540
    %v2389 = vpack.c.b16 %v1549, %v1541
    %v2390 = vpack.c.b16 %v1550, %v1542
    %v2391 = vpack.c.b16 %v1551, %v1543
    %v2392 = vpack.c.b16 %v1552, %v1544
    %v2393 = vpack.c.b16 %v1553, %v1545
    %v2394 = vpack.c.b16 %v1562, %v1554
    %v2395 = vpack.c.b16 %v1563, %v1555
    %v2396 = vpack.c.b16 %v1564, %v1556
    %v2397 = vpack.c.b16 %v1565, %v1557
    %v2398 = vpack.c.b16 %v1566, %v1558
    %v2399 = vpack.c.b16 %v1567, %v1559
    %v2400 = vpack.c.b16 %v1568, %v1560
    %v2401 = vpack.c.b16 %v1569, %v1561
    %v2402 = vpack.c.b16 %v1578, %v1570
    %v2403 = vpack.c.b16 %v1579, %v1571
    %v2404 = vpack.c.b16 %v1580, %v1572
    %v2405 = vpack.c.b16 %v1581, %v1573
    %v2406 = vpack.c.b16 %v1582, %v1574
    %v2407 = vpack.c.b16 %v1583, %v1575
    %v2408 = vpack.c.b16 %v1584, %v1576
    %v2409 = vpack.c.b16 %v1585, %v1577
    %v2410 = vpack.c.b16 %v1594, %v1586
    %v2411 = vpack.c.b16 %v1595, %v1587
    %v2412 = vpack.c.b16 %v1596, %v1588
    %v2413 = vpack.c.b16 %v1597, %v1589
    %v2414 = vpack.c.b16 %v1598, %v1590
    %v2415 = vpack.c.b16 %v1599, %v1591
    %v2416 = vpack.c.b16 %v1600, %v1592
    %v2417 = vpack.c.b16 %v1601, %v1593
    %v2418 = vpack.c.b16 %v1610, %v1602
    %v2419 = vpack.c.b16 %v1611, %v1603
    %v2420 = vpack.c.b16 %v1612, %v1604
    %v2421 = vpack.c.b16 %v1613, %v1605
    %v2422 = vpack.c.b16 %v1614, %v1606
    %v2423 = vpack.c.b16 %v1615, %v1607
    %v2424 = vpack.c.b16 %v1616, %v1608
    %v2425 = vpack.c.b16 %v1617, %v1609
    %v2426 = vpack.c.b16 %v1626, %v1618
    %v2427 = vpack.c.b16 %v1627, %v1619
    %v2428 = vpack.c.b16 %v1628, %v1620
    %v2429 = vpack.c.b16 %v1629, %v1621
    %v2430 = vpack.c.b16 %v1630, %v1622
    %v2431 = vpack.c.b16 %v1631, %v1623
    %v2432 = vpack.c.b16 %v1632, %v1624
    %v2433 = vpack.c.b16 %v1633, %v1625
    %v2434 = vpack.c.b16 %v1642, %v1634
    %v2435 = vpack.c.b16 %v1643, %v1635
    %v2436 = vpack.c.b16 %v1644, %v1636
    %v2437 = vpack.c.b16 %v1645, %v1637
    %v2438 = vpack.c.b16 %v1646, %v1638
    %v2439 = vpack.c.b16 %v1647, %v1639
    %v2440 = vpack.c.b16 %v1648, %v1640
    %v2441 = vpack.c.b16 %v1649, %v1641
    %v2442 = vpack.c.b16 %v1658, %v1650
    %v2443 = vpack.c.b16 %v1659, %v1651
    %v2444 = vpack.c.b16 %v1660, %v1652
    %v2445 = vpack.c.b16 %v1661, %v1653
    %v2446 = vpack.c.b16 %v1662, %v1654
    %v2447 = vpack.c.b16 %v1663, %v1655
    %v2448 = vpack.c.b16 %v1664, %v1656
    %v2449 = vpack.c.b16 %v1665, %v1657
    %v2450 = vpack.c.b16 %v1674, %v1666
    %v2451 = vpack.c.b16 %v1675, %v1667
    %v2452 = vpack.c.b16 %v1676, %v1668
    %v2453 = vpack.c.b16 %v1677, %v1669
    %v2454 = vpack.c.b16 %v1678, %v1670
    %v2455 = vpack.c.b16 %v1679, %v1671
    %v2456 = vpack.c.b16 %v1680, %v1672
    %v2457 = vpack.c.b16 %v1681, %v1673
    %v2458 = vpack.c.b16 %v1690, %v1682
    %v2459 = vpack.c.b16 %v1691, %v1683
    %v2460 = vpack.c.b16 %v1692, %v1684
    %v2461 = vpack.c.b16 %v1693, %v1685
    %v2462 = vpack.c.b16 %v1694, %v1686
    %v2463 = vpack.c.b16 %v1695, %v1687
    %v2464 = vpack.c.b16 %v1696, %v1688
    %v2465 = vpack.c.b16 %v1697, %v1689
    %v2466 = vpack.c.b16 %v1706, %v1698
    %v2467 = vpack.c.b16 %v1707, %v1699
    %v2468 = vpack.c.b16 %v1708, %v1700
    %v2469 = vpack.c.b16 %v1709, %v1701
    %v2470 = vpack.c.b16 %v1710, %v1702
    %v2471 = vpack.c.b16 %v1711, %v1703
    %v2472 = vpack.c.b16 %v1712, %v1704
    %v2473 = vpack.c.b16 %v1713, %v1705
    %v2474 = vpack.c.b16 %v1722, %v1714
    %v2475 = vpack.c.b16 %v1723, %v1715
    %v2476 = vpack.c.b16 %v1724, %v1716
    %v2477 = vpack.c.b16 %v1725, %v1717
    %v2478 = vpack.c.b16 %v1726, %v1718
    %v2479 = vpack.c.b16 %v1727, %v1719
    %v2480 = vpack.c.b16 %v1728, %v1720
    %v2481 = vpack.c.b16 %v1729, %v1721
    %v2482 = vpack.c.b16 %v1738, %v1730
    %v2483 = vpack.c.b16 %v1739, %v1731
    %v2484 = vpack.c.b16 %v1740, %v1732
    %v2485 = vpack.c.b16 %v1741, %v1733
    %v2486 = vpack.c.b16 %v1742, %v1734
    %v2487 = vpack.c.b16 %v1743, %v1735
    %v2488 = vpack.c.b16 %v1744, %v1736
    %v2489 = vpack.c.b16 %v1745, %v1737
    %v2490 = vpack.c.b16 %v1754, %v1746
    %v2491 = vpack.c.b16 %v1755, %v1747
    %v2492 = vpack.c.b16 %v1756, %v1748
    %v2493 = vpack.c.b16 %v1757, %v1749
    %v2494 = vpack.c.b16 %v1758, %v1750
    %v2495 = vpack.c.b16 %v1759, %v1751
    %v2496 = vpack.c.b16 %v1760, %v1752
    %v2497 = vpack.c.b16 %v1761, %v1753
    %v2498 = vpack.c.b16 %v1770, %v1762
    %v2499 = vpack.c.b16 %v1771, %v1763
    %v2500 = vpack.c.b16 %v1772, %v1764
    %v2501 = vpack.c.b16 %v1773, %v1765
    %v2502 = vpack.c.b16 %v1774, %v1766
    %v2503 = vpack.c.b16 %v1775, %v1767
    %v2504 = vpack.c.b16 %v1776, %v1768
    %v2505 = vpack.c.b16 %v1777, %v1769
    %v2506 = vpack.c.b16 %v1786, %v1778
    %v2507 = vpack.c.b16 %v1787, %v1779
    %v2508 = vpack.c.b16 %v1788, %v1780
    %v2509 = vpack.c.b16 %v1789, %v1781
    %v2510 = vpack.c.b16 %v1790, %v1782
    %v2511 = vpack.c.b16 %v1791, %v1783
    %v2512 = vpack.c.b16 %v1792, %v1784
    %v2513 = vpack.c.b16 %v1793, %v1785
    %v2514 = vpack.c.b16 %v1802, %v1794
    %v2515 = vpack.c.b16 %v1803, %v1795
    %v2516 = vpack.c.b16 %v1804, %v1796
    %v2517 = vpack.c.b16 %v1805, %v1797
    %v2518 = vpack.c.b16 %v1806, %v1798
    %v2519 = vpack.c.b16 %v1807, %v1799
    %v2520 = vpack.c.b16 %v1808, %v1800
    %v2521 = vpack.c.b16 %v1809, %v1801
    %v2522 = vpack.c.b16 %v1818, %v1810
    %v2523 = vpack.c.b16 %v1819, %v1811
    %v2524 = vpack.c.b16 %v1820, %v1812
    %v2525 = vpack.c.b16 %v1821, %v1813
    %v2526 = vpack.c.b16 %v1822, %v1814
    %v2527 = vpack.c.b16 %v1823, %v1815
    %v2528 = vpack.c.b16 %v1824, %v1816
    %v2529 = vpack.c.b16 %v1825, %v1817
    %v2530 = vpack.c.b16 %v1834, %v1826
    %v2531 = vpack.c.b16 %v1835, %v1827
    %v2532 = vpack.c.b16 %v1836, %v1828
    %v2533 = vpack.c.b16 %v1837, %v1829
    %v2534 = vpack.c.b16 %v1838, %v1830
    %v2535 = vpack.c.b16 %v1839, %v1831
    %v2536 = vpack.c.b16 %v1840, %v1832
    %v2537 = vpack.c.b16 %v1841, %v1833
    %v2538 = vpack.c.b16 %v1850, %v1842
    %v2539 = vpack.c.b16 %v1851, %v1843
    %v2540 = vpack.c.b16 %v1852, %v1844
    %v2541 = vpack.c.b16 %v1853, %v1845
    %v2542 = vpack.c.b16 %v1854, %v1846
    %v2543 = vpack.c.b16 %v1855, %v1847
    %v2544 = vpack.c.b16 %v1856, %v1848
    %v2545 = vpack.c.b16 %v1857, %v1849
    %v2546 = vpack.c.b16 %v1866, %v1858
    %v2547 = vpack.c.b16 %v1867, %v1859
    %v2548 = vpack.c.b16 %v1868, %v1860
    %v2549 = vpack.c.b16 %v1869, %v1861
    %v2550 = vpack.c.b16 %v1870, %v1862
    %v2551 = vpack.c.b16 %v1871, %v1863
    %v2552 = vpack.c.b16 %v1872, %v1864
    %v2553 = vpack.c.b16 %v1873, %v1865
    %v2554 = vpack.c.b16 %v1882, %v1874
    %v2555 = vpack.c.b16 %v1883, %v1875
    %v2556 = vpack.c.b16 %v1884, %v1876
    %v2557 = vpack.c.b16 %v1885, %v1877
    %v2558 = vpack.c.b16 %v1886, %v1878
    %v2559 = vpack.c.b16 %v1887, %v1879
    %v2560 = vpack.c.b16 %v1888, %v1880
    %v2561 = vpack.c.b16 %v1889, %v1881
    %v2562 = vpack.c.b16 %v1898, %v1890
    %v2563 = vpack.c.b16 %v1899, %v1891
    %v2564 = vpack.c.b16 %v1900, %v1892
    %v2565 = vpack.c.b16 %v1901, %v1893
    %v2566 = vpack.c.b16 %v1902, %v1894
    %v2567 = vpack.c.b16 %v1903, %v1895
    %v2568 = vpack.c.b16 %v1904, %v1896
    %v2569 = vpack.c.b16 %v1905, %v1897
    %v2570 = vpack.c.b16 %v1914, %v1906
    %v2571 = vpack.c.b16 %v1915, %v1907
    %v2572 = vpack.c.b16 %v1916, %v1908
    %v2573 = vpack.c.b16 %v1917, %v1909
    %v2574 = vpack.c.b16 %v1918, %v1910
    %v2575 = vpack.c.b16 %v1919, %v1911
    %v2576 = vpack.c.b16 %v1920, %v1912
    %v2577 = vpack.c.b16 %v1921, %v1913
    %v2578 = vpack.c.b16 %v1930, %v1922
    %v2579 = vpack.c.b16 %v1931, %v1923
    %v2580 = vpack.c.b16 %v1932, %v1924
    %v2581 = vpack.c.b16 %v1933, %v1925
    %v2582 = vpack.c.b16 %v1934, %v1926
    %v2583 = vpack.c.b16 %v1935, %v1927
    %v2584 = vpack.c.b16 %v1936, %v1928
    %v2585 = vpack.c.b16 %v1937, %v1929
    %v2586 = vpack.c.b16 %v1946, %v1938
    %v2587 = vpack.c.b16 %v1947, %v1939
    %v2588 = vpack.c.b16 %v1948, %v1940
    %v2589 = vpack.c.b16 %v1949, %v1941
    %v2590 = vpack.c.b16 %v1950, %v1942
    %v2591 = vpack.c.b16 %v1951, %v1943
    %v2592 = vpack.c.b16 %v1952, %v1944
    %v2593 = vpack.c.b16 %v1953, %v1945
    %v2594 = vpack.c.b16 %v1962, %v1954
    %v2595 = vpack.c.b16 %v1963, %v1955
    %v2596 = vpack.c.b16 %v1964, %v1956
    %v2597 = vpack.c.b16 %v1965, %v1957
    %v2598 = vpack.c.b16 %v1966, %v1958
    %v2599 = vpack.c.b16 %v1967, %v1959
    %v2600 = vpack.c.b16 %v1968, %v1960
    %v2601 = vpack.c.b16 %v1969, %v1961
    %v2602 = vpack.c.b16 %v1978, %v1970
    %v2603 = vpack.c.b16 %v1979, %v1971
    %v2604 = vpack.c.b16 %v1980, %v1972
    %v2605 = vpack.c.b16 %v1981, %v1973
    %v2606 = vpack.c.b16 %v1982, %v1974
    %v2607 = vpack.c.b16 %v1983, %v1975
    %v2608 = vpack.c.b16 %v1984, %v1976
    %v2609 = vpack.c.b16 %v1985, %v1977
    %v2610 = vpack.c.b16 %v1994, %v1986
    %v2611 = vpack.c.b16 %v1995, %v1987
    %v2612 = vpack.c.b16 %v1996, %v1988
    %v2613 = vpack.c.b16 %v1997, %v1989
    %v2614 = vpack.c.b16 %v1998, %v1990
    %v2615 = vpack.c.b16 %v1999, %v1991
    %v2616 = vpack.c.b16 %v2000, %v1992
    %v2617 = vpack.c.b16 %v2001, %v1993
    %v2618 = vpack.c.b16 %v2010, %v2002
    %v2619 = vpack.c.b16 %v2011, %v2003
    %v2620 = vpack.c.b16 %v2012, %v2004
    %v2621 = vpack.c.b16 %v2013, %v2005
    %v2622 = vpack.c.b16 %v2014, %v2006
    %v2623 = vpack.c.b16 %v2015, %v2007
    %v2624 = vpack.c.b16 %v2016, %v2008
    %v2625 = vpack.c.b16 %v2017, %v2009
    %v2626 = vpack.c.b16 %v2026, %v2018
    %v2627 = vpack.c.b16 %v2027, %v2019
    %v2628 = vpack.c.b16 %v2028, %v2020
    %v2629 = vpack.c.b16 %v2029, %v2021
    %v2630 = vpack.c.b16 %v2030, %v2022
    %v2631 = vpack.c.b16 %v2031, %v2023
    %v2632 = vpack.c.b16 %v2032, %v2024
    %v2633 = vpack.c.b16 %v2033, %v2025
    %v2634 = vpack.c.b16 %v2042, %v2034
    %v2635 = vpack.c.b16 %v2043, %v2035
    %v2636 = vpack.c.b16 %v2044, %v2036
    %v2637 = vpack.c.b16 %v2045, %v2037
    %v2638 = vpack.c.b16 %v2046, %v2038
    %v2639 = vpack.c.b16 %v2047, %v2039
    %v2640 = vpack.c.b16 %v2048, %v2040
    %v2641 = vpack.c.b16 %v2049, %v2041
    %v2642 = vpack.c.b16 %v2058, %v2050
    %v2643 = vpack.c.b16 %v2059, %v2051
    %v2644 = vpack.c.b16 %v2060, %v2052
    %v2645 = vpack.c.b16 %v2061, %v2053
    %v2646 = vpack.c.b16 %v2062, %v2054
    %v2647 = vpack.c.b16 %v2063, %v2055
    %v2648 = vpack.c.b16 %v2064, %v2056
    %v2649 = vpack.c.b16 %v2065, %v2057
    %v2650 = vpack.c.b16 %v2074, %v2066
    %v2651 = vpack.c.b16 %v2075, %v2067
    %v2652 = vpack.c.b16 %v2076, %v2068
    %v2653 = vpack.c.b16 %v2077, %v2069
    %v2654 = vpack.c.b16 %v2078, %v2070
    %v2655 = vpack.c.b16 %v2079, %v2071
    %v2656 = vpack.c.b16 %v2080, %v2072
    %v2657 = vpack.c.b16 %v2081, %v2073
    %v2658 = vpack.c.b16 %v2090, %v2082
    %v2659 = vpack.c.b16 %v2091, %v2083
    %v2660 = vpack.c.b16 %v2092, %v2084
    %v2661 = vpack.c.b16 %v2093, %v2085
    %v2662 = vpack.c.b16 %v2094, %v2086
    %v2663 = vpack.c.b16 %v2095, %v2087
    %v2664 = vpack.c.b16 %v2096, %v2088
    %v2665 = vpack.c.b16 %v2097, %v2089
    %v2666 = vpack.c.b16 %v2106, %v2098
    %v2667 = vpack.c.b16 %v2107, %v2099
    %v2668 = vpack.c.b16 %v2108, %v2100
    %v2669 = vpack.c.b16 %v2109, %v2101
    %v2670 = vpack.c.b16 %v2110, %v2102
    %v2671 = vpack.c.b16 %v2111, %v2103
    %v2672 = vpack.c.b16 %v2112, %v2104
    %v2673 = vpack.c.b16 %v2113, %v2105
    %v2674 = vpack.c.b16 %v2122, %v2114
    %v2675 = vpack.c.b16 %v2123, %v2115
    %v2676 = vpack.c.b16 %v2124, %v2116
    %v2677 = vpack.c.b16 %v2125, %v2117
    %v2678 = vpack.c.b16 %v2126, %v2118
    %v2679 = vpack.c.b16 %v2127, %v2119
    %v2680 = vpack.c.b16 %v2128, %v2120
    %v2681 = vpack.c.b16 %v2129, %v2121
    %v2682 = vpack.c.b16 %v2138, %v2130
    %v2683 = vpack.c.b16 %v2139, %v2131
    %v2684 = vpack.c.b16 %v2140, %v2132
    %v2685 = vpack.c.b16 %v2141, %v2133
    %v2686 = vpack.c.b16 %v2142, %v2134
    %v2687 = vpack.c.b16 %v2143, %v2135
    %v2688 = vpack.c.b16 %v2144, %v2136
    %v2689 = vpack.c.b16 %v2145, %v2137
    %v2690 = vpack.c.b16 %v2154, %v2146
    %v2691 = vpack.c.b16 %v2155, %v2147
    %v2692 = vpack.c.b16 %v2156, %v2148
    %v2693 = vpack.c.b16 %v2157, %v2149
    %v2694 = vpack.c.b16 %v2158, %v2150
    %v2695 = vpack.c.b16 %v2159, %v2151
    %v2696 = vpack.c.b16 %v2160, %v2152
    %v2697 = vpack.c.b16 %v2161, %v2153
    %v2698 = vpack.c.b16 %v2170, %v2162
    %v2699 = vpack.c.b16 %v2171, %v2163
    %v2700 = vpack.c.b16 %v2172, %v2164
    %v2701 = vpack.c.b16 %v2173, %v2165
    %v2702 = vpack.c.b16 %v2174, %v2166
    %v2703 = vpack.c.b16 %v2175, %v2167
    %v2704 = vpack.c.b16 %v2176, %v2168
    %v2705 = vpack.c.b16 %v2177, %v2169
    %v2706 = vpack.c.b16 %v2186, %v2178
    %v2707 = vpack.c.b16 %v2187, %v2179
    %v2708 = vpack.c.b16 %v2188, %v2180
    %v2709 = vpack.c.b16 %v2189, %v2181
    %v2710 = vpack.c.b16 %v2190, %v2182
    %v2711 = vpack.c.b16 %v2191, %v2183
    %v2712 = vpack.c.b16 %v2192, %v2184
    %v2713 = vpack.c.b16 %v2193, %v2185
    %v2714 = vpack.c.b16 %v2202, %v2194
    %v2715 = vpack.c.b16 %v2203, %v2195
    %v2716 = vpack.c.b16 %v2204, %v2196
    %v2717 = vpack.c.b16 %v2205, %v2197
    %v2718 = vpack.c.b16 %v2206, %v2198
    %v2719 = vpack.c.b16 %v2207, %v2199
    %v2720 = vpack.c.b16 %v2208, %v2200
    %v2721 = vpack.c.b16 %v2209, %v2201
    %3234 = vmatprep.subr.bf16.mxu0 %v2211
    %3235 = vmatpush1.bf16.msra.mxu0 %v2210
    %3236 = vmatprep.subr.bf16.mxu0 %v2219
    %3237 = vmatpush1.bf16.msra.mxu0 %v2218
    %3238 = vmatprep.subr.bf16.mxu0 %v2227
    %3239 = vmatpush1.bf16.msra.mxu0 %v2226
    %3240 = vmatprep.subr.bf16.mxu0 %v2235
    %3241 = vmatpush1.bf16.msra.mxu0 %v2234
    %3242 = vmatprep.subr.bf16.mxu0 %v2243
    %3243 = vmatpush1.bf16.msra.mxu0 %v2242
    %3244 = vmatprep.subr.bf16.mxu0 %v2251
    %3245 = vmatpush1.bf16.msra.mxu0 %v2250
    %3246 = vmatprep.subr.bf16.mxu0 %v2259
    %3247 = vmatpush1.bf16.msra.mxu0 %v2258
    %3248 = vmatprep.subr.bf16.mxu0 %v2267
    %3249 = vmatpush1.bf16.msra.mxu0 %v2266
    %3250 = vmatprep.subr.bf16.mxu0 %v2275
    %3251 = vmatpush1.bf16.msra.mxu0 %v2274
    %3252 = vmatprep.subr.bf16.mxu0 %v2283
    %3253 = vmatpush1.bf16.msra.mxu0 %v2282
    %3254 = vmatprep.subr.bf16.mxu0 %v2291
    %3255 = vmatpush1.bf16.msra.mxu0 %v2290
    %3256 = vmatprep.subr.bf16.mxu0 %v2299
    %3257 = vmatpush1.bf16.msra.mxu0 %v2298
    %3258 = vmatprep.subr.bf16.mxu0 %v2307
    %3259 = vmatpush1.bf16.msra.mxu0 %v2306
    %3260 = vmatprep.subr.bf16.mxu0 %v2315
    %3261 = vmatpush1.bf16.msra.mxu0 %v2314
    %3262 = vmatprep.subr.bf16.mxu0 %v2323
    %3263 = vmatpush1.bf16.msra.mxu0 %v2322
    %3264 = vmatprep.subr.bf16.mxu0 %v2331
    %3265 = vmatpush1.bf16.msra.mxu0 %v2330
    %3266 = vmatprep.mubr.bf16.mxu0 %v659
    %3267 = vmatmul.mubr.bf16.gmra.mrb[0].mxu0 %v658
    %v3268 = vpop.f32.mrb[0].mxu0
    %v3269 = vadd.f32 %v597, %v3268
    %v3270 = vpop.f32.mrb[0].mxu0
    %v3271 = vadd.f32 %v601, %v3270
    %v3272 = vpop.f32.mrb[0].mxu0
    %v3273 = vadd.f32 %v597, %v3272
    %v3274 = vpop.f32.mrb[0].mxu0
    %v3275 = vadd.f32 %v601, %v3274
    %3276 = vdwg.mxu0
    %3277 = vmatprep.subr.bf16.mxu0 %v2339
    %3278 = vmatpush1.bf16.msra.mxu0 %v2338
    %3279 = vmatprep.subr.bf16.mxu0 %v2347
    %3280 = vmatpush1.bf16.msra.mxu0 %v2346
    %3281 = vmatprep.subr.bf16.mxu0 %v2355
    %3282 = vmatpush1.bf16.msra.mxu0 %v2354
    %3283 = vmatprep.subr.bf16.mxu0 %v2363
    %3284 = vmatpush1.bf16.msra.mxu0 %v2362
    %3285 = vmatprep.subr.bf16.mxu0 %v2371
    %3286 = vmatpush1.bf16.msra.mxu0 %v2370
    %3287 = vmatprep.subr.bf16.mxu0 %v2379
    %3288 = vmatpush1.bf16.msra.mxu0 %v2378
    %3289 = vmatprep.subr.bf16.mxu0 %v2387
    %3290 = vmatpush1.bf16.msra.mxu0 %v2386
    %3291 = vmatprep.subr.bf16.mxu0 %v2395
    %3292 = vmatpush1.bf16.msra.mxu0 %v2394
    %3293 = vmatprep.subr.bf16.mxu0 %v2403
    %3294 = vmatpush1.bf16.msra.mxu0 %v2402
    %3295 = vmatprep.subr.bf16.mxu0 %v2411
    %3296 = vmatpush1.bf16.msra.mxu0 %v2410
    %3297 = vmatprep.subr.bf16.mxu0 %v2419
    %3298 = vmatpush1.bf16.msra.mxu0 %v2418
    %3299 = vmatprep.subr.bf16.mxu0 %v2427
    %3300 = vmatpush1.bf16.msra.mxu0 %v2426
    %3301 = vmatprep.subr.bf16.mxu0 %v2435
    %3302 = vmatpush1.bf16.msra.mxu0 %v2434
    %3303 = vmatprep.subr.bf16.mxu0 %v2443
    %3304 = vmatpush1.bf16.msra.mxu0 %v2442
    %3305 = vmatprep.subr.bf16.mxu0 %v2451
    %3306 = vmatpush1.bf16.msra.mxu0 %v2450
    %3307 = vmatprep.subr.bf16.mxu0 %v2459
    %3308 = vmatpush1.bf16.msra.mxu0 %v2458
    %3309 = vmatprep.mubr.bf16.mxu0 %v661
    %3310 = vmatmul.mubr.bf16.gmra.mrb[0].mxu0 %v660
    %v3311 = vpop.f32.mrb[0].mxu0
    %v3312 = vadd.f32 %v3269, %v3311
    %v3313 = vpop.f32.mrb[0].mxu0
    %v3314 = vadd.f32 %v3271, %v3313
    %v3315 = vpop.f32.mrb[0].mxu0
    %v3316 = vadd.f32 %v3273, %v3315
    %v3317 = vpop.f32.mrb[0].mxu0
    %v3318 = vadd.f32 %v3275, %v3317
    %3319 = vdwg.mxu0
    %3320 = vmatprep.subr.bf16.mxu0 %v2467
    %3321 = vmatpush1.bf16.msra.mxu0 %v2466
    %3322 = vmatprep.subr.bf16.mxu0 %v2475
    %3323 = vmatpush1.bf16.msra.mxu0 %v2474
    %3324 = vmatprep.subr.bf16.mxu0 %v2483
    %3325 = vmatpush1.bf16.msra.mxu0 %v2482
    %3326 = vmatprep.subr.bf16.mxu0 %v2491
    %3327 = vmatpush1.bf16.msra.mxu0 %v2490
    %3328 = vmatprep.subr.bf16.mxu0 %v2499
    %3329 = vmatpush1.bf16.msra.mxu0 %v2498
    %3330 = vmatprep.subr.bf16.mxu0 %v2507
    %3331 = vmatpush1.bf16.msra.mxu0 %v2506
    %3332 = vmatprep.subr.bf16.mxu0 %v2515
    %3333 = vmatpush1.bf16.msra.mxu0 %v2514
    %3334 = vmatprep.subr.bf16.mxu0 %v2523
    %3335 = vmatpush1.bf16.msra.mxu0 %v2522
    %3336 = vmatprep.subr.bf16.mxu0 %v2531
    %3337 = vmatpush1.bf16.msra.mxu0 %v2530
    %3338 = vmatprep.subr.bf16.mxu0 %v2539
    %3339 = vmatpush1.bf16.msra.mxu0 %v2538
    %3340 = vmatprep.subr.bf16.mxu0 %v2547
    %3341 = vmatpush1.bf16.msra.mxu0 %v2546
    %3342 = vmatprep.subr.bf16.mxu0 %v2555
    %3343 = vmatpush1.bf16.msra.mxu0 %v2554
    %3344 = vmatprep.subr.bf16.mxu0 %v2563
    %3345 = vmatpush1.bf16.msra.mxu0 %v2562
    %3346 = vmatprep.subr.bf16.mxu0 %v2571
    %3347 = vmatpush1.bf16.msra.mxu0 %v2570
    %3348 = vmatprep.subr.bf16.mxu0 %v2579
    %3349 = vmatpush1.bf16.msra.mxu0 %v2578
    %3350 = vmatprep.subr.bf16.mxu0 %v2587
    %3351 = vmatpush1.bf16.msra.mxu0 %v2586
    %3352 = vmatprep.mubr.bf16.mxu0 %v663
    %3353 = vmatmul.mubr.bf16.gmra.mrb[0].mxu0 %v662
    %v3354 = vpop.f32.mrb[0].mxu0
    %v3355 = vadd.f32 %v3312, %v3354
    %v3356 = vpop.f32.mrb[0].mxu0
    %v3357 = vadd.f32 %v3314, %v3356
    %v3358 = vpop.f32.mrb[0].mxu0
    %v3359 = vadd.f32 %v3316, %v3358
    %v3360 = vpop.f32.mrb[0].mxu0
    %v3361 = vadd.f32 %v3318, %v3360
    %3362 = vdwg.mxu0
    %3363 = vmatprep.subr.bf16.mxu0 %v2595
    %3364 = vmatpush1.bf16.msra.mxu0 %v2594
    %3365 = vmatprep.subr.bf16.mxu0 %v2603
    %3366 = vmatpush1.bf16.msra.mxu0 %v2602
    %3367 = vmatprep.subr.bf16.mxu0 %v2611
    %3368 = vmatpush1.bf16.msra.mxu0 %v2610
    %3369 = vmatprep.subr.bf16.mxu0 %v2619
    %3370 = vmatpush1.bf16.msra.mxu0 %v2618
    %3371 = vmatprep.subr.bf16.mxu0 %v2627
    %3372 = vmatpush1.bf16.msra.mxu0 %v2626
    %3373 = vmatprep.subr.bf16.mxu0 %v2635
    %3374 = vmatpush1.bf16.msra.mxu0 %v2634
    %3375 = vmatprep.subr.bf16.mxu0 %v2643
    %3376 = vmatpush1.bf16.msra.mxu0 %v2642
    %3377 = vmatprep.subr.bf16.mxu0 %v2651
    %3378 = vmatpush1.bf16.msra.mxu0 %v2650
    %3379 = vmatprep.subr.bf16.mxu0 %v2659
    %3380 = vmatpush1.bf16.msra.mxu0 %v2658
    %3381 = vmatprep.subr.bf16.mxu0 %v2667
    %3382 = vmatpush1.bf16.msra.mxu0 %v2666
    %3383 = vmatprep.subr.bf16.mxu0 %v2675
    %3384 = vmatpush1.bf16.msra.mxu0 %v2674
    %3385 = vmatprep.subr.bf16.mxu0 %v2683
    %3386 = vmatpush1.bf16.msra.mxu0 %v2682
    %3387 = vmatprep.subr.bf16.mxu0 %v2691
    %3388 = vmatpush1.bf16.msra.mxu0 %v2690
    %3389 = vmatprep.subr.bf16.mxu0 %v2699
    %3390 = vmatpush1.bf16.msra.mxu0 %v2698
    %3391 = vmatprep.subr.bf16.mxu0 %v2707
    %3392 = vmatpush1.bf16.msra.mxu0 %v2706
    %3393 = vmatprep.subr.bf16.mxu0 %v2715
    %3394 = vmatpush1.bf16.msra.mxu0 %v2714
    %3395 = vmatprep.mubr.bf16.mxu0 %v665
    %3396 = vmatmul.mubr.bf16.gmra.mrb[0].mxu0 %v664
    %v3397 = vpop.f32.mrb[0].mxu0
    %v3398 = vadd.f32 %v3355, %v3397
    %v3399 = vpop.f32.mrb[0].mxu0
    %v3400 = vadd.f32 %v3357, %v3399
    %v3401 = vpop.f32.mrb[0].mxu0
    %v3402 = vadd.f32 %v3359, %v3401
    %v3403 = vpop.f32.mrb[0].mxu0
    %v3404 = vadd.f32 %v3361, %v3403
    %3405 = vdwg.mxu0
    %3406 = vmatprep.subr.bf16.mxu0 %v2213
    %3407 = vmatpush1.bf16.msra.mxu0 %v2212
    %3408 = vmatprep.subr.bf16.mxu0 %v2221
    %3409 = vmatpush1.bf16.msra.mxu0 %v2220
    %3410 = vmatprep.subr.bf16.mxu0 %v2229
    %3411 = vmatpush1.bf16.msra.mxu0 %v2228
    %3412 = vmatprep.subr.bf16.mxu0 %v2237
    %3413 = vmatpush1.bf16.msra.mxu0 %v2236
    %3414 = vmatprep.subr.bf16.mxu0 %v2245
    %3415 = vmatpush1.bf16.msra.mxu0 %v2244
    %3416 = vmatprep.subr.bf16.mxu0 %v2253
    %3417 = vmatpush1.bf16.msra.mxu0 %v2252
    %3418 = vmatprep.subr.bf16.mxu0 %v2261
    %3419 = vmatpush1.bf16.msra.mxu0 %v2260
    %3420 = vmatprep.subr.bf16.mxu0 %v2269
    %3421 = vmatpush1.bf16.msra.mxu0 %v2268
    %3422 = vmatprep.subr.bf16.mxu0 %v2277
    %3423 = vmatpush1.bf16.msra.mxu0 %v2276
    %3424 = vmatprep.subr.bf16.mxu0 %v2285
    %3425 = vmatpush1.bf16.msra.mxu0 %v2284
    %3426 = vmatprep.subr.bf16.mxu0 %v2293
    %3427 = vmatpush1.bf16.msra.mxu0 %v2292
    %3428 = vmatprep.subr.bf16.mxu0 %v2301
    %3429 = vmatpush1.bf16.msra.mxu0 %v2300
    %3430 = vmatprep.subr.bf16.mxu0 %v2309
    %3431 = vmatpush1.bf16.msra.mxu0 %v2308
    %3432 = vmatprep.subr.bf16.mxu0 %v2317
    %3433 = vmatpush1.bf16.msra.mxu0 %v2316
    %3434 = vmatprep.subr.bf16.mxu0 %v2325
    %3435 = vmatpush1.bf16.msra.mxu0 %v2324
    %3436 = vmatprep.subr.bf16.mxu0 %v2333
    %3437 = vmatpush1.bf16.msra.mxu0 %v2332
    %3438 = vmatprep.mubr.bf16.mxu0 %v659
    %3439 = vmatmul.mubr.bf16.gmra.mrb[0].mxu0 %v658
    %v3440 = vpop.f32.mrb[0].mxu0
    %v3441 = vadd.f32 %v605, %v3440
    %v3442 = vpop.f32.mrb[0].mxu0
    %v3443 = vadd.f32 %v609, %v3442
    %v3444 = vpop.f32.mrb[0].mxu0
    %v3445 = vadd.f32 %v605, %v3444
    %v3446 = vpop.f32.mrb[0].mxu0
    %v3447 = vadd.f32 %v609, %v3446
    %3448 = vdwg.mxu0
    %3449 = vmatprep.subr.bf16.mxu0 %v2341
    %3450 = vmatpush1.bf16.msra.mxu0 %v2340
    %3451 = vmatprep.subr.bf16.mxu0 %v2349
    %3452 = vmatpush1.bf16.msra.mxu0 %v2348
    %3453 = vmatprep.subr.bf16.mxu0 %v2357
    %3454 = vmatpush1.bf16.msra.mxu0 %v2356
    %3455 = vmatprep.subr.bf16.mxu0 %v2365
    %3456 = vmatpush1.bf16.msra.mxu0 %v2364
    %3457 = vmatprep.subr.bf16.mxu0 %v2373
    %3458 = vmatpush1.bf16.msra.mxu0 %v2372
    %3459 = vmatprep.subr.bf16.mxu0 %v2381
    %3460 = vmatpush1.bf16.msra.mxu0 %v2380
    %3461 = vmatprep.subr.bf16.mxu0 %v2389
    %3462 = vmatpush1.bf16.msra.mxu0 %v2388
    %3463 = vmatprep.subr.bf16.mxu0 %v2397
    %3464 = vmatpush1.bf16.msra.mxu0 %v2396
    %3465 = vmatprep.subr.bf16.mxu0 %v2405
    %3466 = vmatpush1.bf16.msra.mxu0 %v2404
    %3467 = vmatprep.subr.bf16.mxu0 %v2413
    %3468 = vmatpush1.bf16.msra.mxu0 %v2412
    %3469 = vmatprep.subr.bf16.mxu0 %v2421
    %3470 = vmatpush1.bf16.msra.mxu0 %v2420
    %3471 = vmatprep.subr.bf16.mxu0 %v2429
    %3472 = vmatpush1.bf16.msra.mxu0 %v2428
    %3473 = vmatprep.subr.bf16.mxu0 %v2437
    %3474 = vmatpush1.bf16.msra.mxu0 %v2436
    %3475 = vmatprep.subr.bf16.mxu0 %v2445
    %3476 = vmatpush1.bf16.msra.mxu0 %v2444
    %3477 = vmatprep.subr.bf16.mxu0 %v2453
    %3478 = vmatpush1.bf16.msra.mxu0 %v2452
    %3479 = vmatprep.subr.bf16.mxu0 %v2461
    %3480 = vmatpush1.bf16.msra.mxu0 %v2460
    %3481 = vmatprep.mubr.bf16.mxu0 %v661
    %3482 = vmatmul.mubr.bf16.gmra.mrb[0].mxu0 %v660
    %v3483 = vpop.f32.mrb[0].mxu0
    %v3484 = vadd.f32 %v3441, %v3483
    %v3485 = vpop.f32.mrb[0].mxu0
    %v3486 = vadd.f32 %v3443, %v3485
    %v3487 = vpop.f32.mrb[0].mxu0
    %v3488 = vadd.f32 %v3445, %v3487
    %v3489 = vpop.f32.mrb[0].mxu0
    %v3490 = vadd.f32 %v3447, %v3489
    %3491 = vdwg.mxu0
    %3492 = vmatprep.subr.bf16.mxu0 %v2469
    %3493 = vmatpush1.bf16.msra.mxu0 %v2468
    %3494 = vmatprep.subr.bf16.mxu0 %v2477
    %3495 = vmatpush1.bf16.msra.mxu0 %v2476
    %3496 = vmatprep.subr.bf16.mxu0 %v2485
    %3497 = vmatpush1.bf16.msra.mxu0 %v2484
    %3498 = vmatprep.subr.bf16.mxu0 %v2493
    %3499 = vmatpush1.bf16.msra.mxu0 %v2492
    %3500 = vmatprep.subr.bf16.mxu0 %v2501
    %3501 = vmatpush1.bf16.msra.mxu0 %v2500
    %3502 = vmatprep.subr.bf16.mxu0 %v2509
    %3503 = vmatpush1.bf16.msra.mxu0 %v2508
    %3504 = vmatprep.subr.bf16.mxu0 %v2517
    %3505 = vmatpush1.bf16.msra.mxu0 %v2516
    %3506 = vmatprep.subr.bf16.mxu0 %v2525
    %3507 = vmatpush1.bf16.msra.mxu0 %v2524
    %3508 = vmatprep.subr.bf16.mxu0 %v2533
    %3509 = vmatpush1.bf16.msra.mxu0 %v2532
    %3510 = vmatprep.subr.bf16.mxu0 %v2541
    %3511 = vmatpush1.bf16.msra.mxu0 %v2540
    %3512 = vmatprep.subr.bf16.mxu0 %v2549
    %3513 = vmatpush1.bf16.msra.mxu0 %v2548
    %3514 = vmatprep.subr.bf16.mxu0 %v2557
    %3515 = vmatpush1.bf16.msra.mxu0 %v2556
    %3516 = vmatprep.subr.bf16.mxu0 %v2565
    %3517 = vmatpush1.bf16.msra.mxu0 %v2564
    %3518 = vmatprep.subr.bf16.mxu0 %v2573
    %3519 = vmatpush1.bf16.msra.mxu0 %v2572
    %3520 = vmatprep.subr.bf16.mxu0 %v2581
    %3521 = vmatpush1.bf16.msra.mxu0 %v2580
    %3522 = vmatprep.subr.bf16.mxu0 %v2589
    %3523 = vmatpush1.bf16.msra.mxu0 %v2588
    %3524 = vmatprep.mubr.bf16.mxu0 %v663
    %3525 = vmatmul.mubr.bf16.gmra.mrb[0].mxu0 %v662
    %v3526 = vpop.f32.mrb[0].mxu0
    %v3527 = vadd.f32 %v3484, %v3526
    %v3528 = vpop.f32.mrb[0].mxu0
    %v3529 = vadd.f32 %v3486, %v3528
    %v3530 = vpop.f32.mrb[0].mxu0
    %v3531 = vadd.f32 %v3488, %v3530
    %v3532 = vpop.f32.mrb[0].mxu0
    %v3533 = vadd.f32 %v3490, %v3532
    %3534 = vdwg.mxu0
    %3535 = vmatprep.subr.bf16.mxu0 %v2597
    %3536 = vmatpush1.bf16.msra.mxu0 %v2596
    %3537 = vmatprep.subr.bf16.mxu0 %v2605
    %3538 = vmatpush1.bf16.msra.mxu0 %v2604
    %3539 = vmatprep.subr.bf16.mxu0 %v2613
    %3540 = vmatpush1.bf16.msra.mxu0 %v2612
    %3541 = vmatprep.subr.bf16.mxu0 %v2621
    %3542 = vmatpush1.bf16.msra.mxu0 %v2620
    %3543 = vmatprep.subr.bf16.mxu0 %v2629
    %3544 = vmatpush1.bf16.msra.mxu0 %v2628
    %3545 = vmatprep.subr.bf16.mxu0 %v2637
    %3546 = vmatpush1.bf16.msra.mxu0 %v2636
    %3547 = vmatprep.subr.bf16.mxu0 %v2645
    %3548 = vmatpush1.bf16.msra.mxu0 %v2644
    %3549 = vmatprep.subr.bf16.mxu0 %v2653
    %3550 = vmatpush1.bf16.msra.mxu0 %v2652
    %3551 = vmatprep.subr.bf16.mxu0 %v2661
    %3552 = vmatpush1.bf16.msra.mxu0 %v2660
    %3553 = vmatprep.subr.bf16.mxu0 %v2669
    %3554 = vmatpush1.bf16.msra.mxu0 %v2668
    %3555 = vmatprep.subr.bf16.mxu0 %v2677
    %3556 = vmatpush1.bf16.msra.mxu0 %v2676
    %3557 = vmatprep.subr.bf16.mxu0 %v2685
    %3558 = vmatpush1.bf16.msra.mxu0 %v2684
    %3559 = vmatprep.subr.bf16.mxu0 %v2693
    %3560 = vmatpush1.bf16.msra.mxu0 %v2692
    %3561 = vmatprep.subr.bf16.mxu0 %v2701
    %3562 = vmatpush1.bf16.msra.mxu0 %v2700
    %3563 = vmatprep.subr.bf16.mxu0 %v2709
    %3564 = vmatpush1.bf16.msra.mxu0 %v2708
    %3565 = vmatprep.subr.bf16.mxu0 %v2717
    %3566 = vmatpush1.bf16.msra.mxu0 %v2716
    %3567 = vmatprep.mubr.bf16.mxu0 %v665
    %3568 = vmatmul.mubr.bf16.gmra.mrb[0].mxu0 %v664
    %v3569 = vpop.f32.mrb[0].mxu0
    %v3570 = vadd.f32 %v3527, %v3569
    %v3571 = vpop.f32.mrb[0].mxu0
    %v3572 = vadd.f32 %v3529, %v3571
    %v3573 = vpop.f32.mrb[0].mxu0
    %v3574 = vadd.f32 %v3531, %v3573
    %v3575 = vpop.f32.mrb[0].mxu0
    %v3576 = vadd.f32 %v3533, %v3575
    %3577 = vdwg.mxu0
    %3578 = vmatprep.subr.bf16.mxu0 %v2215
    %3579 = vmatpush1.bf16.msra.mxu0 %v2214
    %3580 = vmatprep.subr.bf16.mxu0 %v2223
    %3581 = vmatpush1.bf16.msra.mxu0 %v2222
    %3582 = vmatprep.subr.bf16.mxu0 %v2231
    %3583 = vmatpush1.bf16.msra.mxu0 %v2230
    %3584 = vmatprep.subr.bf16.mxu0 %v2239
    %3585 = vmatpush1.bf16.msra.mxu0 %v2238
    %3586 = vmatprep.subr.bf16.mxu0 %v2247
    %3587 = vmatpush1.bf16.msra.mxu0 %v2246
    %3588 = vmatprep.subr.bf16.mxu0 %v2255
    %3589 = vmatpush1.bf16.msra.mxu0 %v2254
    %3590 = vmatprep.subr.bf16.mxu0 %v2263
    %3591 = vmatpush1.bf16.msra.mxu0 %v2262
    %3592 = vmatprep.subr.bf16.mxu0 %v2271
    %3593 = vmatpush1.bf16.msra.mxu0 %v2270
    %3594 = vmatprep.subr.bf16.mxu0 %v2279
    %3595 = vmatpush1.bf16.msra.mxu0 %v2278
    %3596 = vmatprep.subr.bf16.mxu0 %v2287
    %3597 = vmatpush1.bf16.msra.mxu0 %v2286
    %3598 = vmatprep.subr.bf16.mxu0 %v2295
    %3599 = vmatpush1.bf16.msra.mxu0 %v2294
    %3600 = vmatprep.subr.bf16.mxu0 %v2303
    %3601 = vmatpush1.bf16.msra.mxu0 %v2302
    %3602 = vmatprep.subr.bf16.mxu0 %v2311
    %3603 = vmatpush1.bf16.msra.mxu0 %v2310
    %3604 = vmatprep.subr.bf16.mxu0 %v2319
    %3605 = vmatpush1.bf16.msra.mxu0 %v2318
    %3606 = vmatprep.subr.bf16.mxu0 %v2327
    %3607 = vmatpush1.bf16.msra.mxu0 %v2326
    %3608 = vmatprep.subr.bf16.mxu0 %v2335
    %3609 = vmatpush1.bf16.msra.mxu0 %v2334
    %3610 = vmatprep.mubr.bf16.mxu0 %v659
    %3611 = vmatmul.mubr.bf16.gmra.mrb[0].mxu0 %v658
    %v3612 = vpop.f32.mrb[0].mxu0
    %v3613 = vadd.f32 %v613, %v3612
    %v3614 = vpop.f32.mrb[0].mxu0
    %v3615 = vadd.f32 %v617, %v3614
    %v3616 = vpop.f32.mrb[0].mxu0
    %v3617 = vadd.f32 %v613, %v3616
    %v3618 = vpop.f32.mrb[0].mxu0
    %v3619 = vadd.f32 %v617, %v3618
    %3620 = vdwg.mxu0
    %3621 = vmatprep.subr.bf16.mxu0 %v2343
    %3622 = vmatpush1.bf16.msra.mxu0 %v2342
    %3623 = vmatprep.subr.bf16.mxu0 %v2351
    %3624 = vmatpush1.bf16.msra.mxu0 %v2350
    %3625 = vmatprep.subr.bf16.mxu0 %v2359
    %3626 = vmatpush1.bf16.msra.mxu0 %v2358
    %3627 = vmatprep.subr.bf16.mxu0 %v2367
    %3628 = vmatpush1.bf16.msra.mxu0 %v2366
    %3629 = vmatprep.subr.bf16.mxu0 %v2375
    %3630 = vmatpush1.bf16.msra.mxu0 %v2374
    %3631 = vmatprep.subr.bf16.mxu0 %v2383
    %3632 = vmatpush1.bf16.msra.mxu0 %v2382
    %3633 = vmatprep.subr.bf16.mxu0 %v2391
    %3634 = vmatpush1.bf16.msra.mxu0 %v2390
    %3635 = vmatprep.subr.bf16.mxu0 %v2399
    %3636 = vmatpush1.bf16.msra.mxu0 %v2398
    %3637 = vmatprep.subr.bf16.mxu0 %v2407
    %3638 = vmatpush1.bf16.msra.mxu0 %v2406
    %3639 = vmatprep.subr.bf16.mxu0 %v2415
    %3640 = vmatpush1.bf16.msra.mxu0 %v2414
    %3641 = vmatprep.subr.bf16.mxu0 %v2423
    %3642 = vmatpush1.bf16.msra.mxu0 %v2422
    %3643 = vmatprep.subr.bf16.mxu0 %v2431
    %3644 = vmatpush1.bf16.msra.mxu0 %v2430
    %3645 = vmatprep.subr.bf16.mxu0 %v2439
    %3646 = vmatpush1.bf16.msra.mxu0 %v2438
    %3647 = vmatprep.subr.bf16.mxu0 %v2447
    %3648 = vmatpush1.bf16.msra.mxu0 %v2446
    %3649 = vmatprep.subr.bf16.mxu0 %v2455
    %3650 = vmatpush1.bf16.msra.mxu0 %v2454
    %3651 = vmatprep.subr.bf16.mxu0 %v2463
    %3652 = vmatpush1.bf16.msra.mxu0 %v2462
    %3653 = vmatprep.mubr.bf16.mxu0 %v661
    %3654 = vmatmul.mubr.bf16.gmra.mrb[0].mxu0 %v660
    %v3655 = vpop.f32.mrb[0].mxu0
    %v3656 = vadd.f32 %v3613, %v3655
    %v3657 = vpop.f32.mrb[0].mxu0
    %v3658 = vadd.f32 %v3615, %v3657
    %v3659 = vpop.f32.mrb[0].mxu0
    %v3660 = vadd.f32 %v3617, %v3659
    %v3661 = vpop.f32.mrb[0].mxu0
    %v3662 = vadd.f32 %v3619, %v3661
    %3663 = vdwg.mxu0
    %3664 = vmatprep.subr.bf16.mxu0 %v2471
    %3665 = vmatpush1.bf16.msra.mxu0 %v2470
    %3666 = vmatprep.subr.bf16.mxu0 %v2479
    %3667 = vmatpush1.bf16.msra.mxu0 %v2478
    %3668 = vmatprep.subr.bf16.mxu0 %v2487
    %3669 = vmatpush1.bf16.msra.mxu0 %v2486
    %3670 = vmatprep.subr.bf16.mxu0 %v2495
    %3671 = vmatpush1.bf16.msra.mxu0 %v2494
    %3672 = vmatprep.subr.bf16.mxu0 %v2503
    %3673 = vmatpush1.bf16.msra.mxu0 %v2502
    %3674 = vmatprep.subr.bf16.mxu0 %v2511
    %3675 = vmatpush1.bf16.msra.mxu0 %v2510
    %3676 = vmatprep.subr.bf16.mxu0 %v2519
    %3677 = vmatpush1.bf16.msra.mxu0 %v2518
    %3678 = vmatprep.subr.bf16.mxu0 %v2527
    %3679 = vmatpush1.bf16.msra.mxu0 %v2526
    %3680 = vmatprep.subr.bf16.mxu0 %v2535
    %3681 = vmatpush1.bf16.msra.mxu0 %v2534
    %3682 = vmatprep.subr.bf16.mxu0 %v2543
    %3683 = vmatpush1.bf16.msra.mxu0 %v2542
    %3684 = vmatprep.subr.bf16.mxu0 %v2551
    %3685 = vmatpush1.bf16.msra.mxu0 %v2550
    %3686 = vmatprep.subr.bf16.mxu0 %v2559
    %3687 = vmatpush1.bf16.msra.mxu0 %v2558
    %3688 = vmatprep.subr.bf16.mxu0 %v2567
    %3689 = vmatpush1.bf16.msra.mxu0 %v2566
    %3690 = vmatprep.subr.bf16.mxu0 %v2575
    %3691 = vmatpush1.bf16.msra.mxu0 %v2574
    %3692 = vmatprep.subr.bf16.mxu0 %v2583
    %3693 = vmatpush1.bf16.msra.mxu0 %v2582
    %3694 = vmatprep.subr.bf16.mxu0 %v2591
    %3695 = vmatpush1.bf16.msra.mxu0 %v2590
    %3696 = vmatprep.mubr.bf16.mxu0 %v663
    %3697 = vmatmul.mubr.bf16.gmra.mrb[0].mxu0 %v662
    %v3698 = vpop.f32.mrb[0].mxu0
    %v3699 = vadd.f32 %v3656, %v3698
    %v3700 = vpop.f32.mrb[0].mxu0
    %v3701 = vadd.f32 %v3658, %v3700
    %v3702 = vpop.f32.mrb[0].mxu0
    %v3703 = vadd.f32 %v3660, %v3702
    %v3704 = vpop.f32.mrb[0].mxu0
    %v3705 = vadd.f32 %v3662, %v3704
    %3706 = vdwg.mxu0
    %3707 = vmatprep.subr.bf16.mxu0 %v2599
    %3708 = vmatpush1.bf16.msra.mxu0 %v2598
    %3709 = vmatprep.subr.bf16.mxu0 %v2607
    %3710 = vmatpush1.bf16.msra.mxu0 %v2606
    %3711 = vmatprep.subr.bf16.mxu0 %v2615
    %3712 = vmatpush1.bf16.msra.mxu0 %v2614
    %3713 = vmatprep.subr.bf16.mxu0 %v2623
    %3714 = vmatpush1.bf16.msra.mxu0 %v2622
    %3715 = vmatprep.subr.bf16.mxu0 %v2631
    %3716 = vmatpush1.bf16.msra.mxu0 %v2630
    %3717 = vmatprep.subr.bf16.mxu0 %v2639
    %3718 = vmatpush1.bf16.msra.mxu0 %v2638
    %3719 = vmatprep.subr.bf16.mxu0 %v2647
    %3720 = vmatpush1.bf16.msra.mxu0 %v2646
    %3721 = vmatprep.subr.bf16.mxu0 %v2655
    %3722 = vmatpush1.bf16.msra.mxu0 %v2654
    %3723 = vmatprep.subr.bf16.mxu0 %v2663
    %3724 = vmatpush1.bf16.msra.mxu0 %v2662
    %3725 = vmatprep.subr.bf16.mxu0 %v2671
    %3726 = vmatpush1.bf16.msra.mxu0 %v2670
    %3727 = vmatprep.subr.bf16.mxu0 %v2679
    %3728 = vmatpush1.bf16.msra.mxu0 %v2678
    %3729 = vmatprep.subr.bf16.mxu0 %v2687
    %3730 = vmatpush1.bf16.msra.mxu0 %v2686
    %3731 = vmatprep.subr.bf16.mxu0 %v2695
    %3732 = vmatpush1.bf16.msra.mxu0 %v2694
    %3733 = vmatprep.subr.bf16.mxu0 %v2703
    %3734 = vmatpush1.bf16.msra.mxu0 %v2702
    %3735 = vmatprep.subr.bf16.mxu0 %v2711
    %3736 = vmatpush1.bf16.msra.mxu0 %v2710
    %3737 = vmatprep.subr.bf16.mxu0 %v2719
    %3738 = vmatpush1.bf16.msra.mxu0 %v2718
    %3739 = vmatprep.mubr.bf16.mxu0 %v665
    %3740 = vmatmul.mubr.bf16.gmra.mrb[0].mxu0 %v664
    %v3741 = vpop.f32.mrb[0].mxu0
    %v3742 = vadd.f32 %v3699, %v3741
    %v3743 = vpop.f32.mrb[0].mxu0
    %v3744 = vadd.f32 %v3701, %v3743
    %v3745 = vpop.f32.mrb[0].mxu0
    %v3746 = vadd.f32 %v3703, %v3745
    %v3747 = vpop.f32.mrb[0].mxu0
    %v3748 = vadd.f32 %v3705, %v3747
    %3749 = vdwg.mxu0
    %3750 = vmatprep.subr.bf16.mxu0 %v2217
    %3751 = vmatpush1.bf16.msra.mxu0 %v2216
    %3752 = vmatprep.subr.bf16.mxu0 %v2225
    %3753 = vmatpush1.bf16.msra.mxu0 %v2224
    %3754 = vmatprep.subr.bf16.mxu0 %v2233
    %3755 = vmatpush1.bf16.msra.mxu0 %v2232
    %3756 = vmatprep.subr.bf16.mxu0 %v2241
    %3757 = vmatpush1.bf16.msra.mxu0 %v2240
    %3758 = vmatprep.subr.bf16.mxu0 %v2249
    %3759 = vmatpush1.bf16.msra.mxu0 %v2248
    %3760 = vmatprep.subr.bf16.mxu0 %v2257
    %3761 = vmatpush1.bf16.msra.mxu0 %v2256
    %3762 = vmatprep.subr.bf16.mxu0 %v2265
    %3763 = vmatpush1.bf16.msra.mxu0 %v2264
    %3764 = vmatprep.subr.bf16.mxu0 %v2273
    %3765 = vmatpush1.bf16.msra.mxu0 %v2272
    %3766 = vmatprep.subr.bf16.mxu0 %v2281
    %3767 = vmatpush1.bf16.msra.mxu0 %v2280
    %3768 = vmatprep.subr.bf16.mxu0 %v2289
    %3769 = vmatpush1.bf16.msra.mxu0 %v2288
    %3770 = vmatprep.subr.bf16.mxu0 %v2297
    %3771 = vmatpush1.bf16.msra.mxu0 %v2296
    %3772 = vmatprep.subr.bf16.mxu0 %v2305
    %3773 = vmatpush1.bf16.msra.mxu0 %v2304
    %3774 = vmatprep.subr.bf16.mxu0 %v2313
    %3775 = vmatpush1.bf16.msra.mxu0 %v2312
    %3776 = vmatprep.subr.bf16.mxu0 %v2321
    %3777 = vmatpush1.bf16.msra.mxu0 %v2320
    %3778 = vmatprep.subr.bf16.mxu0 %v2329
    %3779 = vmatpush1.bf16.msra.mxu0 %v2328
    %3780 = vmatprep.subr.bf16.mxu0 %v2337
    %3781 = vmatpush1.bf16.msra.mxu0 %v2336
    %3782 = vmatprep.mubr.bf16.mxu0 %v659
    %3783 = vmatmul.mubr.bf16.gmra.mrb[0].mxu0 %v658
    %v3784 = vpop.f32.mrb[0].mxu0
    %v3785 = vadd.f32 %v621, %v3784
    %v3786 = vpop.f32.mrb[0].mxu0
    %v3787 = vadd.f32 %v625, %v3786
    %v3788 = vpop.f32.mrb[0].mxu0
    %v3789 = vadd.f32 %v621, %v3788
    %v3790 = vpop.f32.mrb[0].mxu0
    %v3791 = vadd.f32 %v625, %v3790
    %3792 = vdwg.mxu0
    %3793 = vmatprep.subr.bf16.mxu0 %v2345
    %3794 = vmatpush1.bf16.msra.mxu0 %v2344
    %3795 = vmatprep.subr.bf16.mxu0 %v2353
    %3796 = vmatpush1.bf16.msra.mxu0 %v2352
    %3797 = vmatprep.subr.bf16.mxu0 %v2361
    %3798 = vmatpush1.bf16.msra.mxu0 %v2360
    %3799 = vmatprep.subr.bf16.mxu0 %v2369
    %3800 = vmatpush1.bf16.msra.mxu0 %v2368
    %3801 = vmatprep.subr.bf16.mxu0 %v2377
    %3802 = vmatpush1.bf16.msra.mxu0 %v2376
    %3803 = vmatprep.subr.bf16.mxu0 %v2385
    %3804 = vmatpush1.bf16.msra.mxu0 %v2384
    %3805 = vmatprep.subr.bf16.mxu0 %v2393
    %3806 = vmatpush1.bf16.msra.mxu0 %v2392
    %3807 = vmatprep.subr.bf16.mxu0 %v2401
    %3808 = vmatpush1.bf16.msra.mxu0 %v2400
    %3809 = vmatprep.subr.bf16.mxu0 %v2409
    %3810 = vmatpush1.bf16.msra.mxu0 %v2408
    %3811 = vmatprep.subr.bf16.mxu0 %v2417
    %3812 = vmatpush1.bf16.msra.mxu0 %v2416
    %3813 = vmatprep.subr.bf16.mxu0 %v2425
    %3814 = vmatpush1.bf16.msra.mxu0 %v2424
    %3815 = vmatprep.subr.bf16.mxu0 %v2433
    %3816 = vmatpush1.bf16.msra.mxu0 %v2432
    %3817 = vmatprep.subr.bf16.mxu0 %v2441
    %3818 = vmatpush1.bf16.msra.mxu0 %v2440
    %3819 = vmatprep.subr.bf16.mxu0 %v2449
    %3820 = vmatpush1.bf16.msra.mxu0 %v2448
    %3821 = vmatprep.subr.bf16.mxu0 %v2457
    %3822 = vmatpush1.bf16.msra.mxu0 %v2456
    %3823 = vmatprep.subr.bf16.mxu0 %v2465
    %3824 = vmatpush1.bf16.msra.mxu0 %v2464
    %3825 = vmatprep.mubr.bf16.mxu0 %v661
    %3826 = vmatmul.mubr.bf16.gmra.mrb[0].mxu0 %v660
    %v3827 = vpop.f32.mrb[0].mxu0
    %v3828 = vadd.f32 %v3785, %v3827
    %v3829 = vpop.f32.mrb[0].mxu0
    %v3830 = vadd.f32 %v3787, %v3829
    %v3831 = vpop.f32.mrb[0].mxu0
    %v3832 = vadd.f32 %v3789, %v3831
    %v3833 = vpop.f32.mrb[0].mxu0
    %v3834 = vadd.f32 %v3791, %v3833
    %3835 = vdwg.mxu0
    %3836 = vmatprep.subr.bf16.mxu0 %v2473
    %3837 = vmatpush1.bf16.msra.mxu0 %v2472
    %3838 = vmatprep.subr.bf16.mxu0 %v2481
    %3839 = vmatpush1.bf16.msra.mxu0 %v2480
    %3840 = vmatprep.subr.bf16.mxu0 %v2489
    %3841 = vmatpush1.bf16.msra.mxu0 %v2488
    %3842 = vmatprep.subr.bf16.mxu0 %v2497
    %3843 = vmatpush1.bf16.msra.mxu0 %v2496
    %3844 = vmatprep.subr.bf16.mxu0 %v2505
    %3845 = vmatpush1.bf16.msra.mxu0 %v2504
    %3846 = vmatprep.subr.bf16.mxu0 %v2513
    %3847 = vmatpush1.bf16.msra.mxu0 %v2512
    %3848 = vmatprep.subr.bf16.mxu0 %v2521
    %3849 = vmatpush1.bf16.msra.mxu0 %v2520
    %3850 = vmatprep.subr.bf16.mxu0 %v2529
    %3851 = vmatpush1.bf16.msra.mxu0 %v2528
    %3852 = vmatprep.subr.bf16.mxu0 %v2537
    %3853 = vmatpush1.bf16.msra.mxu0 %v2536
    %3854 = vmatprep.subr.bf16.mxu0 %v2545
    %3855 = vmatpush1.bf16.msra.mxu0 %v2544
    %3856 = vmatprep.subr.bf16.mxu0 %v2553
    %3857 = vmatpush1.bf16.msra.mxu0 %v2552
    %3858 = vmatprep.subr.bf16.mxu0 %v2561
    %3859 = vmatpush1.bf16.msra.mxu0 %v2560
    %3860 = vmatprep.subr.bf16.mxu0 %v2569
    %3861 = vmatpush1.bf16.msra.mxu0 %v2568
    %3862 = vmatprep.subr.bf16.mxu0 %v2577
    %3863 = vmatpush1.bf16.msra.mxu0 %v2576
    %3864 = vmatprep.subr.bf16.mxu0 %v2585
    %3865 = vmatpush1.bf16.msra.mxu0 %v2584
    %3866 = vmatprep.subr.bf16.mxu0 %v2593
    %3867 = vmatpush1.bf16.msra.mxu0 %v2592
    %3868 = vmatprep.mubr.bf16.mxu0 %v663
    %3869 = vmatmul.mubr.bf16.gmra.mrb[0].mxu0 %v662
    %v3870 = vpop.f32.mrb[0].mxu0
    %v3871 = vadd.f32 %v3828, %v3870
    %v3872 = vpop.f32.mrb[0].mxu0
    %v3873 = vadd.f32 %v3830, %v3872
    %v3874 = vpop.f32.mrb[0].mxu0
    %v3875 = vadd.f32 %v3832, %v3874
    %v3876 = vpop.f32.mrb[0].mxu0
    %v3877 = vadd.f32 %v3834, %v3876
    %3878 = vdwg.mxu0
    %3879 = vmatprep.subr.bf16.mxu0 %v2601
    %3880 = vmatpush1.bf16.msra.mxu0 %v2600
    %3881 = vmatprep.subr.bf16.mxu0 %v2609
    %3882 = vmatpush1.bf16.msra.mxu0 %v2608
    %3883 = vmatprep.subr.bf16.mxu0 %v2617
    %3884 = vmatpush1.bf16.msra.mxu0 %v2616
    %3885 = vmatprep.subr.bf16.mxu0 %v2625
    %3886 = vmatpush1.bf16.msra.mxu0 %v2624
    %3887 = vmatprep.subr.bf16.mxu0 %v2633
    %3888 = vmatpush1.bf16.msra.mxu0 %v2632
    %3889 = vmatprep.subr.bf16.mxu0 %v2641
    %3890 = vmatpush1.bf16.msra.mxu0 %v2640
    %3891 = vmatprep.subr.bf16.mxu0 %v2649
    %3892 = vmatpush1.bf16.msra.mxu0 %v2648
    %3893 = vmatprep.subr.bf16.mxu0 %v2657
    %3894 = vmatpush1.bf16.msra.mxu0 %v2656
    %3895 = vmatprep.subr.bf16.mxu0 %v2665
    %3896 = vmatpush1.bf16.msra.mxu0 %v2664
    %3897 = vmatprep.subr.bf16.mxu0 %v2673
    %3898 = vmatpush1.bf16.msra.mxu0 %v2672
    %3899 = vmatprep.subr.bf16.mxu0 %v2681
    %3900 = vmatpush1.bf16.msra.mxu0 %v2680
    %3901 = vmatprep.subr.bf16.mxu0 %v2689
    %3902 = vmatpush1.bf16.msra.mxu0 %v2688
    %3903 = vmatprep.subr.bf16.mxu0 %v2697
    %3904 = vmatpush1.bf16.msra.mxu0 %v2696
    %3905 = vmatprep.subr.bf16.mxu0 %v2705
    %3906 = vmatpush1.bf16.msra.mxu0 %v2704
    %3907 = vmatprep.subr.bf16.mxu0 %v2713
    %3908 = vmatpush1.bf16.msra.mxu0 %v2712
    %3909 = vmatprep.subr.bf16.mxu0 %v2721
    %3910 = vmatpush1.bf16.msra.mxu0 %v2720
    %3911 = vmatprep.mubr.bf16.mxu0 %v665
    %3912 = vmatmul.mubr.bf16.gmra.mrb[0].mxu0 %v664
    %v3913 = vpop.f32.mrb[0].mxu0
    %v3914 = vadd.f32 %v3871, %v3913
    %v3915 = vpop.f32.mrb[0].mxu0
    %v3916 = vadd.f32 %v3873, %v3915
    %v3917 = vpop.f32.mrb[0].mxu0
    %v3918 = vadd.f32 %v3875, %v3917
    %v3919 = vpop.f32.mrb[0].mxu0
    %v3920 = vadd.f32 %v3877, %v3919
    %3921 = vdwg.mxu0
    %v3922 = vadd.f32 %v3398, %v3400
    %v3923 = vadd.f32 %v3922, %v3570
    %v3924 = vadd.f32 %v3923, %v3572
    %v3925 = vadd.f32 %v3924, %v3742
    %v3926 = vadd.f32 %v3925, %v3744
    %v3927 = vadd.f32 %v3926, %v3914
    %v3928 = vadd.f32 %v3927, %v3916
    %3929 = vadd.xlane.f32.xlu0 %v3928
    %v3930 = vpop.xlane.xlu0 %3929
    %v3931 = vadd.f32 %v3402, %v3404
    %v3932 = vadd.f32 %v3931, %v3574
    %v3933 = vadd.f32 %v3932, %v3576
    %v3934 = vadd.f32 %v3933, %v3746
    %v3935 = vadd.f32 %v3934, %v3748
    %v3936 = vadd.f32 %v3935, %v3918
    %v3937 = vadd.f32 %v3936, %v3920
    %3938 = vadd.xlane.f32.xlu0 %v3937
    %v3939 = vpop.xlane.xlu0 %3938
    %v3940 = vmul.f32 %v3930, 0.0009765625
    %v3941 = vmul.f32 %v3939, 0.0009765625
    %v3942 = vmul.f32 %v3398, %v3398
    %v3943 = vmul.f32 %v3400, %v3400
    %v3944 = vmul.f32 %v3570, %v3570
    %v3945 = vmul.f32 %v3572, %v3572
    %v3946 = vmul.f32 %v3742, %v3742
    %v3947 = vmul.f32 %v3744, %v3744
    %v3948 = vmul.f32 %v3914, %v3914
    %v3949 = vmul.f32 %v3916, %v3916
    %v3950 = vmul.f32 %v3402, %v3402
    %v3951 = vmul.f32 %v3404, %v3404
    %v3952 = vmul.f32 %v3574, %v3574
    %v3953 = vmul.f32 %v3576, %v3576
    %v3954 = vmul.f32 %v3746, %v3746
    %v3955 = vmul.f32 %v3748, %v3748
    %v3956 = vmul.f32 %v3918, %v3918
    %v3957 = vmul.f32 %v3920, %v3920
    %v3958 = vadd.f32 %v3942, %v3943
    %v3959 = vadd.f32 %v3958, %v3944
    %v3960 = vadd.f32 %v3959, %v3945
    %v3961 = vadd.f32 %v3960, %v3946
    %v3962 = vadd.f32 %v3961, %v3947
    %v3963 = vadd.f32 %v3962, %v3948
    %v3964 = vadd.f32 %v3963, %v3949
    %3965 = vadd.xlane.f32.xlu0 %v3964
    %v3966 = vpop.xlane.xlu0 %3965
    %v3967 = vadd.f32 %v3950, %v3951
    %v3968 = vadd.f32 %v3967, %v3952
    %v3969 = vadd.f32 %v3968, %v3953
    %v3970 = vadd.f32 %v3969, %v3954
    %v3971 = vadd.f32 %v3970, %v3955
    %v3972 = vadd.f32 %v3971, %v3956
    %v3973 = vadd.f32 %v3972, %v3957
    %3974 = vadd.xlane.f32.xlu0 %v3973
    %v3975 = vpop.xlane.xlu0 %3974
    %v3976 = vmul.f32 %v3966, 0.0009765625
    %v3977 = vmul.f32 %v3975, 0.0009765625
    %v3978 = vmul.f32 %v3940, %v3940
    %v3979 = vmul.f32 %v3941, %v3941
    %v3980 = vsub.f32 %v3976, %v3978
    %v3981 = vsub.f32 %v3977, %v3979
    %v3982 = vmax.f32 %v3980, 0.0
    %v3983 = vmax.f32 %v3981, 0.0
    %v3984 = vsub.f32 %v3398, %v3940
    %v3985 = vsub.f32 %v3400, %v3940
    %v3986 = vsub.f32 %v3570, %v3940
    %v3987 = vsub.f32 %v3572, %v3940
    %v3988 = vsub.f32 %v3742, %v3940
    %v3989 = vsub.f32 %v3744, %v3940
    %v3990 = vsub.f32 %v3914, %v3940
    %v3991 = vsub.f32 %v3916, %v3940
    %v3992 = vsub.f32 %v3402, %v3941
    %v3993 = vsub.f32 %v3404, %v3941
    %v3994 = vsub.f32 %v3574, %v3941
    %v3995 = vsub.f32 %v3576, %v3941
    %v3996 = vsub.f32 %v3746, %v3941
    %v3997 = vsub.f32 %v3748, %v3941
    %v3998 = vsub.f32 %v3918, %v3941
    %v3999 = vsub.f32 %v3920, %v3941
    %v4000 = vadd.f32 %v3982, 1e-05
    %v4001 = vadd.f32 %v3983, 1e-05
    %v4002 = vrsqrt.pop %v4000
    %v4003 = vrsqrt.pop %v4001
    %v4004 = vmul.f32 %v3984, %v4002
    %v4005 = vmul.f32 %v3985, %v4002
    %v4006 = vmul.f32 %v3986, %v4002
    %v4007 = vmul.f32 %v3987, %v4002
    %v4008 = vmul.f32 %v3988, %v4002
    %v4009 = vmul.f32 %v3989, %v4002
    %v4010 = vmul.f32 %v3990, %v4002
    %v4011 = vmul.f32 %v3991, %v4002
    %v4012 = vmul.f32 %v3992, %v4003
    %v4013 = vmul.f32 %v3993, %v4003
    %v4014 = vmul.f32 %v3994, %v4003
    %v4015 = vmul.f32 %v3995, %v4003
    %v4016 = vmul.f32 %v3996, %v4003
    %v4017 = vmul.f32 %v3997, %v4003
    %v4018 = vmul.f32 %v3998, %v4003
    %v4019 = vmul.f32 %v3999, %v4003
    %v4020 = vpack.c.bf16 %v4012, %v4004
    %v4021 = vpack.c.bf16 %v4013, %v4005
    %v4022 = vpack.c.bf16 %v4014, %v4006
    %v4023 = vpack.c.bf16 %v4015, %v4007
    %v4024 = vpack.c.bf16 %v4016, %v4008
    %v4025 = vpack.c.bf16 %v4017, %v4009
    %v4026 = vpack.c.bf16 %v4018, %v4010
    %v4027 = vpack.c.bf16 %v4019, %v4011
    %v4028 = vld [vmem:[#allocation6] sm:$0xf]
    %v4029 = vld [vmem:[#allocation6 + $0x4] sm:$0xf]
    %v4030 = vld [vmem:[#allocation6 + $0x8] sm:$0xf]
    %v4031 = vld [vmem:[#allocation6 + $0xc] sm:$0xf]
    %v4032 = vld [vmem:[#allocation6 + $0x10] sm:$0xf]
    %v4033 = vld [vmem:[#allocation6 + $0x14] sm:$0xf]
    %v4034 = vld [vmem:[#allocation6 + $0x18] sm:$0xf]
    %v4035 = vld [vmem:[#allocation6 + $0x1c] sm:$0xf]
    %v4036 = vld [vmem:[#allocation6 + $0x20] sm:$0xf]
    %v4037 = vld [vmem:[#allocation6 + $0x24] sm:$0xf]
    %v4038 = vld [vmem:[#allocation6 + $0x28] sm:$0xf]
    %v4039 = vld [vmem:[#allocation6 + $0x2c] sm:$0xf]
    %v4040 = vld [vmem:[#allocation6 + $0x30] sm:$0xf]
    %v4041 = vld [vmem:[#allocation6 + $0x34] sm:$0xf]
    %v4042 = vld [vmem:[#allocation6 + $0x38] sm:$0xf]
    %v4043 = vld [vmem:[#allocation6 + $0x3c] sm:$0xf]
    %v4044 = vld [vmem:[#allocation6 + $0x40] sm:$0xf]
    %v4045 = vld [vmem:[#allocation6 + $0x44] sm:$0xf]
    %v4046 = vld [vmem:[#allocation6 + $0x48] sm:$0xf]
    %v4047 = vld [vmem:[#allocation6 + $0x4c] sm:$0xf]
    %v4048 = vld [vmem:[#allocation6 + $0x50] sm:$0xf]
    %v4049 = vld [vmem:[#allocation6 + $0x54] sm:$0xf]
    %v4050 = vld [vmem:[#allocation6 + $0x58] sm:$0xf]
    %v4051 = vld [vmem:[#allocation6 + $0x5c] sm:$0xf]
    %v4052 = vld [vmem:[#allocation6 + $0x60] sm:$0xf]
    %v4053 = vld [vmem:[#allocation6 + $0x64] sm:$0xf]
    %v4054 = vld [vmem:[#allocation6 + $0x68] sm:$0xf]
    %v4055 = vld [vmem:[#allocation6 + $0x6c] sm:$0xf]
    %v4056 = vld [vmem:[#allocation6 + $0x70] sm:$0xf]
    %v4057 = vld [vmem:[#allocation6 + $0x74] sm:$0xf]
    %v4058 = vld [vmem:[#allocation6 + $0x78] sm:$0xf]
    %v4059 = vld [vmem:[#allocation6 + $0x7c] sm:$0xf]
    %v4060 = vld [vmem:[#allocation6 + $0x80] sm:$0xf]
    %v4061 = vld [vmem:[#allocation6 + $0x84] sm:$0xf]
    %v4062 = vld [vmem:[#allocation6 + $0x88] sm:$0xf]
    %v4063 = vld [vmem:[#allocation6 + $0x8c] sm:$0xf]
    %v4064 = vld [vmem:[#allocation6 + $0x90] sm:$0xf]
    %v4065 = vld [vmem:[#allocation6 + $0x94] sm:$0xf]
    %v4066 = vld [vmem:[#allocation6 + $0x98] sm:$0xf]
    %v4067 = vld [vmem:[#allocation6 + $0x9c] sm:$0xf]
    %v4068 = vld [vmem:[#allocation6 + $0xa0] sm:$0xf]
    %v4069 = vld [vmem:[#allocation6 + $0xa4] sm:$0xf]
    %v4070 = vld [vmem:[#allocation6 + $0xa8] sm:$0xf]
    %v4071 = vld [vmem:[#allocation6 + $0xac] sm:$0xf]
    %v4072 = vld [vmem:[#allocation6 + $0xb0] sm:$0xf]
    %v4073 = vld [vmem:[#allocation6 + $0xb4] sm:$0xf]
    %v4074 = vld [vmem:[#allocation6 + $0xb8] sm:$0xf]
    %v4075 = vld [vmem:[#allocation6 + $0xbc] sm:$0xf]
    %v4076 = vld [vmem:[#allocation6 + $0xc0] sm:$0xf]
    %v4077 = vld [vmem:[#allocation6 + $0xc4] sm:$0xf]
    %v4078 = vld [vmem:[#allocation6 + $0xc8] sm:$0xf]
    %v4079 = vld [vmem:[#allocation6 + $0xcc] sm:$0xf]
    %v4080 = vld [vmem:[#allocation6 + $0xd0] sm:$0xf]
    %v4081 = vld [vmem:[#allocation6 + $0xd4] sm:$0xf]
    %v4082 = vld [vmem:[#allocation6 + $0xd8] sm:$0xf]
    %v4083 = vld [vmem:[#allocation6 + $0xdc] sm:$0xf]
    %v4084 = vld [vmem:[#allocation6 + $0xe0] sm:$0xf]
    %v4085 = vld [vmem:[#allocation6 + $0xe4] sm:$0xf]
    %v4086 = vld [vmem:[#allocation6 + $0xe8] sm:$0xf]
    %v4087 = vld [vmem:[#allocation6 + $0xec] sm:$0xf]
    %v4088 = vld [vmem:[#allocation6 + $0xf0] sm:$0xf]
    %v4089 = vld [vmem:[#allocation6 + $0xf4] sm:$0xf]
    %v4090 = vld [vmem:[#allocation6 + $0xf8] sm:$0xf]
    %v4091 = vld [vmem:[#allocation6 + $0xfc] sm:$0xf]
    %v4092 = vld [vmem:[#allocation6 + $0x100] sm:$0xf]
    %v4093 = vld [vmem:[#allocation6 + $0x104] sm:$0xf]
    %v4094 = vld [vmem:[#allocation6 + $0x108] sm:$0xf]
    %v4095 = vld [vmem:[#allocation6 + $0x10c] sm:$0xf]
    %v4096 = vld [vmem:[#allocation6 + $0x110] sm:$0xf]
    %v4097 = vld [vmem:[#allocation6 + $0x114] sm:$0xf]
    %v4098 = vld [vmem:[#allocation6 + $0x118] sm:$0xf]
    %v4099 = vld [vmem:[#allocation6 + $0x11c] sm:$0xf]
    %v4100 = vld [vmem:[#allocation6 + $0x120] sm:$0xf]
    %v4101 = vld [vmem:[#allocation6 + $0x124] sm:$0xf]
    %v4102 = vld [vmem:[#allocation6 + $0x128] sm:$0xf]
    %v4103 = vld [vmem:[#allocation6 + $0x12c] sm:$0xf]
    %v4104 = vld [vmem:[#allocation6 + $0x130] sm:$0xf]
    %v4105 = vld [vmem:[#allocation6 + $0x134] sm:$0xf]
    %v4106 = vld [vmem:[#allocation6 + $0x138] sm:$0xf]
    %v4107 = vld [vmem:[#allocation6 + $0x13c] sm:$0xf]
    %v4108 = vld [vmem:[#allocation6 + $0x140] sm:$0xf]
    %v4109 = vld [vmem:[#allocation6 + $0x144] sm:$0xf]
    %v4110 = vld [vmem:[#allocation6 + $0x148] sm:$0xf]
    %v4111 = vld [vmem:[#allocation6 + $0x14c] sm:$0xf]
    %v4112 = vld [vmem:[#allocation6 + $0x150] sm:$0xf]
    %v4113 = vld [vmem:[#allocation6 + $0x154] sm:$0xf]
    %v4114 = vld [vmem:[#allocation6 + $0x158] sm:$0xf]
    %v4115 = vld [vmem:[#allocation6 + $0x15c] sm:$0xf]
    %v4116 = vld [vmem:[#allocation6 + $0x160] sm:$0xf]
    %v4117 = vld [vmem:[#allocation6 + $0x164] sm:$0xf]
    %v4118 = vld [vmem:[#allocation6 + $0x168] sm:$0xf]
    %v4119 = vld [vmem:[#allocation6 + $0x16c] sm:$0xf]
    %v4120 = vld [vmem:[#allocation6 + $0x170] sm:$0xf]
    %v4121 = vld [vmem:[#allocation6 + $0x174] sm:$0xf]
    %v4122 = vld [vmem:[#allocation6 + $0x178] sm:$0xf]
    %v4123 = vld [vmem:[#allocation6 + $0x17c] sm:$0xf]
    %v4124 = vld [vmem:[#allocation6 + $0x180] sm:$0xf]
    %v4125 = vld [vmem:[#allocation6 + $0x184] sm:$0xf]
    %v4126 = vld [vmem:[#allocation6 + $0x188] sm:$0xf]
    %v4127 = vld [vmem:[#allocation6 + $0x18c] sm:$0xf]
    %v4128 = vld [vmem:[#allocation6 + $0x190] sm:$0xf]
    %v4129 = vld [vmem:[#allocation6 + $0x194] sm:$0xf]
    %v4130 = vld [vmem:[#allocation6 + $0x198] sm:$0xf]
    %v4131 = vld [vmem:[#allocation6 + $0x19c] sm:$0xf]
    %v4132 = vld [vmem:[#allocation6 + $0x1a0] sm:$0xf]
    %v4133 = vld [vmem:[#allocation6 + $0x1a4] sm:$0xf]
    %v4134 = vld [vmem:[#allocation6 + $0x1a8] sm:$0xf]
    %v4135 = vld [vmem:[#allocation6 + $0x1ac] sm:$0xf]
    %v4136 = vld [vmem:[#allocation6 + $0x1b0] sm:$0xf]
    %v4137 = vld [vmem:[#allocation6 + $0x1b4] sm:$0xf]
    %v4138 = vld [vmem:[#allocation6 + $0x1b8] sm:$0xf]
    %v4139 = vld [vmem:[#allocation6 + $0x1bc] sm:$0xf]
    %v4140 = vld [vmem:[#allocation6 + $0x1c0] sm:$0xf]
    %v4141 = vld [vmem:[#allocation6 + $0x1c4] sm:$0xf]
    %v4142 = vld [vmem:[#allocation6 + $0x1c8] sm:$0xf]
    %v4143 = vld [vmem:[#allocation6 + $0x1cc] sm:$0xf]
    %v4144 = vld [vmem:[#allocation6 + $0x1d0] sm:$0xf]
    %v4145 = vld [vmem:[#allocation6 + $0x1d4] sm:$0xf]
    %v4146 = vld [vmem:[#allocation6 + $0x1d8] sm:$0xf]
    %v4147 = vld [vmem:[#allocation6 + $0x1dc] sm:$0xf]
    %v4148 = vld [vmem:[#allocation6 + $0x1e0] sm:$0xf]
    %v4149 = vld [vmem:[#allocation6 + $0x1e4] sm:$0xf]
    %v4150 = vld [vmem:[#allocation6 + $0x1e8] sm:$0xf]
    %v4151 = vld [vmem:[#allocation6 + $0x1ec] sm:$0xf]
    %v4152 = vld [vmem:[#allocation6 + $0x1f0] sm:$0xf]
    %v4153 = vld [vmem:[#allocation6 + $0x1f4] sm:$0xf]
    %v4154 = vld [vmem:[#allocation6 + $0x1f8] sm:$0xf]
    %v4155 = vld [vmem:[#allocation6 + $0x1fc] sm:$0xf]
    %v4156 = vld [vmem:[#allocation7] sm:$0x1]
    %v4158 = vlaneseq
    %v4159 = vshrl.u32 %v4158, 7
    %v4160 = vsub.s32 0, %v4159
    %v4161 = vrot.slane %v4156, %v4160
    %v4291 = vunpack.c.l.b16 %v4028
    %v4292 = vunpack.c.l.b16 %v4029
    %v4293 = vunpack.c.l.b16 %v4030
    %v4294 = vunpack.c.l.b16 %v4031
    %v4295 = vunpack.c.l.b16 %v4032
    %v4296 = vunpack.c.l.b16 %v4033
    %v4297 = vunpack.c.l.b16 %v4034
    %v4298 = vunpack.c.l.b16 %v4035
    %v4299 = vunpack.c.l.b16 %v4036
    %v4300 = vunpack.c.l.b16 %v4037
    %v4301 = vunpack.c.l.b16 %v4038
    %v4302 = vunpack.c.l.b16 %v4039
    %v4303 = vunpack.c.l.b16 %v4040
    %v4304 = vunpack.c.l.b16 %v4041
    %v4305 = vunpack.c.l.b16 %v4042
    %v4306 = vunpack.c.l.b16 %v4043
    %v4307 = vunpack.c.l.b16 %v4044
    %v4308 = vunpack.c.l.b16 %v4045
    %v4309 = vunpack.c.l.b16 %v4046
    %v4310 = vunpack.c.l.b16 %v4047
    %v4311 = vunpack.c.l.b16 %v4048
    %v4312 = vunpack.c.l.b16 %v4049
    %v4313 = vunpack.c.l.b16 %v4050
    %v4314 = vunpack.c.l.b16 %v4051
    %v4315 = vunpack.c.l.b16 %v4052
    %v4316 = vunpack.c.l.b16 %v4053
    %v4317 = vunpack.c.l.b16 %v4054
    %v4318 = vunpack.c.l.b16 %v4055
    %v4319 = vunpack.c.l.b16 %v4056
    %v4320 = vunpack.c.l.b16 %v4057
    %v4321 = vunpack.c.l.b16 %v4058
    %v4322 = vunpack.c.l.b16 %v4059
    %v4323 = vunpack.c.l.b16 %v4060
    %v4324 = vunpack.c.l.b16 %v4061
    %v4325 = vunpack.c.l.b16 %v4062
    %v4326 = vunpack.c.l.b16 %v4063
    %v4327 = vunpack.c.l.b16 %v4064
    %v4328 = vunpack.c.l.b16 %v4065
    %v4329 = vunpack.c.l.b16 %v4066
    %v4330 = vunpack.c.l.b16 %v4067
    %v4331 = vunpack.c.l.b16 %v4068
    %v4332 = vunpack.c.l.b16 %v4069
    %v4333 = vunpack.c.l.b16 %v4070
    %v4334 = vunpack.c.l.b16 %v4071
    %v4335 = vunpack.c.l.b16 %v4072
    %v4336 = vunpack.c.l.b16 %v4073
    %v4337 = vunpack.c.l.b16 %v4074
    %v4338 = vunpack.c.l.b16 %v4075
    %v4339 = vunpack.c.l.b16 %v4076
    %v4340 = vunpack.c.l.b16 %v4077
    %v4341 = vunpack.c.l.b16 %v4078
    %v4342 = vunpack.c.l.b16 %v4079
    %v4343 = vunpack.c.l.b16 %v4080
    %v4344 = vunpack.c.l.b16 %v4081
    %v4345 = vunpack.c.l.b16 %v4082
    %v4346 = vunpack.c.l.b16 %v4083
    %v4347 = vunpack.c.l.b16 %v4084
    %v4348 = vunpack.c.l.b16 %v4085
    %v4349 = vunpack.c.l.b16 %v4086
    %v4350 = vunpack.c.l.b16 %v4087
    %v4351 = vunpack.c.l.b16 %v4088
    %v4352 = vunpack.c.l.b16 %v4089
    %v4353 = vunpack.c.l.b16 %v4090
    %v4354 = vunpack.c.l.b16 %v4091
    %v4355 = vunpack.c.l.b16 %v4092
    %v4356 = vunpack.c.l.b16 %v4093
    %v4357 = vunpack.c.l.b16 %v4094
    %v4358 = vunpack.c.l.b16 %v4095
    %v4359 = vunpack.c.l.b16 %v4096
    %v4360 = vunpack.c.l.b16 %v4097
    %v4361 = vunpack.c.l.b16 %v4098
    %v4362 = vunpack.c.l.b16 %v4099
    %v4363 = vunpack.c.l.b16 %v4100
    %v4364 = vunpack.c.l.b16 %v4101
    %v4365 = vunpack.c.l.b16 %v4102
    %v4366 = vunpack.c.l.b16 %v4103
    %v4367 = vunpack.c.l.b16 %v4104
    %v4368 = vunpack.c.l.b16 %v4105
    %v4369 = vunpack.c.l.b16 %v4106
    %v4370 = vunpack.c.l.b16 %v4107
    %v4371 = vunpack.c.l.b16 %v4108
    %v4372 = vunpack.c.l.b16 %v4109
    %v4373 = vunpack.c.l.b16 %v4110
    %v4374 = vunpack.c.l.b16 %v4111
    %v4375 = vunpack.c.l.b16 %v4112
    %v4376 = vunpack.c.l.b16 %v4113
    %v4377 = vunpack.c.l.b16 %v4114
    %v4378 = vunpack.c.l.b16 %v4115
    %v4379 = vunpack.c.l.b16 %v4116
    %v4380 = vunpack.c.l.b16 %v4117
    %v4381 = vunpack.c.l.b16 %v4118
    %v4382 = vunpack.c.l.b16 %v4119
    %v4383 = vunpack.c.l.b16 %v4120
    %v4384 = vunpack.c.l.b16 %v4121
    %v4385 = vunpack.c.l.b16 %v4122
    %v4386 = vunpack.c.l.b16 %v4123
    %v4387 = vunpack.c.l.b16 %v4124
    %v4388 = vunpack.c.l.b16 %v4125
    %v4389 = vunpack.c.l.b16 %v4126
    %v4390 = vunpack.c.l.b16 %v4127
    %v4391 = vunpack.c.l.b16 %v4128
    %v4392 = vunpack.c.l.b16 %v4129
    %v4393 = vunpack.c.l.b16 %v4130
    %v4394 = vunpack.c.l.b16 %v4131
    %v4395 = vunpack.c.l.b16 %v4132
    %v4396 = vunpack.c.l.b16 %v4133
    %v4397 = vunpack.c.l.b16 %v4134
    %v4398 = vunpack.c.l.b16 %v4135
    %v4399 = vunpack.c.l.b16 %v4136
    %v4400 = vunpack.c.l.b16 %v4137
    %v4401 = vunpack.c.l.b16 %v4138
    %v4402 = vunpack.c.l.b16 %v4139
    %v4403 = vunpack.c.l.b16 %v4140
    %v4404 = vunpack.c.l.b16 %v4141
    %v4405 = vunpack.c.l.b16 %v4142
    %v4406 = vunpack.c.l.b16 %v4143
    %v4407 = vunpack.c.l.b16 %v4144
    %v4408 = vunpack.c.l.b16 %v4145
    %v4409 = vunpack.c.l.b16 %v4146
    %v4410 = vunpack.c.l.b16 %v4147
    %v4411 = vunpack.c.l.b16 %v4148
    %v4412 = vunpack.c.l.b16 %v4149
    %v4413 = vunpack.c.l.b16 %v4150
    %v4414 = vunpack.c.l.b16 %v4151
    %v4415 = vunpack.c.l.b16 %v4152
    %v4416 = vunpack.c.l.b16 %v4153
    %v4417 = vunpack.c.l.b16 %v4154
    %v4418 = vunpack.c.l.b16 %v4155
    %v4419 = vpack.c.b16 %v4292, %v4291
    %v4420 = vpack.c.b16 %v4294, %v4293
    %v4421 = vpack.c.b16 %v4296, %v4295
    %v4422 = vpack.c.b16 %v4298, %v4297
    %v4423 = vpack.c.b16 %v4300, %v4299
    %v4424 = vpack.c.b16 %v4302, %v4301
    %v4425 = vpack.c.b16 %v4304, %v4303
    %v4426 = vpack.c.b16 %v4306, %v4305
    %v4427 = vpack.c.b16 %v4308, %v4307
    %v4428 = vpack.c.b16 %v4310, %v4309
    %v4429 = vpack.c.b16 %v4312, %v4311
    %v4430 = vpack.c.b16 %v4314, %v4313
    %v4431 = vpack.c.b16 %v4316, %v4315
    %v4432 = vpack.c.b16 %v4318, %v4317
    %v4433 = vpack.c.b16 %v4320, %v4319
    %v4434 = vpack.c.b16 %v4322, %v4321
    %v4435 = vpack.c.b16 %v4324, %v4323
    %v4436 = vpack.c.b16 %v4326, %v4325
    %v4437 = vpack.c.b16 %v4328, %v4327
    %v4438 = vpack.c.b16 %v4330, %v4329
    %v4439 = vpack.c.b16 %v4332, %v4331
    %v4440 = vpack.c.b16 %v4334, %v4333
    %v4441 = vpack.c.b16 %v4336, %v4335
    %v4442 = vpack.c.b16 %v4338, %v4337
    %v4443 = vpack.c.b16 %v4340, %v4339
    %v4444 = vpack.c.b16 %v4342, %v4341
    %v4445 = vpack.c.b16 %v4344, %v4343
    %v4446 = vpack.c.b16 %v4346, %v4345
    %v4447 = vpack.c.b16 %v4348, %v4347
    %v4448 = vpack.c.b16 %v4350, %v4349
    %v4449 = vpack.c.b16 %v4352, %v4351
    %v4450 = vpack.c.b16 %v4354, %v4353
    %v4451 = vpack.c.b16 %v4356, %v4355
    %v4452 = vpack.c.b16 %v4358, %v4357
    %v4453 = vpack.c.b16 %v4360, %v4359
    %v4454 = vpack.c.b16 %v4362, %v4361
    %v4455 = vpack.c.b16 %v4364, %v4363
    %v4456 = vpack.c.b16 %v4366, %v4365
    %v4457 = vpack.c.b16 %v4368, %v4367
    %v4458 = vpack.c.b16 %v4370, %v4369
    %v4459 = vpack.c.b16 %v4372, %v4371
    %v4460 = vpack.c.b16 %v4374, %v4373
    %v4461 = vpack.c.b16 %v4376, %v4375
    %v4462 = vpack.c.b16 %v4378, %v4377
    %v4463 = vpack.c.b16 %v4380, %v4379
    %v4464 = vpack.c.b16 %v4382, %v4381
    %v4465 = vpack.c.b16 %v4384, %v4383
    %v4466 = vpack.c.b16 %v4386, %v4385
    %v4467 = vpack.c.b16 %v4388, %v4387
    %v4468 = vpack.c.b16 %v4390, %v4389
    %v4469 = vpack.c.b16 %v4392, %v4391
    %v4470 = vpack.c.b16 %v4394, %v4393
    %v4471 = vpack.c.b16 %v4396, %v4395
    %v4472 = vpack.c.b16 %v4398, %v4397
    %v4473 = vpack.c.b16 %v4400, %v4399
    %v4474 = vpack.c.b16 %v4402, %v4401
    %v4475 = vpack.c.b16 %v4404, %v4403
    %v4476 = vpack.c.b16 %v4406, %v4405
    %v4477 = vpack.c.b16 %v4408, %v4407
    %v4478 = vpack.c.b16 %v4410, %v4409
    %v4479 = vpack.c.b16 %v4412, %v4411
    %v4480 = vpack.c.b16 %v4414, %v4413
    %v4481 = vpack.c.b16 %v4416, %v4415
    %v4482 = vpack.c.b16 %v4418, %v4417
    %4547 = vmatprep.subr.bf16.mxu0 0
    %4548 = vmatpush1.bf16.msra.mxu0 %v4419
    %4549 = vmatprep.subr.bf16.mxu0 0
    %4550 = vmatpush1.bf16.msra.mxu0 %v4420
    %4551 = vmatprep.subr.bf16.mxu0 0
    %4552 = vmatpush1.bf16.msra.mxu0 %v4421
    %4553 = vmatprep.subr.bf16.mxu0 0
    %4554 = vmatpush1.bf16.msra.mxu0 %v4422
    %4555 = vmatprep.subr.bf16.mxu0 0
    %4556 = vmatpush1.bf16.msra.mxu0 %v4423
    %4557 = vmatprep.subr.bf16.mxu0 0
    %4558 = vmatpush1.bf16.msra.mxu0 %v4424
    %4559 = vmatprep.subr.bf16.mxu0 0
    %4560 = vmatpush1.bf16.msra.mxu0 %v4425
    %4561 = vmatprep.subr.bf16.mxu0 0
    %4562 = vmatpush1.bf16.msra.mxu0 %v4426
    %4563 = vmatprep.subr.bf16.mxu0 0
    %4564 = vmatpush1.bf16.msra.mxu0 %v4427
    %4565 = vmatprep.subr.bf16.mxu0 0
    %4566 = vmatpush1.bf16.msra.mxu0 %v4428
    %4567 = vmatprep.subr.bf16.mxu0 0
    %4568 = vmatpush1.bf16.msra.mxu0 %v4429
    %4569 = vmatprep.subr.bf16.mxu0 0
    %4570 = vmatpush1.bf16.msra.mxu0 %v4430
    %4571 = vmatprep.subr.bf16.mxu0 0
    %4572 = vmatpush1.bf16.msra.mxu0 %v4431
    %4573 = vmatprep.subr.bf16.mxu0 0
    %4574 = vmatpush1.bf16.msra.mxu0 %v4432
    %4575 = vmatprep.subr.bf16.mxu0 0
    %4576 = vmatpush1.bf16.msra.mxu0 %v4433
    %4577 = vmatprep.subr.bf16.mxu0 0
    %4578 = vmatpush1.bf16.msra.mxu0 %v4434
    %4579 = vmatprep.mubr.bf16.mxu0 %v4021
    %4580 = vmatmul.mubr.bf16.gmra.mrb[0].mxu0 %v4020
    %v4581 = vpop.f32.mrb[0].mxu0
    %v4582 = vadd.f32 %v4161, %v4581
    %v4583 = vpop.f32.mrb[0].mxu0
    %v4584 = vpop.f32.mrb[0].mxu0
    %v4585 = vadd.f32 %v4161, %v4584
    %v4586 = vpop.f32.mrb[0].mxu0
    %4587 = vdwg.mxu0
    %4588 = vmatprep.subr.bf16.mxu0 0
    %4589 = vmatpush1.bf16.msra.mxu0 %v4435
    %4590 = vmatprep.subr.bf16.mxu0 0
    %4591 = vmatpush1.bf16.msra.mxu0 %v4436
    %4592 = vmatprep.subr.bf16.mxu0 0
    %4593 = vmatpush1.bf16.msra.mxu0 %v4437
    %4594 = vmatprep.subr.bf16.mxu0 0
    %4595 = vmatpush1.bf16.msra.mxu0 %v4438
    %4596 = vmatprep.subr.bf16.mxu0 0
    %4597 = vmatpush1.bf16.msra.mxu0 %v4439
    %4598 = vmatprep.subr.bf16.mxu0 0
    %4599 = vmatpush1.bf16.msra.mxu0 %v4440
    %4600 = vmatprep.subr.bf16.mxu0 0
    %4601 = vmatpush1.bf16.msra.mxu0 %v4441
    %4602 = vmatprep.subr.bf16.mxu0 0
    %4603 = vmatpush1.bf16.msra.mxu0 %v4442
    %4604 = vmatprep.subr.bf16.mxu0 0
    %4605 = vmatpush1.bf16.msra.mxu0 %v4443
    %4606 = vmatprep.subr.bf16.mxu0 0
    %4607 = vmatpush1.bf16.msra.mxu0 %v4444
    %4608 = vmatprep.subr.bf16.mxu0 0
    %4609 = vmatpush1.bf16.msra.mxu0 %v4445
    %4610 = vmatprep.subr.bf16.mxu0 0
    %4611 = vmatpush1.bf16.msra.mxu0 %v4446
    %4612 = vmatprep.subr.bf16.mxu0 0
    %4613 = vmatpush1.bf16.msra.mxu0 %v4447
    %4614 = vmatprep.subr.bf16.mxu0 0
    %4615 = vmatpush1.bf16.msra.mxu0 %v4448
    %4616 = vmatprep.subr.bf16.mxu0 0
    %4617 = vmatpush1.bf16.msra.mxu0 %v4449
    %4618 = vmatprep.subr.bf16.mxu0 0
    %4619 = vmatpush1.bf16.msra.mxu0 %v4450
    %4620 = vmatprep.mubr.bf16.mxu0 %v4023
    %4621 = vmatmul.mubr.bf16.gmra.mrb[0].mxu0 %v4022
    %v4622 = vpop.f32.mrb[0].mxu0
    %v4623 = vadd.f32 %v4582, %v4622
    %v4624 = vpop.f32.mrb[0].mxu0
    %v4625 = vpop.f32.mrb[0].mxu0
    %v4626 = vadd.f32 %v4585, %v4625
    %v4627 = vpop.f32.mrb[0].mxu0
    %4628 = vdwg.mxu0
    %4629 = vmatprep.subr.bf16.mxu0 0
    %4630 = vmatpush1.bf16.msra.mxu0 %v4451
    %4631 = vmatprep.subr.bf16.mxu0 0
    %4632 = vmatpush1.bf16.msra.mxu0 %v4452
    %4633 = vmatprep.subr.bf16.mxu0 0
    %4634 = vmatpush1.bf16.msra.mxu0 %v4453
    %4635 = vmatprep.subr.bf16.mxu0 0
    %4636 = vmatpush1.bf16.msra.mxu0 %v4454
    %4637 = vmatprep.subr.bf16.mxu0 0
    %4638 = vmatpush1.bf16.msra.mxu0 %v4455
    %4639 = vmatprep.subr.bf16.mxu0 0
    %4640 = vmatpush1.bf16.msra.mxu0 %v4456
    %4641 = vmatprep.subr.bf16.mxu0 0
    %4642 = vmatpush1.bf16.msra.mxu0 %v4457
    %4643 = vmatprep.subr.bf16.mxu0 0
    %4644 = vmatpush1.bf16.msra.mxu0 %v4458
    %4645 = vmatprep.subr.bf16.mxu0 0
    %4646 = vmatpush1.bf16.msra.mxu0 %v4459
    %4647 = vmatprep.subr.bf16.mxu0 0
    %4648 = vmatpush1.bf16.msra.mxu0 %v4460
    %4649 = vmatprep.subr.bf16.mxu0 0
    %4650 = vmatpush1.bf16.msra.mxu0 %v4461
    %4651 = vmatprep.subr.bf16.mxu0 0
    %4652 = vmatpush1.bf16.msra.mxu0 %v4462
    %4653 = vmatprep.subr.bf16.mxu0 0
    %4654 = vmatpush1.bf16.msra.mxu0 %v4463
    %4655 = vmatprep.subr.bf16.mxu0 0
    %4656 = vmatpush1.bf16.msra.mxu0 %v4464
    %4657 = vmatprep.subr.bf16.mxu0 0
    %4658 = vmatpush1.bf16.msra.mxu0 %v4465
    %4659 = vmatprep.subr.bf16.mxu0 0
    %4660 = vmatpush1.bf16.msra.mxu0 %v4466
    %4661 = vmatprep.mubr.bf16.mxu0 %v4025
    %4662 = vmatmul.mubr.bf16.gmra.mrb[0].mxu0 %v4024
    %v4663 = vpop.f32.mrb[0].mxu0
    %v4664 = vadd.f32 %v4623, %v4663
    %v4665 = vpop.f32.mrb[0].mxu0
    %v4666 = vpop.f32.mrb[0].mxu0
    %v4667 = vadd.f32 %v4626, %v4666
    %v4668 = vpop.f32.mrb[0].mxu0
    %4669 = vdwg.mxu0
    %4670 = vmatprep.subr.bf16.mxu0 0
    %4671 = vmatpush1.bf16.msra.mxu0 %v4467
    %4672 = vmatprep.subr.bf16.mxu0 0
    %4673 = vmatpush1.bf16.msra.mxu0 %v4468
    %4674 = vmatprep.subr.bf16.mxu0 0
    %4675 = vmatpush1.bf16.msra.mxu0 %v4469
    %4676 = vmatprep.subr.bf16.mxu0 0
    %4677 = vmatpush1.bf16.msra.mxu0 %v4470
    %4678 = vmatprep.subr.bf16.mxu0 0
    %4679 = vmatpush1.bf16.msra.mxu0 %v4471
    %4680 = vmatprep.subr.bf16.mxu0 0
    %4681 = vmatpush1.bf16.msra.mxu0 %v4472
    %4682 = vmatprep.subr.bf16.mxu0 0
    %4683 = vmatpush1.bf16.msra.mxu0 %v4473
    %4684 = vmatprep.subr.bf16.mxu0 0
    %4685 = vmatpush1.bf16.msra.mxu0 %v4474
    %4686 = vmatprep.subr.bf16.mxu0 0
    %4687 = vmatpush1.bf16.msra.mxu0 %v4475
    %4688 = vmatprep.subr.bf16.mxu0 0
    %4689 = vmatpush1.bf16.msra.mxu0 %v4476
    %4690 = vmatprep.subr.bf16.mxu0 0
    %4691 = vmatpush1.bf16.msra.mxu0 %v4477
    %4692 = vmatprep.subr.bf16.mxu0 0
    %4693 = vmatpush1.bf16.msra.mxu0 %v4478
    %4694 = vmatprep.subr.bf16.mxu0 0
    %4695 = vmatpush1.bf16.msra.mxu0 %v4479
    %4696 = vmatprep.subr.bf16.mxu0 0
    %4697 = vmatpush1.bf16.msra.mxu0 %v4480
    %4698 = vmatprep.subr.bf16.mxu0 0
    %4699 = vmatpush1.bf16.msra.mxu0 %v4481
    %4700 = vmatprep.subr.bf16.mxu0 0
    %4701 = vmatpush1.bf16.msra.mxu0 %v4482
    %4702 = vmatprep.mubr.bf16.mxu0 %v4027
    %4703 = vmatmul.mubr.bf16.gmra.mrb[0].mxu0 %v4026
    %v4704 = vpop.f32.mrb[0].mxu0
    %v4705 = vadd.f32 %v4664, %v4704
    %v4706 = vpop.f32.mrb[0].mxu0
    %v4707 = vpop.f32.mrb[0].mxu0
    %v4708 = vadd.f32 %v4667, %v4707
    %v4709 = vpop.f32.mrb[0].mxu0
    %4710 = vdwg.mxu0
    %4711 = vst [vmem:[%s5] sm:$0xff] %v4705
    %4712 = vst [vmem:[%s5 + $0x8] sm:$0xff] %v4708
    // Predicated region
    $region38: #{stable_maxpooling_mil_forward.1} parent=1 // pred_check
      _
    $region39: #{stable_maxpooling_mil_forward.1} parent=1 // pred_check_branch
      %4714 = sbr.rel (0) target = $region41
    $region40: #{stable_maxpooling_mil_forward.1} parent=1 // pred_region
      _
    $region41: #{stable_maxpooling_mil_forward.1} parent=1 // pred_fallthru
      _
    // Predicated region
    $region42: #{stable_maxpooling_mil_forward.1} parent=1 // pred_check
      _
    $region43: #{stable_maxpooling_mil_forward.1} parent=1 // pred_check_branch
      %4716 = sbr.rel (0) target = $region45
    $region44: #{stable_maxpooling_mil_forward.1} parent=1 // pred_region
      _
    $region45: #{stable_maxpooling_mil_forward.1} parent=1 // pred_fallthru
      _
    %4717 = vsyncpa [#allocation3], 1
    %4718 = vsyncpa [#allocation5], 1
    %4719 = vsyncpa [#allocation8], 1

</llo_original>
